<compile_context>
chip_gen: v7x
topology: tpu7x:2x2x1
jax: 0.10.0
libtpu: 0.0.40
codegen_flags: <defaults>
</compile_context>

<pallas_src>
import jax
import jax.numpy as jnp
import numpy as np
from jax import lax
from jax.experimental import pallas as pl
from jax.experimental.pallas import tpu as pltpu


def _make_frdb_kernel(H, W, C):
    HW = H * W
    Ch = C // 2

    def shifted_taps(a, K, m_ref):
        """im2col operand for a 'same' KxK conv on `a`.

        a:     (Cin, HW) f32 value, lane index q = h*W + w.
        m_ref: (K*K, 1, HW) f32 ref of 0/1 boundary-validity masks (tap-major).
        Returns (K*K*Cin, HW) with rows ordered (kh, kw, cin).
        """
        p = K // 2
        cols = []
        t = 0
        for kh in range(K):
            for kw in range(K):
                s = (kh - p) * W + (kw - p)          # want rolled[q] = a[q + s]
                if s == 0:
                    rolled = a
                else:
                    # jnp.roll semantics: roll(x, k)[q] = x[(q - k) % HW];
                    # k = (-s) % HW  =>  rolled[q] = a[(q + s) % HW].
                    rolled = pltpu.roll(a, (-s) % HW, axis=1)
                cols.append(rolled * m_ref[t])       # mask zeros the wrap/halo
                t += 1
        # Sublane-axis concat; each piece is Cin (multiple of 8) rows -> aligned.
        return jnp.concatenate(cols, axis=0)

    def kernel(x_ref, m5_ref, m3_ref,
               w1_ref, b1_ref, w2_ref, b2_ref, w3_ref, b3_ref,
               w4_ref, b4_ref, w5_ref, b5_ref, w6_ref, b6_ref,
               o_ref):
        x = x_ref[0].astype(jnp.float32)             # (C, HW), lane-dense

        def conv1x1(a, w_ref, b_ref):
            return jnp.dot(w_ref[...], a,
                           preferred_element_type=jnp.float32) + b_ref[...]

        def conv_same(a, w_ref, b_ref, K, m_ref):
            lhs = shifted_taps(a, K, m_ref)          # (K*K*Cin, HW)
            return jnp.dot(w_ref[...], lhs,          # one MXU matmul per conv
                           preferred_element_type=jnp.float32) + b_ref[...]

        relu = lambda t: jnp.maximum(t, 0.0)

        y1 = relu(conv1x1(x, w1_ref, b1_ref))                    # (C, HW)
        y2 = relu(conv_same(y1[:Ch, :], w2_ref, b2_ref, 5, m5_ref))
        y3 = relu(conv_same(y1[Ch:, :], w3_ref, b3_ref, 5, m5_ref))
        cat1 = jnp.concatenate([y2, y3], axis=0) + y1            # (C, HW)
        y4 = relu(conv_same(cat1, w4_ref, b4_ref, 3, m3_ref))
        y5 = conv_same(y3, w5_ref, b5_ref, 3, m3_ref)            # no relu
        cat2 = jnp.concatenate([y2, y5, y4], axis=0)             # (2C, HW)
        y7 = conv1x1(cat2, w6_ref, b6_ref)                       # (C, HW)

        # Residual add; (C, HW) store is fully lane-dense (unmasked vst).
        o_ref[0] = (x + y7).astype(o_ref.dtype)

    return kernel


def _conv_boundary_masks(H, W, K):
    """Host-side masks: masks[kh*K+kw, 0, h*W+w] = 1 iff (h+kh-p, w+kw-p) in-bounds."""
    p = K // 2
    h = np.arange(H)[:, None]
    w = np.arange(W)[None, :]
    masks = np.zeros((K * K, 1, H * W), np.float32)
    for kh in range(K):
        for kw in range(K):
            valid = ((h + kh - p >= 0) & (h + kh - p < H) &
                     (w + kw - p >= 0) & (w + kw - p < W))
            masks[kh * K + kw, 0] = valid.reshape(-1).astype(np.float32)
    return jnp.asarray(masks)


def frdb_s_pallas(x, w1, b1, w2, b2, w3, b3, w4, b4, w5, b5, w6, b6):
    """x: (N, C, H, W) float32 (PyTorch NCHW). Conv weights in PyTorch (O, I, Kh, Kw)."""
    N, C, H, W = x.shape
    HW = H * W
    Ch = C // 2

    def flat_w(w):  # (O, I, Kh, Kw) -> (O, Kh*Kw*I), tap-major to match im2col rows
        O, I, Kh, Kw = w.shape
        return jnp.transpose(w, (0, 2, 3, 1)).reshape(O, Kh * Kw * I)

    x2 = x.reshape(N, C, HW)                 # free: spatial goes to the lane axis
    m5 = _conv_boundary_masks(H, W, 5)       # (25, 1, HW)
    m3 = _conv_boundary_masks(H, W, 3)       # (9, 1, HW)

    args = (x2, m5, m3,
            flat_w(w1), b1.reshape(C, 1),
            flat_w(w2), b2.reshape(Ch, 1),
            flat_w(w3), b3.reshape(Ch, 1),
            flat_w(w4), b4.reshape(C, 1),
            flat_w(w5), b5.reshape(Ch, 1),
            flat_w(w6), b6.reshape(C, 1))

    def full_spec(shape):
        zeros = (0,) * len(shape)
        return pl.BlockSpec(shape, lambda n, z=zeros: z)

    in_specs = [
        pl.BlockSpec((1, C, HW), lambda n: (n, 0, 0)),   # x, one image per step
        full_spec((25, 1, HW)),                          # 5x5 boundary masks
        full_spec((9, 1, HW)),                           # 3x3 boundary masks
        full_spec((C, C)),       full_spec((C, 1)),      # c1
        full_spec((Ch, 25 * Ch)), full_spec((Ch, 1)),    # c2
        full_spec((Ch, 25 * Ch)), full_spec((Ch, 1)),    # c3
        full_spec((C, 9 * C)),   full_spec((C, 1)),      # c4
        full_spec((Ch, 9 * Ch)), full_spec((Ch, 1)),     # c5
        full_spec((C, 2 * C)),   full_spec((C, 1)),      # c6
    ]

    out2 = pl.pallas_call(
        _make_frdb_kernel(H, W, C),
        out_shape=jax.ShapeDtypeStruct((N, C, HW), x.dtype),
        grid_spec=pltpu.PrefetchScalarGridSpec(
            num_scalar_prefetch=0,
            grid=(N,),                                   # batch elements independent
            in_specs=in_specs,
            out_specs=pl.BlockSpec((1, C, HW), lambda n: (n, 0, 0)),
        ),
        compiler_params=pltpu.CompilerParams(
            dimension_semantics=("parallel",)),          # v7x: split batch across TCs
    )(*args)

    return out2.reshape(N, C, H, W)                      # free reshape back to NCHW


def frdb_s_reference(x, w1, b1, w2, b2, w3, b3, w4, b4, w5, b5, w6, b6):
    """Pure-JAX NCHW reference mirroring the PyTorch FRDB_s.forward."""
    def conv(inp, w, b):
        k = w.shape[2]
        p = k // 2
        dn = lax.conv_dimension_numbers(inp.shape, w.shape, ("NCHW", "OIHW", "NCHW"))
        y = lax.conv_general_dilated(inp, w, (1, 1), [(p, p), (p, p)],
                                     dimension_numbers=dn)
        return y + b.reshape(1, -1, 1, 1)

    relu = lambda t: jnp.maximum(t, 0.0)
    C = x.shape[1]
    Ch = C // 2
    y1 = relu(conv(x, w1, b1))
    y2 = relu(conv(y1[:, :Ch], w2, b2))
    y3 = relu(conv(y1[:, Ch:], w3, b3))
    cat1 = jnp.concatenate([y2, y3], axis=1) + y1
    y4 = relu(conv(cat1, w4, b4))
    y5 = conv(y3, w5, b5)
    cat2 = jnp.concatenate([y2, y5, y4], axis=1)
    y7 = conv(cat2, w6, b6)
    return x + y7


if __name__ == "__main__":
    # FRDB_s(n_feats=32) at small spatial size.
    N, C, H, W = 2, 32, 16, 16
    Ch = C // 2

    key = jax.random.PRNGKey(0)
    keys = jax.random.split(key, 13)

    def init_conv(kw_key, kb_key, cout, cin, k):
        bound = 1.0 / np.sqrt(cin * k * k)   # deterministic, PyTorch-like init scale
        w = jax.random.uniform(kw_key, (cout, cin, k, k), jnp.float32, -bound, bound)
        b = jax.random.uniform(kb_key, (cout,), jnp.float32, -bound, bound)
        return w, b

    x = jax.random.normal(keys[0], (N, C, H, W), dtype=jnp.float32)
    w1, b1 = init_conv(keys[1], keys[2], C, C, 1)
    w2, b2 = init_conv(keys[3], keys[4], Ch, Ch, 5)
    w3, b3 = init_conv(keys[5], keys[6], Ch, Ch, 5)
    w4, b4 = init_conv(keys[7], keys[8], C, C, 3)
    w5, b5 = init_conv(keys[9], keys[10], Ch, Ch, 3)
    w6, b6 = init_conv(keys[11], keys[12], C, 2 * C, 1)

    params = (w1, b1, w2, b2, w3, b3, w4, b4, w5, b5, w6, b6)

    out = frdb_s_pallas(x, *params)
    out = jax.block_until_ready(out)

    ref = frdb_s_reference(x, *params)
    np.testing.assert_allclose(np.asarray(out), np.asarray(ref),
                               rtol=1e-4, atol=1e-4)
    print("KERNEL_OK")
</pallas_src>

<mosaic_0001>
module attributes {stable_mosaic.version = 11 : i64} {
  func.func @kernel(%arg0: i32, %arg1: memref<1x32x256xf32, #tpu.memory_space<vmem>>, %arg2: memref<25x1x256xf32, #tpu.memory_space<vmem>>, %arg3: memref<9x1x256xf32, #tpu.memory_space<vmem>>, %arg4: memref<32x32xf32, #tpu.memory_space<vmem>>, %arg5: memref<32x1xf32, #tpu.memory_space<vmem>>, %arg6: memref<16x400xf32, #tpu.memory_space<vmem>>, %arg7: memref<16x1xf32, #tpu.memory_space<vmem>>, %arg8: memref<16x400xf32, #tpu.memory_space<vmem>>, %arg9: memref<16x1xf32, #tpu.memory_space<vmem>>, %arg10: memref<32x288xf32, #tpu.memory_space<vmem>>, %arg11: memref<32x1xf32, #tpu.memory_space<vmem>>, %arg12: memref<16x144xf32, #tpu.memory_space<vmem>>, %arg13: memref<16x1xf32, #tpu.memory_space<vmem>>, %arg14: memref<32x64xf32, #tpu.memory_space<vmem>>, %arg15: memref<32x1xf32, #tpu.memory_space<vmem>>, %arg16: memref<1x32x256xf32, #tpu.memory_space<vmem>>) attributes {dimension_semantics = [#tpu.dimension_semantics<parallel>], iteration_bounds = array<i64: 2>, scalar_prefetch = 0 : i64, scratch_operands = 0 : i64, tpu.core_type = #tpu.core_type<tc>, window_params = [{transform_indices = @transform_0, window_bounds = array<i64: 1, 32, 256>}, {pipeline_mode = #tpu.pipeline_mode<synchronous>, transform_indices = @transform_1, window_bounds = array<i64: 25, 1, 256>}, {pipeline_mode = #tpu.pipeline_mode<synchronous>, transform_indices = @transform_2, window_bounds = array<i64: 9, 1, 256>}, {pipeline_mode = #tpu.pipeline_mode<synchronous>, transform_indices = @transform_3, window_bounds = array<i64: 32, 32>}, {pipeline_mode = #tpu.pipeline_mode<synchronous>, transform_indices = @transform_4, window_bounds = array<i64: 32, 1>}, {pipeline_mode = #tpu.pipeline_mode<synchronous>, transform_indices = @transform_5, window_bounds = array<i64: 16, 400>}, {pipeline_mode = #tpu.pipeline_mode<synchronous>, transform_indices = @transform_6, window_bounds = array<i64: 16, 1>}, {pipeline_mode = #tpu.pipeline_mode<synchronous>, transform_indices = @transform_7, window_bounds = array<i64: 16, 400>}, {pipeline_mode = #tpu.pipeline_mode<synchronous>, transform_indices = @transform_8, window_bounds = array<i64: 16, 1>}, {pipeline_mode = #tpu.pipeline_mode<synchronous>, transform_indices = @transform_9, window_bounds = array<i64: 32, 288>}, {pipeline_mode = #tpu.pipeline_mode<synchronous>, transform_indices = @transform_10, window_bounds = array<i64: 32, 1>}, {pipeline_mode = #tpu.pipeline_mode<synchronous>, transform_indices = @transform_11, window_bounds = array<i64: 16, 144>}, {pipeline_mode = #tpu.pipeline_mode<synchronous>, transform_indices = @transform_12, window_bounds = array<i64: 16, 1>}, {pipeline_mode = #tpu.pipeline_mode<synchronous>, transform_indices = @transform_13, window_bounds = array<i64: 32, 64>}, {pipeline_mode = #tpu.pipeline_mode<synchronous>, transform_indices = @transform_14, window_bounds = array<i64: 32, 1>}, {transform_indices = @transform_15, window_bounds = array<i64: 1, 32, 256>}]} {
    %c0 = arith.constant 0 : index
    %c0_0 = arith.constant 0 : index
    %c0_1 = arith.constant 0 : index
    %0 = vector.load %arg1[%c0, %c0_0, %c0_1] : memref<1x32x256xf32, #tpu.memory_space<vmem>>, vector<1x32x256xf32>
    %1 = vector.shape_cast %0 : vector<1x32x256xf32> to vector<32x256xf32>
    %c0_2 = arith.constant 0 : index
    %c0_3 = arith.constant 0 : index
    %2 = vector.load %arg4[%c0_2, %c0_3] : memref<32x32xf32, #tpu.memory_space<vmem>>, vector<32x32xf32>
    %cst = arith.constant dense<0.000000e+00> : vector<32x256xf32>
    %3 = tpu.matmul %2, %1, %cst {dimension_numbers = #tpu.dot_dimension_numbers<[1], [0], [0], [1], [0, 0, 1, 1], [], []>} : vector<32x32xf32>, vector<32x256xf32>, vector<32x256xf32> -> vector<32x256xf32>
    %c0_4 = arith.constant 0 : index
    %c0_5 = arith.constant 0 : index
    %4 = vector.load %arg5[%c0_4, %c0_5] : memref<32x1xf32, #tpu.memory_space<vmem>>, vector<32x1xf32>
    %5 = vector.broadcast %4 : vector<32x1xf32> to vector<32x256xf32>
    %6 = arith.addf %3, %5 : vector<32x256xf32>
    %cst_6 = arith.constant 0.000000e+00 : f32
    %7 = vector.broadcast %cst_6 : f32 to vector<32x256xf32>
    %8 = arith.maximumf %6, %7 : vector<32x256xf32>
    %9 = vector.extract_strided_slice %8 {offsets = [0, 0], sizes = [16, 256], strides = [1, 1]} : vector<32x256xf32> to vector<16x256xf32>
    %c34_i32 = arith.constant 34 : i32
    %10 = tpu.dynamic_rotate %9 by %c34_i32 dim 1 : vector<16x256xf32>, i32 -> vector<16x256xf32>
    %c0_7 = arith.constant 0 : index
    %c0_8 = arith.constant 0 : index
    %c0_9 = arith.constant 0 : index
    %11 = vector.load %arg2[%c0_7, %c0_8, %c0_9] : memref<25x1x256xf32, #tpu.memory_space<vmem>>, vector<1x1x256xf32>
    %12 = vector.shape_cast %11 : vector<1x1x256xf32> to vector<1x256xf32>
    %13 = vector.broadcast %12 : vector<1x256xf32> to vector<16x256xf32>
    %14 = arith.mulf %10, %13 : vector<16x256xf32>
    %c33_i32 = arith.constant 33 : i32
    %15 = tpu.dynamic_rotate %9 by %c33_i32 dim 1 : vector<16x256xf32>, i32 -> vector<16x256xf32>
    %c1 = arith.constant 1 : index
    %c0_10 = arith.constant 0 : index
    %c0_11 = arith.constant 0 : index
    %16 = vector.load %arg2[%c1, %c0_10, %c0_11] : memref<25x1x256xf32, #tpu.memory_space<vmem>>, vector<1x1x256xf32>
    %17 = vector.shape_cast %16 : vector<1x1x256xf32> to vector<1x256xf32>
    %18 = vector.broadcast %17 : vector<1x256xf32> to vector<16x256xf32>
    %19 = arith.mulf %15, %18 : vector<16x256xf32>
    %c32_i32 = arith.constant 32 : i32
    %20 = tpu.dynamic_rotate %9 by %c32_i32 dim 1 : vector<16x256xf32>, i32 -> vector<16x256xf32>
    %c2 = arith.constant 2 : index
    %c0_12 = arith.constant 0 : index
    %c0_13 = arith.constant 0 : index
    %21 = vector.load %arg2[%c2, %c0_12, %c0_13] : memref<25x1x256xf32, #tpu.memory_space<vmem>>, vector<1x1x256xf32>
    %22 = vector.shape_cast %21 : vector<1x1x256xf32> to vector<1x256xf32>
    %23 = vector.broadcast %22 : vector<1x256xf32> to vector<16x256xf32>
    %24 = arith.mulf %20, %23 : vector<16x256xf32>
    %c31_i32 = arith.constant 31 : i32
    %25 = tpu.dynamic_rotate %9 by %c31_i32 dim 1 : vector<16x256xf32>, i32 -> vector<16x256xf32>
    %c3 = arith.constant 3 : index
    %c0_14 = arith.constant 0 : index
    %c0_15 = arith.constant 0 : index
    %26 = vector.load %arg2[%c3, %c0_14, %c0_15] : memref<25x1x256xf32, #tpu.memory_space<vmem>>, vector<1x1x256xf32>
    %27 = vector.shape_cast %26 : vector<1x1x256xf32> to vector<1x256xf32>
    %28 = vector.broadcast %27 : vector<1x256xf32> to vector<16x256xf32>
    %29 = arith.mulf %25, %28 : vector<16x256xf32>
    %c30_i32 = arith.constant 30 : i32
    %30 = tpu.dynamic_rotate %9 by %c30_i32 dim 1 : vector<16x256xf32>, i32 -> vector<16x256xf32>
    %c4 = arith.constant 4 : index
    %c0_16 = arith.constant 0 : index
    %c0_17 = arith.constant 0 : index
    %31 = vector.load %arg2[%c4, %c0_16, %c0_17] : memref<25x1x256xf32, #tpu.memory_space<vmem>>, vector<1x1x256xf32>
    %32 = vector.shape_cast %31 : vector<1x1x256xf32> to vector<1x256xf32>
    %33 = vector.broadcast %32 : vector<1x256xf32> to vector<16x256xf32>
    %34 = arith.mulf %30, %33 : vector<16x256xf32>
    %c18_i32 = arith.constant 18 : i32
    %35 = tpu.dynamic_rotate %9 by %c18_i32 dim 1 : vector<16x256xf32>, i32 -> vector<16x256xf32>
    %c5 = arith.constant 5 : index
    %c0_18 = arith.constant 0 : index
    %c0_19 = arith.constant 0 : index
    %36 = vector.load %arg2[%c5, %c0_18, %c0_19] : memref<25x1x256xf32, #tpu.memory_space<vmem>>, vector<1x1x256xf32>
    %37 = vector.shape_cast %36 : vector<1x1x256xf32> to vector<1x256xf32>
    %38 = vector.broadcast %37 : vector<1x256xf32> to vector<16x256xf32>
    %39 = arith.mulf %35, %38 : vector<16x256xf32>
    %c17_i32 = arith.constant 17 : i32
    %40 = tpu.dynamic_rotate %9 by %c17_i32 dim 1 : vector<16x256xf32>, i32 -> vector<16x256xf32>
    %c6 = arith.constant 6 : index
    %c0_20 = arith.constant 0 : index
    %c0_21 = arith.constant 0 : index
    %41 = vector.load %arg2[%c6, %c0_20, %c0_21] : memref<25x1x256xf32, #tpu.memory_space<vmem>>, vector<1x1x256xf32>
    %42 = vector.shape_cast %41 : vector<1x1x256xf32> to vector<1x256xf32>
    %43 = vector.broadcast %42 : vector<1x256xf32> to vector<16x256xf32>
    %44 = arith.mulf %40, %43 : vector<16x256xf32>
    %c16_i32 = arith.constant 16 : i32
    %45 = tpu.dynamic_rotate %9 by %c16_i32 dim 1 : vector<16x256xf32>, i32 -> vector<16x256xf32>
    %c7 = arith.constant 7 : index
    %c0_22 = arith.constant 0 : index
    %c0_23 = arith.constant 0 : index
    %46 = vector.load %arg2[%c7, %c0_22, %c0_23] : memref<25x1x256xf32, #tpu.memory_space<vmem>>, vector<1x1x256xf32>
    %47 = vector.shape_cast %46 : vector<1x1x256xf32> to vector<1x256xf32>
    %48 = vector.broadcast %47 : vector<1x256xf32> to vector<16x256xf32>
    %49 = arith.mulf %45, %48 : vector<16x256xf32>
    %c15_i32 = arith.constant 15 : i32
    %50 = tpu.dynamic_rotate %9 by %c15_i32 dim 1 : vector<16x256xf32>, i32 -> vector<16x256xf32>
    %c8 = arith.constant 8 : index
    %c0_24 = arith.constant 0 : index
    %c0_25 = arith.constant 0 : index
    %51 = vector.load %arg2[%c8, %c0_24, %c0_25] : memref<25x1x256xf32, #tpu.memory_space<vmem>>, vector<1x1x256xf32>
    %52 = vector.shape_cast %51 : vector<1x1x256xf32> to vector<1x256xf32>
    %53 = vector.broadcast %52 : vector<1x256xf32> to vector<16x256xf32>
    %54 = arith.mulf %50, %53 : vector<16x256xf32>
    %c14_i32 = arith.constant 14 : i32
    %55 = tpu.dynamic_rotate %9 by %c14_i32 dim 1 : vector<16x256xf32>, i32 -> vector<16x256xf32>
    %c9 = arith.constant 9 : index
    %c0_26 = arith.constant 0 : index
    %c0_27 = arith.constant 0 : index
    %56 = vector.load %arg2[%c9, %c0_26, %c0_27] : memref<25x1x256xf32, #tpu.memory_space<vmem>>, vector<1x1x256xf32>
    %57 = vector.shape_cast %56 : vector<1x1x256xf32> to vector<1x256xf32>
    %58 = vector.broadcast %57 : vector<1x256xf32> to vector<16x256xf32>
    %59 = arith.mulf %55, %58 : vector<16x256xf32>
    %c2_i32 = arith.constant 2 : i32
    %60 = tpu.dynamic_rotate %9 by %c2_i32 dim 1 : vector<16x256xf32>, i32 -> vector<16x256xf32>
    %c10 = arith.constant 10 : index
    %c0_28 = arith.constant 0 : index
    %c0_29 = arith.constant 0 : index
    %61 = vector.load %arg2[%c10, %c0_28, %c0_29] : memref<25x1x256xf32, #tpu.memory_space<vmem>>, vector<1x1x256xf32>
    %62 = vector.shape_cast %61 : vector<1x1x256xf32> to vector<1x256xf32>
    %63 = vector.broadcast %62 : vector<1x256xf32> to vector<16x256xf32>
    %64 = arith.mulf %60, %63 : vector<16x256xf32>
    %c1_i32 = arith.constant 1 : i32
    %65 = tpu.dynamic_rotate %9 by %c1_i32 dim 1 : vector<16x256xf32>, i32 -> vector<16x256xf32>
    %c11 = arith.constant 11 : index
    %c0_30 = arith.constant 0 : index
    %c0_31 = arith.constant 0 : index
    %66 = vector.load %arg2[%c11, %c0_30, %c0_31] : memref<25x1x256xf32, #tpu.memory_space<vmem>>, vector<1x1x256xf32>
    %67 = vector.shape_cast %66 : vector<1x1x256xf32> to vector<1x256xf32>
    %68 = vector.broadcast %67 : vector<1x256xf32> to vector<16x256xf32>
    %69 = arith.mulf %65, %68 : vector<16x256xf32>
    %c12 = arith.constant 12 : index
    %c0_32 = arith.constant 0 : index
    %c0_33 = arith.constant 0 : index
    %70 = vector.load %arg2[%c12, %c0_32, %c0_33] : memref<25x1x256xf32, #tpu.memory_space<vmem>>, vector<1x1x256xf32>
    %71 = vector.shape_cast %70 : vector<1x1x256xf32> to vector<1x256xf32>
    %72 = vector.broadcast %71 : vector<1x256xf32> to vector<16x256xf32>
    %73 = arith.mulf %9, %72 : vector<16x256xf32>
    %c255_i32 = arith.constant 255 : i32
    %74 = tpu.dynamic_rotate %9 by %c255_i32 dim 1 : vector<16x256xf32>, i32 -> vector<16x256xf32>
    %c13 = arith.constant 13 : index
    %c0_34 = arith.constant 0 : index
    %c0_35 = arith.constant 0 : index
    %75 = vector.load %arg2[%c13, %c0_34, %c0_35] : memref<25x1x256xf32, #tpu.memory_space<vmem>>, vector<1x1x256xf32>
    %76 = vector.shape_cast %75 : vector<1x1x256xf32> to vector<1x256xf32>
    %77 = vector.broadcast %76 : vector<1x256xf32> to vector<16x256xf32>
    %78 = arith.mulf %74, %77 : vector<16x256xf32>
    %c254_i32 = arith.constant 254 : i32
    %79 = tpu.dynamic_rotate %9 by %c254_i32 dim 1 : vector<16x256xf32>, i32 -> vector<16x256xf32>
    %c14 = arith.constant 14 : index
    %c0_36 = arith.constant 0 : index
    %c0_37 = arith.constant 0 : index
    %80 = vector.load %arg2[%c14, %c0_36, %c0_37] : memref<25x1x256xf32, #tpu.memory_space<vmem>>, vector<1x1x256xf32>
    %81 = vector.shape_cast %80 : vector<1x1x256xf32> to vector<1x256xf32>
    %82 = vector.broadcast %81 : vector<1x256xf32> to vector<16x256xf32>
    %83 = arith.mulf %79, %82 : vector<16x256xf32>
    %c242_i32 = arith.constant 242 : i32
    %84 = tpu.dynamic_rotate %9 by %c242_i32 dim 1 : vector<16x256xf32>, i32 -> vector<16x256xf32>
    %c15 = arith.constant 15 : index
    %c0_38 = arith.constant 0 : index
    %c0_39 = arith.constant 0 : index
    %85 = vector.load %arg2[%c15, %c0_38, %c0_39] : memref<25x1x256xf32, #tpu.memory_space<vmem>>, vector<1x1x256xf32>
    %86 = vector.shape_cast %85 : vector<1x1x256xf32> to vector<1x256xf32>
    %87 = vector.broadcast %86 : vector<1x256xf32> to vector<16x256xf32>
    %88 = arith.mulf %84, %87 : vector<16x256xf32>
    %c241_i32 = arith.constant 241 : i32
    %89 = tpu.dynamic_rotate %9 by %c241_i32 dim 1 : vector<16x256xf32>, i32 -> vector<16x256xf32>
    %c16 = arith.constant 16 : index
    %c0_40 = arith.constant 0 : index
    %c0_41 = arith.constant 0 : index
    %90 = vector.load %arg2[%c16, %c0_40, %c0_41] : memref<25x1x256xf32, #tpu.memory_space<vmem>>, vector<1x1x256xf32>
    %91 = vector.shape_cast %90 : vector<1x1x256xf32> to vector<1x256xf32>
    %92 = vector.broadcast %91 : vector<1x256xf32> to vector<16x256xf32>
    %93 = arith.mulf %89, %92 : vector<16x256xf32>
    %c240_i32 = arith.constant 240 : i32
    %94 = tpu.dynamic_rotate %9 by %c240_i32 dim 1 : vector<16x256xf32>, i32 -> vector<16x256xf32>
    %c17 = arith.constant 17 : index
    %c0_42 = arith.constant 0 : index
    %c0_43 = arith.constant 0 : index
    %95 = vector.load %arg2[%c17, %c0_42, %c0_43] : memref<25x1x256xf32, #tpu.memory_space<vmem>>, vector<1x1x256xf32>
    %96 = vector.shape_cast %95 : vector<1x1x256xf32> to vector<1x256xf32>
    %97 = vector.broadcast %96 : vector<1x256xf32> to vector<16x256xf32>
    %98 = arith.mulf %94, %97 : vector<16x256xf32>
    %c239_i32 = arith.constant 239 : i32
    %99 = tpu.dynamic_rotate %9 by %c239_i32 dim 1 : vector<16x256xf32>, i32 -> vector<16x256xf32>
    %c18 = arith.constant 18 : index
    %c0_44 = arith.constant 0 : index
    %c0_45 = arith.constant 0 : index
    %100 = vector.load %arg2[%c18, %c0_44, %c0_45] : memref<25x1x256xf32, #tpu.memory_space<vmem>>, vector<1x1x256xf32>
    %101 = vector.shape_cast %100 : vector<1x1x256xf32> to vector<1x256xf32>
    %102 = vector.broadcast %101 : vector<1x256xf32> to vector<16x256xf32>
    %103 = arith.mulf %99, %102 : vector<16x256xf32>
    %c238_i32 = arith.constant 238 : i32
    %104 = tpu.dynamic_rotate %9 by %c238_i32 dim 1 : vector<16x256xf32>, i32 -> vector<16x256xf32>
    %c19 = arith.constant 19 : index
    %c0_46 = arith.constant 0 : index
    %c0_47 = arith.constant 0 : index
    %105 = vector.load %arg2[%c19, %c0_46, %c0_47] : memref<25x1x256xf32, #tpu.memory_space<vmem>>, vector<1x1x256xf32>
    %106 = vector.shape_cast %105 : vector<1x1x256xf32> to vector<1x256xf32>
    %107 = vector.broadcast %106 : vector<1x256xf32> to vector<16x256xf32>
    %108 = arith.mulf %104, %107 : vector<16x256xf32>
    %c226_i32 = arith.constant 226 : i32
    %109 = tpu.dynamic_rotate %9 by %c226_i32 dim 1 : vector<16x256xf32>, i32 -> vector<16x256xf32>
    %c20 = arith.constant 20 : index
    %c0_48 = arith.constant 0 : index
    %c0_49 = arith.constant 0 : index
    %110 = vector.load %arg2[%c20, %c0_48, %c0_49] : memref<25x1x256xf32, #tpu.memory_space<vmem>>, vector<1x1x256xf32>
    %111 = vector.shape_cast %110 : vector<1x1x256xf32> to vector<1x256xf32>
    %112 = vector.broadcast %111 : vector<1x256xf32> to vector<16x256xf32>
    %113 = arith.mulf %109, %112 : vector<16x256xf32>
    %c225_i32 = arith.constant 225 : i32
    %114 = tpu.dynamic_rotate %9 by %c225_i32 dim 1 : vector<16x256xf32>, i32 -> vector<16x256xf32>
    %c21 = arith.constant 21 : index
    %c0_50 = arith.constant 0 : index
    %c0_51 = arith.constant 0 : index
    %115 = vector.load %arg2[%c21, %c0_50, %c0_51] : memref<25x1x256xf32, #tpu.memory_space<vmem>>, vector<1x1x256xf32>
    %116 = vector.shape_cast %115 : vector<1x1x256xf32> to vector<1x256xf32>
    %117 = vector.broadcast %116 : vector<1x256xf32> to vector<16x256xf32>
    %118 = arith.mulf %114, %117 : vector<16x256xf32>
    %c224_i32 = arith.constant 224 : i32
    %119 = tpu.dynamic_rotate %9 by %c224_i32 dim 1 : vector<16x256xf32>, i32 -> vector<16x256xf32>
    %c22 = arith.constant 22 : index
    %c0_52 = arith.constant 0 : index
    %c0_53 = arith.constant 0 : index
    %120 = vector.load %arg2[%c22, %c0_52, %c0_53] : memref<25x1x256xf32, #tpu.memory_space<vmem>>, vector<1x1x256xf32>
    %121 = vector.shape_cast %120 : vector<1x1x256xf32> to vector<1x256xf32>
    %122 = vector.broadcast %121 : vector<1x256xf32> to vector<16x256xf32>
    %123 = arith.mulf %119, %122 : vector<16x256xf32>
    %c223_i32 = arith.constant 223 : i32
    %124 = tpu.dynamic_rotate %9 by %c223_i32 dim 1 : vector<16x256xf32>, i32 -> vector<16x256xf32>
    %c23 = arith.constant 23 : index
    %c0_54 = arith.constant 0 : index
    %c0_55 = arith.constant 0 : index
    %125 = vector.load %arg2[%c23, %c0_54, %c0_55] : memref<25x1x256xf32, #tpu.memory_space<vmem>>, vector<1x1x256xf32>
    %126 = vector.shape_cast %125 : vector<1x1x256xf32> to vector<1x256xf32>
    %127 = vector.broadcast %126 : vector<1x256xf32> to vector<16x256xf32>
    %128 = arith.mulf %124, %127 : vector<16x256xf32>
    %c222_i32 = arith.constant 222 : i32
    %129 = tpu.dynamic_rotate %9 by %c222_i32 dim 1 : vector<16x256xf32>, i32 -> vector<16x256xf32>
    %c24 = arith.constant 24 : index
    %c0_56 = arith.constant 0 : index
    %c0_57 = arith.constant 0 : index
    %130 = vector.load %arg2[%c24, %c0_56, %c0_57] : memref<25x1x256xf32, #tpu.memory_space<vmem>>, vector<1x1x256xf32>
    %131 = vector.shape_cast %130 : vector<1x1x256xf32> to vector<1x256xf32>
    %132 = vector.broadcast %131 : vector<1x256xf32> to vector<16x256xf32>
    %133 = arith.mulf %129, %132 : vector<16x256xf32>
    %134 = tpu.concatenate %14, %19, %24, %29, %34, %39, %44, %49, %54, %59, %64, %69, %73, %78, %83, %88 in 0 : vector<16x256xf32>, vector<16x256xf32>, vector<16x256xf32>, vector<16x256xf32>, vector<16x256xf32>, vector<16x256xf32>, vector<16x256xf32>, vector<16x256xf32>, vector<16x256xf32>, vector<16x256xf32>, vector<16x256xf32>, vector<16x256xf32>, vector<16x256xf32>, vector<16x256xf32>, vector<16x256xf32>, vector<16x256xf32> -> vector<256x256xf32>
    %135 = tpu.concatenate %93, %98, %103, %108, %113, %118, %123, %128, %133 in 0 : vector<16x256xf32>, vector<16x256xf32>, vector<16x256xf32>, vector<16x256xf32>, vector<16x256xf32>, vector<16x256xf32>, vector<16x256xf32>, vector<16x256xf32>, vector<16x256xf32> -> vector<144x256xf32>
    %136 = tpu.concatenate %134, %135 in 0 : vector<256x256xf32>, vector<144x256xf32> -> vector<400x256xf32>
    %c0_58 = arith.constant 0 : index
    %c0_59 = arith.constant 0 : index
    %137 = vector.load %arg6[%c0_58, %c0_59] : memref<16x400xf32, #tpu.memory_space<vmem>>, vector<16x400xf32>
    %cst_60 = arith.constant dense<0.000000e+00> : vector<16x256xf32>
    %138 = tpu.matmul %137, %136, %cst_60 {dimension_numbers = #tpu.dot_dimension_numbers<[1], [0], [0], [1], [0, 0, 1, 1], [], []>} : vector<16x400xf32>, vector<400x256xf32>, vector<16x256xf32> -> vector<16x256xf32>
    %c0_61 = arith.constant 0 : index
    %c0_62 = arith.constant 0 : index
    %139 = vector.load %arg7[%c0_61, %c0_62] : memref<16x1xf32, #tpu.memory_space<vmem>>, vector<16x1xf32>
    %140 = vector.broadcast %139 : vector<16x1xf32> to vector<16x256xf32>
    %141 = arith.addf %138, %140 : vector<16x256xf32>
    %cst_63 = arith.constant 0.000000e+00 : f32
    %142 = vector.broadcast %cst_63 : f32 to vector<16x256xf32>
    %143 = arith.maximumf %141, %142 : vector<16x256xf32>
    %144 = vector.extract_strided_slice %8 {offsets = [16, 0], sizes = [16, 256], strides = [1, 1]} : vector<32x256xf32> to vector<16x256xf32>
    %c34_i32_64 = arith.constant 34 : i32
    %145 = tpu.dynamic_rotate %144 by %c34_i32_64 dim 1 : vector<16x256xf32>, i32 -> vector<16x256xf32>
    %c0_65 = arith.constant 0 : index
    %c0_66 = arith.constant 0 : index
    %c0_67 = arith.constant 0 : index
    %146 = vector.load %arg2[%c0_65, %c0_66, %c0_67] : memref<25x1x256xf32, #tpu.memory_space<vmem>>, vector<1x1x256xf32>
    %147 = vector.shape_cast %146 : vector<1x1x256xf32> to vector<1x256xf32>
    %148 = vector.broadcast %147 : vector<1x256xf32> to vector<16x256xf32>
    %149 = arith.mulf %145, %148 : vector<16x256xf32>
    %c33_i32_68 = arith.constant 33 : i32
    %150 = tpu.dynamic_rotate %144 by %c33_i32_68 dim 1 : vector<16x256xf32>, i32 -> vector<16x256xf32>
    %c1_69 = arith.constant 1 : index
    %c0_70 = arith.constant 0 : index
    %c0_71 = arith.constant 0 : index
    %151 = vector.load %arg2[%c1_69, %c0_70, %c0_71] : memref<25x1x256xf32, #tpu.memory_space<vmem>>, vector<1x1x256xf32>
    %152 = vector.shape_cast %151 : vector<1x1x256xf32> to vector<1x256xf32>
    %153 = vector.broadcast %152 : vector<1x256xf32> to vector<16x256xf32>
    %154 = arith.mulf %150, %153 : vector<16x256xf32>
    %c32_i32_72 = arith.constant 32 : i32
    %155 = tpu.dynamic_rotate %144 by %c32_i32_72 dim 1 : vector<16x256xf32>, i32 -> vector<16x256xf32>
    %c2_73 = arith.constant 2 : index
    %c0_74 = arith.constant 0 : index
    %c0_75 = arith.constant 0 : index
    %156 = vector.load %arg2[%c2_73, %c0_74, %c0_75] : memref<25x1x256xf32, #tpu.memory_space<vmem>>, vector<1x1x256xf32>
    %157 = vector.shape_cast %156 : vector<1x1x256xf32> to vector<1x256xf32>
    %158 = vector.broadcast %157 : vector<1x256xf32> to vector<16x256xf32>
    %159 = arith.mulf %155, %158 : vector<16x256xf32>
    %c31_i32_76 = arith.constant 31 : i32
    %160 = tpu.dynamic_rotate %144 by %c31_i32_76 dim 1 : vector<16x256xf32>, i32 -> vector<16x256xf32>
    %c3_77 = arith.constant 3 : index
    %c0_78 = arith.constant 0 : index
    %c0_79 = arith.constant 0 : index
    %161 = vector.load %arg2[%c3_77, %c0_78, %c0_79] : memref<25x1x256xf32, #tpu.memory_space<vmem>>, vector<1x1x256xf32>
    %162 = vector.shape_cast %161 : vector<1x1x256xf32> to vector<1x256xf32>
    %163 = vector.broadcast %162 : vector<1x256xf32> to vector<16x256xf32>
    %164 = arith.mulf %160, %163 : vector<16x256xf32>
    %c30_i32_80 = arith.constant 30 : i32
    %165 = tpu.dynamic_rotate %144 by %c30_i32_80 dim 1 : vector<16x256xf32>, i32 -> vector<16x256xf32>
    %c4_81 = arith.constant 4 : index
    %c0_82 = arith.constant 0 : index
    %c0_83 = arith.constant 0 : index
    %166 = vector.load %arg2[%c4_81, %c0_82, %c0_83] : memref<25x1x256xf32, #tpu.memory_space<vmem>>, vector<1x1x256xf32>
    %167 = vector.shape_cast %166 : vector<1x1x256xf32> to vector<1x256xf32>
    %168 = vector.broadcast %167 : vector<1x256xf32> to vector<16x256xf32>
    %169 = arith.mulf %165, %168 : vector<16x256xf32>
    %c18_i32_84 = arith.constant 18 : i32
    %170 = tpu.dynamic_rotate %144 by %c18_i32_84 dim 1 : vector<16x256xf32>, i32 -> vector<16x256xf32>
    %c5_85 = arith.constant 5 : index
    %c0_86 = arith.constant 0 : index
    %c0_87 = arith.constant 0 : index
    %171 = vector.load %arg2[%c5_85, %c0_86, %c0_87] : memref<25x1x256xf32, #tpu.memory_space<vmem>>, vector<1x1x256xf32>
    %172 = vector.shape_cast %171 : vector<1x1x256xf32> to vector<1x256xf32>
    %173 = vector.broadcast %172 : vector<1x256xf32> to vector<16x256xf32>
    %174 = arith.mulf %170, %173 : vector<16x256xf32>
    %c17_i32_88 = arith.constant 17 : i32
    %175 = tpu.dynamic_rotate %144 by %c17_i32_88 dim 1 : vector<16x256xf32>, i32 -> vector<16x256xf32>
    %c6_89 = arith.constant 6 : index
    %c0_90 = arith.constant 0 : index
    %c0_91 = arith.constant 0 : index
    %176 = vector.load %arg2[%c6_89, %c0_90, %c0_91] : memref<25x1x256xf32, #tpu.memory_space<vmem>>, vector<1x1x256xf32>
    %177 = vector.shape_cast %176 : vector<1x1x256xf32> to vector<1x256xf32>
    %178 = vector.broadcast %177 : vector<1x256xf32> to vector<16x256xf32>
    %179 = arith.mulf %175, %178 : vector<16x256xf32>
    %c16_i32_92 = arith.constant 16 : i32
    %180 = tpu.dynamic_rotate %144 by %c16_i32_92 dim 1 : vector<16x256xf32>, i32 -> vector<16x256xf32>
    %c7_93 = arith.constant 7 : index
    %c0_94 = arith.constant 0 : index
    %c0_95 = arith.constant 0 : index
    %181 = vector.load %arg2[%c7_93, %c0_94, %c0_95] : memref<25x1x256xf32, #tpu.memory_space<vmem>>, vector<1x1x256xf32>
    %182 = vector.shape_cast %181 : vector<1x1x256xf32> to vector<1x256xf32>
    %183 = vector.broadcast %182 : vector<1x256xf32> to vector<16x256xf32>
    %184 = arith.mulf %180, %183 : vector<16x256xf32>
    %c15_i32_96 = arith.constant 15 : i32
    %185 = tpu.dynamic_rotate %144 by %c15_i32_96 dim 1 : vector<16x256xf32>, i32 -> vector<16x256xf32>
    %c8_97 = arith.constant 8 : index
    %c0_98 = arith.constant 0 : index
    %c0_99 = arith.constant 0 : index
    %186 = vector.load %arg2[%c8_97, %c0_98, %c0_99] : memref<25x1x256xf32, #tpu.memory_space<vmem>>, vector<1x1x256xf32>
    %187 = vector.shape_cast %186 : vector<1x1x256xf32> to vector<1x256xf32>
    %188 = vector.broadcast %187 : vector<1x256xf32> to vector<16x256xf32>
    %189 = arith.mulf %185, %188 : vector<16x256xf32>
    %c14_i32_100 = arith.constant 14 : i32
    %190 = tpu.dynamic_rotate %144 by %c14_i32_100 dim 1 : vector<16x256xf32>, i32 -> vector<16x256xf32>
    %c9_101 = arith.constant 9 : index
    %c0_102 = arith.constant 0 : index
    %c0_103 = arith.constant 0 : index
    %191 = vector.load %arg2[%c9_101, %c0_102, %c0_103] : memref<25x1x256xf32, #tpu.memory_space<vmem>>, vector<1x1x256xf32>
    %192 = vector.shape_cast %191 : vector<1x1x256xf32> to vector<1x256xf32>
    %193 = vector.broadcast %192 : vector<1x256xf32> to vector<16x256xf32>
    %194 = arith.mulf %190, %193 : vector<16x256xf32>
    %c2_i32_104 = arith.constant 2 : i32
    %195 = tpu.dynamic_rotate %144 by %c2_i32_104 dim 1 : vector<16x256xf32>, i32 -> vector<16x256xf32>
    %c10_105 = arith.constant 10 : index
    %c0_106 = arith.constant 0 : index
    %c0_107 = arith.constant 0 : index
    %196 = vector.load %arg2[%c10_105, %c0_106, %c0_107] : memref<25x1x256xf32, #tpu.memory_space<vmem>>, vector<1x1x256xf32>
    %197 = vector.shape_cast %196 : vector<1x1x256xf32> to vector<1x256xf32>
    %198 = vector.broadcast %197 : vector<1x256xf32> to vector<16x256xf32>
    %199 = arith.mulf %195, %198 : vector<16x256xf32>
    %c1_i32_108 = arith.constant 1 : i32
    %200 = tpu.dynamic_rotate %144 by %c1_i32_108 dim 1 : vector<16x256xf32>, i32 -> vector<16x256xf32>
    %c11_109 = arith.constant 11 : index
    %c0_110 = arith.constant 0 : index
    %c0_111 = arith.constant 0 : index
    %201 = vector.load %arg2[%c11_109, %c0_110, %c0_111] : memref<25x1x256xf32, #tpu.memory_space<vmem>>, vector<1x1x256xf32>
    %202 = vector.shape_cast %201 : vector<1x1x256xf32> to vector<1x256xf32>
    %203 = vector.broadcast %202 : vector<1x256xf32> to vector<16x256xf32>
    %204 = arith.mulf %200, %203 : vector<16x256xf32>
    %c12_112 = arith.constant 12 : index
    %c0_113 = arith.constant 0 : index
    %c0_114 = arith.constant 0 : index
    %205 = vector.load %arg2[%c12_112, %c0_113, %c0_114] : memref<25x1x256xf32, #tpu.memory_space<vmem>>, vector<1x1x256xf32>
    %206 = vector.shape_cast %205 : vector<1x1x256xf32> to vector<1x256xf32>
    %207 = vector.broadcast %206 : vector<1x256xf32> to vector<16x256xf32>
    %208 = arith.mulf %144, %207 : vector<16x256xf32>
    %c255_i32_115 = arith.constant 255 : i32
    %209 = tpu.dynamic_rotate %144 by %c255_i32_115 dim 1 : vector<16x256xf32>, i32 -> vector<16x256xf32>
    %c13_116 = arith.constant 13 : index
    %c0_117 = arith.constant 0 : index
    %c0_118 = arith.constant 0 : index
    %210 = vector.load %arg2[%c13_116, %c0_117, %c0_118] : memref<25x1x256xf32, #tpu.memory_space<vmem>>, vector<1x1x256xf32>
    %211 = vector.shape_cast %210 : vector<1x1x256xf32> to vector<1x256xf32>
    %212 = vector.broadcast %211 : vector<1x256xf32> to vector<16x256xf32>
    %213 = arith.mulf %209, %212 : vector<16x256xf32>
    %c254_i32_119 = arith.constant 254 : i32
    %214 = tpu.dynamic_rotate %144 by %c254_i32_119 dim 1 : vector<16x256xf32>, i32 -> vector<16x256xf32>
    %c14_120 = arith.constant 14 : index
    %c0_121 = arith.constant 0 : index
    %c0_122 = arith.constant 0 : index
    %215 = vector.load %arg2[%c14_120, %c0_121, %c0_122] : memref<25x1x256xf32, #tpu.memory_space<vmem>>, vector<1x1x256xf32>
    %216 = vector.shape_cast %215 : vector<1x1x256xf32> to vector<1x256xf32>
    %217 = vector.broadcast %216 : vector<1x256xf32> to vector<16x256xf32>
    %218 = arith.mulf %214, %217 : vector<16x256xf32>
    %c242_i32_123 = arith.constant 242 : i32
    %219 = tpu.dynamic_rotate %144 by %c242_i32_123 dim 1 : vector<16x256xf32>, i32 -> vector<16x256xf32>
    %c15_124 = arith.constant 15 : index
    %c0_125 = arith.constant 0 : index
    %c0_126 = arith.constant 0 : index
    %220 = vector.load %arg2[%c15_124, %c0_125, %c0_126] : memref<25x1x256xf32, #tpu.memory_space<vmem>>, vector<1x1x256xf32>
    %221 = vector.shape_cast %220 : vector<1x1x256xf32> to vector<1x256xf32>
    %222 = vector.broadcast %221 : vector<1x256xf32> to vector<16x256xf32>
    %223 = arith.mulf %219, %222 : vector<16x256xf32>
    %c241_i32_127 = arith.constant 241 : i32
    %224 = tpu.dynamic_rotate %144 by %c241_i32_127 dim 1 : vector<16x256xf32>, i32 -> vector<16x256xf32>
    %c16_128 = arith.constant 16 : index
    %c0_129 = arith.constant 0 : index
    %c0_130 = arith.constant 0 : index
    %225 = vector.load %arg2[%c16_128, %c0_129, %c0_130] : memref<25x1x256xf32, #tpu.memory_space<vmem>>, vector<1x1x256xf32>
    %226 = vector.shape_cast %225 : vector<1x1x256xf32> to vector<1x256xf32>
    %227 = vector.broadcast %226 : vector<1x256xf32> to vector<16x256xf32>
    %228 = arith.mulf %224, %227 : vector<16x256xf32>
    %c240_i32_131 = arith.constant 240 : i32
    %229 = tpu.dynamic_rotate %144 by %c240_i32_131 dim 1 : vector<16x256xf32>, i32 -> vector<16x256xf32>
    %c17_132 = arith.constant 17 : index
    %c0_133 = arith.constant 0 : index
    %c0_134 = arith.constant 0 : index
    %230 = vector.load %arg2[%c17_132, %c0_133, %c0_134] : memref<25x1x256xf32, #tpu.memory_space<vmem>>, vector<1x1x256xf32>
    %231 = vector.shape_cast %230 : vector<1x1x256xf32> to vector<1x256xf32>
    %232 = vector.broadcast %231 : vector<1x256xf32> to vector<16x256xf32>
    %233 = arith.mulf %229, %232 : vector<16x256xf32>
    %c239_i32_135 = arith.constant 239 : i32
    %234 = tpu.dynamic_rotate %144 by %c239_i32_135 dim 1 : vector<16x256xf32>, i32 -> vector<16x256xf32>
    %c18_136 = arith.constant 18 : index
    %c0_137 = arith.constant 0 : index
    %c0_138 = arith.constant 0 : index
    %235 = vector.load %arg2[%c18_136, %c0_137, %c0_138] : memref<25x1x256xf32, #tpu.memory_space<vmem>>, vector<1x1x256xf32>
    %236 = vector.shape_cast %235 : vector<1x1x256xf32> to vector<1x256xf32>
    %237 = vector.broadcast %236 : vector<1x256xf32> to vector<16x256xf32>
    %238 = arith.mulf %234, %237 : vector<16x256xf32>
    %c238_i32_139 = arith.constant 238 : i32
    %239 = tpu.dynamic_rotate %144 by %c238_i32_139 dim 1 : vector<16x256xf32>, i32 -> vector<16x256xf32>
    %c19_140 = arith.constant 19 : index
    %c0_141 = arith.constant 0 : index
    %c0_142 = arith.constant 0 : index
    %240 = vector.load %arg2[%c19_140, %c0_141, %c0_142] : memref<25x1x256xf32, #tpu.memory_space<vmem>>, vector<1x1x256xf32>
    %241 = vector.shape_cast %240 : vector<1x1x256xf32> to vector<1x256xf32>
    %242 = vector.broadcast %241 : vector<1x256xf32> to vector<16x256xf32>
    %243 = arith.mulf %239, %242 : vector<16x256xf32>
    %c226_i32_143 = arith.constant 226 : i32
    %244 = tpu.dynamic_rotate %144 by %c226_i32_143 dim 1 : vector<16x256xf32>, i32 -> vector<16x256xf32>
    %c20_144 = arith.constant 20 : index
    %c0_145 = arith.constant 0 : index
    %c0_146 = arith.constant 0 : index
    %245 = vector.load %arg2[%c20_144, %c0_145, %c0_146] : memref<25x1x256xf32, #tpu.memory_space<vmem>>, vector<1x1x256xf32>
    %246 = vector.shape_cast %245 : vector<1x1x256xf32> to vector<1x256xf32>
    %247 = vector.broadcast %246 : vector<1x256xf32> to vector<16x256xf32>
    %248 = arith.mulf %244, %247 : vector<16x256xf32>
    %c225_i32_147 = arith.constant 225 : i32
    %249 = tpu.dynamic_rotate %144 by %c225_i32_147 dim 1 : vector<16x256xf32>, i32 -> vector<16x256xf32>
    %c21_148 = arith.constant 21 : index
    %c0_149 = arith.constant 0 : index
    %c0_150 = arith.constant 0 : index
    %250 = vector.load %arg2[%c21_148, %c0_149, %c0_150] : memref<25x1x256xf32, #tpu.memory_space<vmem>>, vector<1x1x256xf32>
    %251 = vector.shape_cast %250 : vector<1x1x256xf32> to vector<1x256xf32>
    %252 = vector.broadcast %251 : vector<1x256xf32> to vector<16x256xf32>
    %253 = arith.mulf %249, %252 : vector<16x256xf32>
    %c224_i32_151 = arith.constant 224 : i32
    %254 = tpu.dynamic_rotate %144 by %c224_i32_151 dim 1 : vector<16x256xf32>, i32 -> vector<16x256xf32>
    %c22_152 = arith.constant 22 : index
    %c0_153 = arith.constant 0 : index
    %c0_154 = arith.constant 0 : index
    %255 = vector.load %arg2[%c22_152, %c0_153, %c0_154] : memref<25x1x256xf32, #tpu.memory_space<vmem>>, vector<1x1x256xf32>
    %256 = vector.shape_cast %255 : vector<1x1x256xf32> to vector<1x256xf32>
    %257 = vector.broadcast %256 : vector<1x256xf32> to vector<16x256xf32>
    %258 = arith.mulf %254, %257 : vector<16x256xf32>
    %c223_i32_155 = arith.constant 223 : i32
    %259 = tpu.dynamic_rotate %144 by %c223_i32_155 dim 1 : vector<16x256xf32>, i32 -> vector<16x256xf32>
    %c23_156 = arith.constant 23 : index
    %c0_157 = arith.constant 0 : index
    %c0_158 = arith.constant 0 : index
    %260 = vector.load %arg2[%c23_156, %c0_157, %c0_158] : memref<25x1x256xf32, #tpu.memory_space<vmem>>, vector<1x1x256xf32>
    %261 = vector.shape_cast %260 : vector<1x1x256xf32> to vector<1x256xf32>
    %262 = vector.broadcast %261 : vector<1x256xf32> to vector<16x256xf32>
    %263 = arith.mulf %259, %262 : vector<16x256xf32>
    %c222_i32_159 = arith.constant 222 : i32
    %264 = tpu.dynamic_rotate %144 by %c222_i32_159 dim 1 : vector<16x256xf32>, i32 -> vector<16x256xf32>
    %c24_160 = arith.constant 24 : index
    %c0_161 = arith.constant 0 : index
    %c0_162 = arith.constant 0 : index
    %265 = vector.load %arg2[%c24_160, %c0_161, %c0_162] : memref<25x1x256xf32, #tpu.memory_space<vmem>>, vector<1x1x256xf32>
    %266 = vector.shape_cast %265 : vector<1x1x256xf32> to vector<1x256xf32>
    %267 = vector.broadcast %266 : vector<1x256xf32> to vector<16x256xf32>
    %268 = arith.mulf %264, %267 : vector<16x256xf32>
    %269 = tpu.concatenate %149, %154, %159, %164, %169, %174, %179, %184, %189, %194, %199, %204, %208, %213, %218, %223 in 0 : vector<16x256xf32>, vector<16x256xf32>, vector<16x256xf32>, vector<16x256xf32>, vector<16x256xf32>, vector<16x256xf32>, vector<16x256xf32>, vector<16x256xf32>, vector<16x256xf32>, vector<16x256xf32>, vector<16x256xf32>, vector<16x256xf32>, vector<16x256xf32>, vector<16x256xf32>, vector<16x256xf32>, vector<16x256xf32> -> vector<256x256xf32>
    %270 = tpu.concatenate %228, %233, %238, %243, %248, %253, %258, %263, %268 in 0 : vector<16x256xf32>, vector<16x256xf32>, vector<16x256xf32>, vector<16x256xf32>, vector<16x256xf32>, vector<16x256xf32>, vector<16x256xf32>, vector<16x256xf32>, vector<16x256xf32> -> vector<144x256xf32>
    %271 = tpu.concatenate %269, %270 in 0 : vector<256x256xf32>, vector<144x256xf32> -> vector<400x256xf32>
    %c0_163 = arith.constant 0 : index
    %c0_164 = arith.constant 0 : index
    %272 = vector.load %arg8[%c0_163, %c0_164] : memref<16x400xf32, #tpu.memory_space<vmem>>, vector<16x400xf32>
    %cst_165 = arith.constant dense<0.000000e+00> : vector<16x256xf32>
    %273 = tpu.matmul %272, %271, %cst_165 {dimension_numbers = #tpu.dot_dimension_numbers<[1], [0], [0], [1], [0, 0, 1, 1], [], []>} : vector<16x400xf32>, vector<400x256xf32>, vector<16x256xf32> -> vector<16x256xf32>
    %c0_166 = arith.constant 0 : index
    %c0_167 = arith.constant 0 : index
    %274 = vector.load %arg9[%c0_166, %c0_167] : memref<16x1xf32, #tpu.memory_space<vmem>>, vector<16x1xf32>
    %275 = vector.broadcast %274 : vector<16x1xf32> to vector<16x256xf32>
    %276 = arith.addf %273, %275 : vector<16x256xf32>
    %cst_168 = arith.constant 0.000000e+00 : f32
    %277 = vector.broadcast %cst_168 : f32 to vector<16x256xf32>
    %278 = arith.maximumf %276, %277 : vector<16x256xf32>
    %279 = tpu.concatenate %143, %278 in 0 : vector<16x256xf32>, vector<16x256xf32> -> vector<32x256xf32>
    %280 = arith.addf %279, %8 : vector<32x256xf32>
    %c17_i32_169 = arith.constant 17 : i32
    %281 = tpu.dynamic_rotate %280 by %c17_i32_169 dim 1 : vector<32x256xf32>, i32 -> vector<32x256xf32>
    %c0_170 = arith.constant 0 : index
    %c0_171 = arith.constant 0 : index
    %c0_172 = arith.constant 0 : index
    %282 = vector.load %arg3[%c0_170, %c0_171, %c0_172] : memref<9x1x256xf32, #tpu.memory_space<vmem>>, vector<1x1x256xf32>
    %283 = vector.shape_cast %282 : vector<1x1x256xf32> to vector<1x256xf32>
    %284 = vector.broadcast %283 : vector<1x256xf32> to vector<32x256xf32>
    %285 = arith.mulf %281, %284 : vector<32x256xf32>
    %c16_i32_173 = arith.constant 16 : i32
    %286 = tpu.dynamic_rotate %280 by %c16_i32_173 dim 1 : vector<32x256xf32>, i32 -> vector<32x256xf32>
    %c1_174 = arith.constant 1 : index
    %c0_175 = arith.constant 0 : index
    %c0_176 = arith.constant 0 : index
    %287 = vector.load %arg3[%c1_174, %c0_175, %c0_176] : memref<9x1x256xf32, #tpu.memory_space<vmem>>, vector<1x1x256xf32>
    %288 = vector.shape_cast %287 : vector<1x1x256xf32> to vector<1x256xf32>
    %289 = vector.broadcast %288 : vector<1x256xf32> to vector<32x256xf32>
    %290 = arith.mulf %286, %289 : vector<32x256xf32>
    %c15_i32_177 = arith.constant 15 : i32
    %291 = tpu.dynamic_rotate %280 by %c15_i32_177 dim 1 : vector<32x256xf32>, i32 -> vector<32x256xf32>
    %c2_178 = arith.constant 2 : index
    %c0_179 = arith.constant 0 : index
    %c0_180 = arith.constant 0 : index
    %292 = vector.load %arg3[%c2_178, %c0_179, %c0_180] : memref<9x1x256xf32, #tpu.memory_space<vmem>>, vector<1x1x256xf32>
    %293 = vector.shape_cast %292 : vector<1x1x256xf32> to vector<1x256xf32>
    %294 = vector.broadcast %293 : vector<1x256xf32> to vector<32x256xf32>
    %295 = arith.mulf %291, %294 : vector<32x256xf32>
    %c1_i32_181 = arith.constant 1 : i32
    %296 = tpu.dynamic_rotate %280 by %c1_i32_181 dim 1 : vector<32x256xf32>, i32 -> vector<32x256xf32>
    %c3_182 = arith.constant 3 : index
    %c0_183 = arith.constant 0 : index
    %c0_184 = arith.constant 0 : index
    %297 = vector.load %arg3[%c3_182, %c0_183, %c0_184] : memref<9x1x256xf32, #tpu.memory_space<vmem>>, vector<1x1x256xf32>
    %298 = vector.shape_cast %297 : vector<1x1x256xf32> to vector<1x256xf32>
    %299 = vector.broadcast %298 : vector<1x256xf32> to vector<32x256xf32>
    %300 = arith.mulf %296, %299 : vector<32x256xf32>
    %c4_185 = arith.constant 4 : index
    %c0_186 = arith.constant 0 : index
    %c0_187 = arith.constant 0 : index
    %301 = vector.load %arg3[%c4_185, %c0_186, %c0_187] : memref<9x1x256xf32, #tpu.memory_space<vmem>>, vector<1x1x256xf32>
    %302 = vector.shape_cast %301 : vector<1x1x256xf32> to vector<1x256xf32>
    %303 = vector.broadcast %302 : vector<1x256xf32> to vector<32x256xf32>
    %304 = arith.mulf %280, %303 : vector<32x256xf32>
    %c255_i32_188 = arith.constant 255 : i32
    %305 = tpu.dynamic_rotate %280 by %c255_i32_188 dim 1 : vector<32x256xf32>, i32 -> vector<32x256xf32>
    %c5_189 = arith.constant 5 : index
    %c0_190 = arith.constant 0 : index
    %c0_191 = arith.constant 0 : index
    %306 = vector.load %arg3[%c5_189, %c0_190, %c0_191] : memref<9x1x256xf32, #tpu.memory_space<vmem>>, vector<1x1x256xf32>
    %307 = vector.shape_cast %306 : vector<1x1x256xf32> to vector<1x256xf32>
    %308 = vector.broadcast %307 : vector<1x256xf32> to vector<32x256xf32>
    %309 = arith.mulf %305, %308 : vector<32x256xf32>
    %c241_i32_192 = arith.constant 241 : i32
    %310 = tpu.dynamic_rotate %280 by %c241_i32_192 dim 1 : vector<32x256xf32>, i32 -> vector<32x256xf32>
    %c6_193 = arith.constant 6 : index
    %c0_194 = arith.constant 0 : index
    %c0_195 = arith.constant 0 : index
    %311 = vector.load %arg3[%c6_193, %c0_194, %c0_195] : memref<9x1x256xf32, #tpu.memory_space<vmem>>, vector<1x1x256xf32>
    %312 = vector.shape_cast %311 : vector<1x1x256xf32> to vector<1x256xf32>
    %313 = vector.broadcast %312 : vector<1x256xf32> to vector<32x256xf32>
    %314 = arith.mulf %310, %313 : vector<32x256xf32>
    %c240_i32_196 = arith.constant 240 : i32
    %315 = tpu.dynamic_rotate %280 by %c240_i32_196 dim 1 : vector<32x256xf32>, i32 -> vector<32x256xf32>
    %c7_197 = arith.constant 7 : index
    %c0_198 = arith.constant 0 : index
    %c0_199 = arith.constant 0 : index
    %316 = vector.load %arg3[%c7_197, %c0_198, %c0_199] : memref<9x1x256xf32, #tpu.memory_space<vmem>>, vector<1x1x256xf32>
    %317 = vector.shape_cast %316 : vector<1x1x256xf32> to vector<1x256xf32>
    %318 = vector.broadcast %317 : vector<1x256xf32> to vector<32x256xf32>
    %319 = arith.mulf %315, %318 : vector<32x256xf32>
    %c239_i32_200 = arith.constant 239 : i32
    %320 = tpu.dynamic_rotate %280 by %c239_i32_200 dim 1 : vector<32x256xf32>, i32 -> vector<32x256xf32>
    %c8_201 = arith.constant 8 : index
    %c0_202 = arith.constant 0 : index
    %c0_203 = arith.constant 0 : index
    %321 = vector.load %arg3[%c8_201, %c0_202, %c0_203] : memref<9x1x256xf32, #tpu.memory_space<vmem>>, vector<1x1x256xf32>
    %322 = vector.shape_cast %321 : vector<1x1x256xf32> to vector<1x256xf32>
    %323 = vector.broadcast %322 : vector<1x256xf32> to vector<32x256xf32>
    %324 = arith.mulf %320, %323 : vector<32x256xf32>
    %325 = tpu.concatenate %285, %290, %295, %300, %304, %309, %314, %319, %324 in 0 : vector<32x256xf32>, vector<32x256xf32>, vector<32x256xf32>, vector<32x256xf32>, vector<32x256xf32>, vector<32x256xf32>, vector<32x256xf32>, vector<32x256xf32>, vector<32x256xf32> -> vector<288x256xf32>
    %c0_204 = arith.constant 0 : index
    %c0_205 = arith.constant 0 : index
    %326 = vector.load %arg10[%c0_204, %c0_205] : memref<32x288xf32, #tpu.memory_space<vmem>>, vector<32x288xf32>
    %cst_206 = arith.constant dense<0.000000e+00> : vector<32x256xf32>
    %327 = tpu.matmul %326, %325, %cst_206 {dimension_numbers = #tpu.dot_dimension_numbers<[1], [0], [0], [1], [0, 0, 1, 1], [], []>} : vector<32x288xf32>, vector<288x256xf32>, vector<32x256xf32> -> vector<32x256xf32>
    %c0_207 = arith.constant 0 : index
    %c0_208 = arith.constant 0 : index
    %328 = vector.load %arg11[%c0_207, %c0_208] : memref<32x1xf32, #tpu.memory_space<vmem>>, vector<32x1xf32>
    %329 = vector.broadcast %328 : vector<32x1xf32> to vector<32x256xf32>
    %330 = arith.addf %327, %329 : vector<32x256xf32>
    %cst_209 = arith.constant 0.000000e+00 : f32
    %331 = vector.broadcast %cst_209 : f32 to vector<32x256xf32>
    %332 = arith.maximumf %330, %331 : vector<32x256xf32>
    %c17_i32_210 = arith.constant 17 : i32
    %333 = tpu.dynamic_rotate %278 by %c17_i32_210 dim 1 : vector<16x256xf32>, i32 -> vector<16x256xf32>
    %c0_211 = arith.constant 0 : index
    %c0_212 = arith.constant 0 : index
    %c0_213 = arith.constant 0 : index
    %334 = vector.load %arg3[%c0_211, %c0_212, %c0_213] : memref<9x1x256xf32, #tpu.memory_space<vmem>>, vector<1x1x256xf32>
    %335 = vector.shape_cast %334 : vector<1x1x256xf32> to vector<1x256xf32>
    %336 = vector.broadcast %335 : vector<1x256xf32> to vector<16x256xf32>
    %337 = arith.mulf %333, %336 : vector<16x256xf32>
    %c16_i32_214 = arith.constant 16 : i32
    %338 = tpu.dynamic_rotate %278 by %c16_i32_214 dim 1 : vector<16x256xf32>, i32 -> vector<16x256xf32>
    %c1_215 = arith.constant 1 : index
    %c0_216 = arith.constant 0 : index
    %c0_217 = arith.constant 0 : index
    %339 = vector.load %arg3[%c1_215, %c0_216, %c0_217] : memref<9x1x256xf32, #tpu.memory_space<vmem>>, vector<1x1x256xf32>
    %340 = vector.shape_cast %339 : vector<1x1x256xf32> to vector<1x256xf32>
    %341 = vector.broadcast %340 : vector<1x256xf32> to vector<16x256xf32>
    %342 = arith.mulf %338, %341 : vector<16x256xf32>
    %c15_i32_218 = arith.constant 15 : i32
    %343 = tpu.dynamic_rotate %278 by %c15_i32_218 dim 1 : vector<16x256xf32>, i32 -> vector<16x256xf32>
    %c2_219 = arith.constant 2 : index
    %c0_220 = arith.constant 0 : index
    %c0_221 = arith.constant 0 : index
    %344 = vector.load %arg3[%c2_219, %c0_220, %c0_221] : memref<9x1x256xf32, #tpu.memory_space<vmem>>, vector<1x1x256xf32>
    %345 = vector.shape_cast %344 : vector<1x1x256xf32> to vector<1x256xf32>
    %346 = vector.broadcast %345 : vector<1x256xf32> to vector<16x256xf32>
    %347 = arith.mulf %343, %346 : vector<16x256xf32>
    %c1_i32_222 = arith.constant 1 : i32
    %348 = tpu.dynamic_rotate %278 by %c1_i32_222 dim 1 : vector<16x256xf32>, i32 -> vector<16x256xf32>
    %c3_223 = arith.constant 3 : index
    %c0_224 = arith.constant 0 : index
    %c0_225 = arith.constant 0 : index
    %349 = vector.load %arg3[%c3_223, %c0_224, %c0_225] : memref<9x1x256xf32, #tpu.memory_space<vmem>>, vector<1x1x256xf32>
    %350 = vector.shape_cast %349 : vector<1x1x256xf32> to vector<1x256xf32>
    %351 = vector.broadcast %350 : vector<1x256xf32> to vector<16x256xf32>
    %352 = arith.mulf %348, %351 : vector<16x256xf32>
    %c4_226 = arith.constant 4 : index
    %c0_227 = arith.constant 0 : index
    %c0_228 = arith.constant 0 : index
    %353 = vector.load %arg3[%c4_226, %c0_227, %c0_228] : memref<9x1x256xf32, #tpu.memory_space<vmem>>, vector<1x1x256xf32>
    %354 = vector.shape_cast %353 : vector<1x1x256xf32> to vector<1x256xf32>
    %355 = vector.broadcast %354 : vector<1x256xf32> to vector<16x256xf32>
    %356 = arith.mulf %278, %355 : vector<16x256xf32>
    %c255_i32_229 = arith.constant 255 : i32
    %357 = tpu.dynamic_rotate %278 by %c255_i32_229 dim 1 : vector<16x256xf32>, i32 -> vector<16x256xf32>
    %c5_230 = arith.constant 5 : index
    %c0_231 = arith.constant 0 : index
    %c0_232 = arith.constant 0 : index
    %358 = vector.load %arg3[%c5_230, %c0_231, %c0_232] : memref<9x1x256xf32, #tpu.memory_space<vmem>>, vector<1x1x256xf32>
    %359 = vector.shape_cast %358 : vector<1x1x256xf32> to vector<1x256xf32>
    %360 = vector.broadcast %359 : vector<1x256xf32> to vector<16x256xf32>
    %361 = arith.mulf %357, %360 : vector<16x256xf32>
    %c241_i32_233 = arith.constant 241 : i32
    %362 = tpu.dynamic_rotate %278 by %c241_i32_233 dim 1 : vector<16x256xf32>, i32 -> vector<16x256xf32>
    %c6_234 = arith.constant 6 : index
    %c0_235 = arith.constant 0 : index
    %c0_236 = arith.constant 0 : index
    %363 = vector.load %arg3[%c6_234, %c0_235, %c0_236] : memref<9x1x256xf32, #tpu.memory_space<vmem>>, vector<1x1x256xf32>
    %364 = vector.shape_cast %363 : vector<1x1x256xf32> to vector<1x256xf32>
    %365 = vector.broadcast %364 : vector<1x256xf32> to vector<16x256xf32>
    %366 = arith.mulf %362, %365 : vector<16x256xf32>
    %c240_i32_237 = arith.constant 240 : i32
    %367 = tpu.dynamic_rotate %278 by %c240_i32_237 dim 1 : vector<16x256xf32>, i32 -> vector<16x256xf32>
    %c7_238 = arith.constant 7 : index
    %c0_239 = arith.constant 0 : index
    %c0_240 = arith.constant 0 : index
    %368 = vector.load %arg3[%c7_238, %c0_239, %c0_240] : memref<9x1x256xf32, #tpu.memory_space<vmem>>, vector<1x1x256xf32>
    %369 = vector.shape_cast %368 : vector<1x1x256xf32> to vector<1x256xf32>
    %370 = vector.broadcast %369 : vector<1x256xf32> to vector<16x256xf32>
    %371 = arith.mulf %367, %370 : vector<16x256xf32>
    %c239_i32_241 = arith.constant 239 : i32
    %372 = tpu.dynamic_rotate %278 by %c239_i32_241 dim 1 : vector<16x256xf32>, i32 -> vector<16x256xf32>
    %c8_242 = arith.constant 8 : index
    %c0_243 = arith.constant 0 : index
    %c0_244 = arith.constant 0 : index
    %373 = vector.load %arg3[%c8_242, %c0_243, %c0_244] : memref<9x1x256xf32, #tpu.memory_space<vmem>>, vector<1x1x256xf32>
    %374 = vector.shape_cast %373 : vector<1x1x256xf32> to vector<1x256xf32>
    %375 = vector.broadcast %374 : vector<1x256xf32> to vector<16x256xf32>
    %376 = arith.mulf %372, %375 : vector<16x256xf32>
    %377 = tpu.concatenate %337, %342, %347, %352, %356, %361, %366, %371, %376 in 0 : vector<16x256xf32>, vector<16x256xf32>, vector<16x256xf32>, vector<16x256xf32>, vector<16x256xf32>, vector<16x256xf32>, vector<16x256xf32>, vector<16x256xf32>, vector<16x256xf32> -> vector<144x256xf32>
    %c0_245 = arith.constant 0 : index
    %c0_246 = arith.constant 0 : index
    %378 = vector.load %arg12[%c0_245, %c0_246] : memref<16x144xf32, #tpu.memory_space<vmem>>, vector<16x144xf32>
    %cst_247 = arith.constant dense<0.000000e+00> : vector<16x256xf32>
    %379 = tpu.matmul %378, %377, %cst_247 {dimension_numbers = #tpu.dot_dimension_numbers<[1], [0], [0], [1], [0, 0, 1, 1], [], []>} : vector<16x144xf32>, vector<144x256xf32>, vector<16x256xf32> -> vector<16x256xf32>
    %c0_248 = arith.constant 0 : index
    %c0_249 = arith.constant 0 : index
    %380 = vector.load %arg13[%c0_248, %c0_249] : memref<16x1xf32, #tpu.memory_space<vmem>>, vector<16x1xf32>
    %381 = vector.broadcast %380 : vector<16x1xf32> to vector<16x256xf32>
    %382 = arith.addf %379, %381 : vector<16x256xf32>
    %383 = tpu.concatenate %143, %382, %332 in 0 : vector<16x256xf32>, vector<16x256xf32>, vector<32x256xf32> -> vector<64x256xf32>
    %c0_250 = arith.constant 0 : index
    %c0_251 = arith.constant 0 : index
    %384 = vector.load %arg14[%c0_250, %c0_251] : memref<32x64xf32, #tpu.memory_space<vmem>>, vector<32x64xf32>
    %cst_252 = arith.constant dense<0.000000e+00> : vector<32x256xf32>
    %385 = tpu.matmul %384, %383, %cst_252 {dimension_numbers = #tpu.dot_dimension_numbers<[1], [0], [0], [1], [0, 0, 1, 1], [], []>} : vector<32x64xf32>, vector<64x256xf32>, vector<32x256xf32> -> vector<32x256xf32>
    %c0_253 = arith.constant 0 : index
    %c0_254 = arith.constant 0 : index
    %386 = vector.load %arg15[%c0_253, %c0_254] : memref<32x1xf32, #tpu.memory_space<vmem>>, vector<32x1xf32>
    %387 = vector.broadcast %386 : vector<32x1xf32> to vector<32x256xf32>
    %388 = arith.addf %385, %387 : vector<32x256xf32>
    %389 = arith.addf %1, %388 : vector<32x256xf32>
    %c0_255 = arith.constant 0 : index
    %c0_256 = arith.constant 0 : index
    %c0_257 = arith.constant 0 : index
    %390 = vector.load %arg16[%c0_255, %c0_256, %c0_257] : memref<1x32x256xf32, #tpu.memory_space<vmem>>, vector<1x32x256xf32>
    %391 = vector.shape_cast %390 : vector<1x32x256xf32> to vector<32x256xf32>
    %392 = vector.shape_cast %389 : vector<32x256xf32> to vector<1x32x256xf32>
    tpu.vector_store %arg16[%c0_255, %c0_256, %c0_257], %392 {strides = array<i32>} : memref<1x32x256xf32, #tpu.memory_space<vmem>>, vector<1x32x256xf32>,
    return
  }
  func.func @transform_0(%arg0: i32) -> (i32, i32, i32) {
    %c0_i32 = arith.constant 0 : i32
    %c0_i32_0 = arith.constant 0 : i32
    %c0_i32_1 = arith.constant 0 : i32
    return %arg0, %c0_i32, %c0_i32_0 : i32, i32, i32
  }
  func.func @transform_1(%arg0: i32) -> (i32, i32, i32) {
    %c0_i32 = arith.constant 0 : i32
    %c0_i32_0 = arith.constant 0 : i32
    %c0_i32_1 = arith.constant 0 : i32
    %c0_i32_2 = arith.constant 0 : i32
    return %c0_i32, %c0_i32_0, %c0_i32_1 : i32, i32, i32
  }
  func.func @transform_2(%arg0: i32) -> (i32, i32, i32) {
    %c0_i32 = arith.constant 0 : i32
    %c0_i32_0 = arith.constant 0 : i32
    %c0_i32_1 = arith.constant 0 : i32
    %c0_i32_2 = arith.constant 0 : i32
    return %c0_i32, %c0_i32_0, %c0_i32_1 : i32, i32, i32
  }
  func.func @transform_3(%arg0: i32) -> (i32, i32) {
    %c0_i32 = arith.constant 0 : i32
    %c0_i32_0 = arith.constant 0 : i32
    %c0_i32_1 = arith.constant 0 : i32
    return %c0_i32, %c0_i32_0 : i32, i32
  }
  func.func @transform_4(%arg0: i32) -> (i32, i32) {
    %c0_i32 = arith.constant 0 : i32
    %c0_i32_0 = arith.constant 0 : i32
    %c0_i32_1 = arith.constant 0 : i32
    return %c0_i32, %c0_i32_0 : i32, i32
  }
  func.func @transform_5(%arg0: i32) -> (i32, i32) {
    %c0_i32 = arith.constant 0 : i32
    %c0_i32_0 = arith.constant 0 : i32
    %c0_i32_1 = arith.constant 0 : i32
    return %c0_i32, %c0_i32_0 : i32, i32
  }
  func.func @transform_6(%arg0: i32) -> (i32, i32) {
    %c0_i32 = arith.constant 0 : i32
    %c0_i32_0 = arith.constant 0 : i32
    %c0_i32_1 = arith.constant 0 : i32
    return %c0_i32, %c0_i32_0 : i32, i32
  }
  func.func @transform_7(%arg0: i32) -> (i32, i32) {
    %c0_i32 = arith.constant 0 : i32
    %c0_i32_0 = arith.constant 0 : i32
    %c0_i32_1 = arith.constant 0 : i32
    return %c0_i32, %c0_i32_0 : i32, i32
  }
  func.func @transform_8(%arg0: i32) -> (i32, i32) {
    %c0_i32 = arith.constant 0 : i32
    %c0_i32_0 = arith.constant 0 : i32
    %c0_i32_1 = arith.constant 0 : i32
    return %c0_i32, %c0_i32_0 : i32, i32
  }
  func.func @transform_9(%arg0: i32) -> (i32, i32) {
    %c0_i32 = arith.constant 0 : i32
    %c0_i32_0 = arith.constant 0 : i32
    %c0_i32_1 = arith.constant 0 : i32
    return %c0_i32, %c0_i32_0 : i32, i32
  }
  func.func @transform_10(%arg0: i32) -> (i32, i32) {
    %c0_i32 = arith.constant 0 : i32
    %c0_i32_0 = arith.constant 0 : i32
    %c0_i32_1 = arith.constant 0 : i32
    return %c0_i32, %c0_i32_0 : i32, i32
  }
  func.func @transform_11(%arg0: i32) -> (i32, i32) {
    %c0_i32 = arith.constant 0 : i32
    %c0_i32_0 = arith.constant 0 : i32
    %c0_i32_1 = arith.constant 0 : i32
    return %c0_i32, %c0_i32_0 : i32, i32
  }
  func.func @transform_12(%arg0: i32) -> (i32, i32) {
    %c0_i32 = arith.constant 0 : i32
    %c0_i32_0 = arith.constant 0 : i32
    %c0_i32_1 = arith.constant 0 : i32
    return %c0_i32, %c0_i32_0 : i32, i32
  }
  func.func @transform_13(%arg0: i32) -> (i32, i32) {
    %c0_i32 = arith.constant 0 : i32
    %c0_i32_0 = arith.constant 0 : i32
    %c0_i32_1 = arith.constant 0 : i32
    return %c0_i32, %c0_i32_0 : i32, i32
  }
  func.func @transform_14(%arg0: i32) -> (i32, i32) {
    %c0_i32 = arith.constant 0 : i32
    %c0_i32_0 = arith.constant 0 : i32
    %c0_i32_1 = arith.constant 0 : i32
    return %c0_i32, %c0_i32_0 : i32, i32
  }
  func.func @transform_15(%arg0: i32) -> (i32, i32, i32) {
    %c0_i32 = arith.constant 0 : i32
    %c0_i32_0 = arith.constant 0 : i32
    %c0_i32_1 = arith.constant 0 : i32
    return %arg0, %c0_i32, %c0_i32_0 : i32, i32, i32
  }
}

</mosaic_0001>

<llo_original>
// kernel: tpu_custom_call.1
$region0: #{tpu_custom_call.1}
  #allocation0 [shape = 'u32[]', space=smem, size = 0x4, offset = 0x4, fixed_abs, tag = 'smem constant byte address 0x4 - core index']
  #allocation1 [shape = 'u32[144,128]{1,0:T(1,128)}', space=vmem, size = 0x12000, scoped, tag = 'internal scratch']
  %s0 = inlined_call_operand.vmem [shape: f32[2,32,256], index: 0, kind: input, shape index: {}]
  %s1 = inlined_call_operand.hbm [shape: f32[25,1,256], index: 1, kind: input, shape index: {}]
  %s2 = inlined_call_operand.hbm [shape: f32[9,1,256], index: 2, kind: input, shape index: {}]
  %s3 = inlined_call_operand.vmem [shape: f32[32,32], index: 3, kind: input, shape index: {}]
  %s4 = inlined_call_operand.vmem [shape: f32[32,1], index: 4, kind: input, shape index: {}]
  %s5 = inlined_call_operand.hbm [shape: f32[16,400], index: 5, kind: input, shape index: {}]
  %s6 = inlined_call_operand.vmem [shape: f32[16,1], index: 6, kind: input, shape index: {}]
  %s7 = inlined_call_operand.hbm [shape: f32[16,400], index: 7, kind: input, shape index: {}]
  %s8 = inlined_call_operand.vmem [shape: f32[16,1], index: 8, kind: input, shape index: {}]
  %s9 = inlined_call_operand.hbm [shape: f32[32,288], index: 9, kind: input, shape index: {}]
  %s10 = inlined_call_operand.vmem [shape: f32[32,1], index: 10, kind: input, shape index: {}]
  %s11 = inlined_call_operand.hbm [shape: f32[16,144], index: 11, kind: input, shape index: {}]
  %s12 = inlined_call_operand.vmem [shape: f32[16,1], index: 12, kind: input, shape index: {}]
  %s13 = inlined_call_operand.vmem [shape: f32[32,64], index: 13, kind: input, shape index: {}]
  %s14 = inlined_call_operand.vmem [shape: f32[32,1], index: 14, kind: input, shape index: {}]
  %s15 = inlined_call_operand.hbm [shape: f32[2,32,256], index: 15, kind: output, shape index: {}]
  %s16 = sld [smem:[#allocation0]]
  $region117: #{tpu_custom_call.1} parent=0
    _
  %s18 = ssub.s32 1, %s16
  %s19 = scalar_select 0, %s18, %s16
  $region1: #{tpu_custom_call.1} parent=0
    #allocation2 [shape = 'u8[25600]{0}', space=vmem, size = 0x6400, scoped, tag = 'input window, operand 1, single buffered']
    #allocation3 [shape = 's32[2]{0}', space=sflag, size = 0x8, scoped, tag = 'scoped memory for tpu_custom_call.1']
    #allocation4 [shape = 's32[2]{0}', space=sflag, size = 0x8, scoped, tag = 'scoped memory for tpu_custom_call.1']
    #allocation5 [shape = 'u8[9216]{0}', space=vmem, size = 0x2400, scoped, tag = 'input window, operand 2, single buffered']
    #allocation6 [shape = 's32[1]{0}', space=sflag, size = 0x4, scoped, tag = 'scoped memory for tpu_custom_call.1']
    #allocation7 [shape = 'u8[32768]{0}', space=vmem, size = 0x8000, scoped, tag = 'input window, operand 5, single buffered']
    #allocation8 [shape = 'u8[32768]{0}', space=vmem, size = 0x8000, scoped, tag = 'input window, operand 7, single buffered']
    #allocation9 [shape = 's32[1]{0}', space=sflag, size = 0x4, scoped, tag = 'scoped memory for tpu_custom_call.1']
    #allocation10 [shape = 'u8[49152]{0}', space=vmem, size = 0xc000, scoped, tag = 'input window, operand 9, single buffered']
    #allocation11 [shape = 'u8[16384]{0}', space=vmem, size = 0x4000, scoped, tag = 'input window, operand 11, single buffered']
    #allocation12 [shape = 's32[1]{0}', space=sflag, size = 0x4, scoped, tag = 'scoped memory for tpu_custom_call.1']
    #allocation13 [shape = 'u8[65536]{0}', space=vmem, size = 0x10000, scoped, tag = 'output window, operand 0']
    %20 = vsyncpa [#allocation3], 0
    %21 = vsyncpa [#allocation6], 0
    %22 = vsyncpa [#allocation9], 0
    %23 = vsyncpa [#allocation12], 0
    %24 = vsyncpa [#allocation4], 0
    %s25 = scalar_lea.sflag [#allocation4], 1
    %26 = vsyncpa %s25, 0
    loop: start=0, step=1, limit=4
    $region2: #{tpu_custom_call.1} parent=1 // loop_pre_header
      _
    $region3: #{tpu_custom_call.1} parent=1 // loop_header
      %s28 = sphi 0, %s32
      %p29 = scmp.ge.s32.totalorder %s28, 4
      %s38 = sphi 0, %s40
      %s41 = sphi 0, %s38
      %s42 = sphi 0, %s41
      %s58 = sphi 0, %s42
      %s62 = sphi 0, %s62
      %s64 = sphi 0, %s62
      %s65 = sphi 0, %s64
      %s79 = sphi 0, %s65
      %s83 = sphi 0, %s83
      %s85 = sphi 0, %s83
      %s86 = sphi 0, %s85
      %s100 = sphi 0, %s86
      %s104 = sphi 0, %s104
      %s106 = sphi 0, %s104
      %s107 = sphi 0, %s106
      %s121 = sphi 0, %s107
      %s125 = sphi 0, %s125
      %s127 = sphi 0, %s125
      %s128 = sphi 0, %s127
      %s142 = sphi 0, %s128
      %s146 = sphi 0, %s146
      %s148 = sphi 0, %s146
      %s149 = sphi 0, %s148
      %s163 = sphi 0, %s149
      %s167 = sphi 0, %s167
      %s169 = sphi 0, %s167
      %s170 = sphi 0, %s169
      %s184 = sphi 0, %s170
      %s188 = sphi 0, %s188
      %s190 = sphi 0, %s188
      %s191 = sphi 0, %s190
      %s205 = sphi 0, %s191
      %s209 = sphi 0, %s209
      %s211 = sphi 0, %s209
      %s212 = sphi 0, %s211
      %s226 = sphi 0, %s212
      %s230 = sphi 0, %s230
      %s232 = sphi 0, %s230
      %s233 = sphi 0, %s232
      %s247 = sphi 0, %s233
      %s251 = sphi 0, %s251
      %s253 = sphi 0, %s251
      %s254 = sphi 0, %s253
      %s268 = sphi 0, %s254
      %s272 = sphi 0, %s272
      %s274 = sphi 0, %s272
      %s275 = sphi 0, %s274
      %s289 = sphi 0, %s275
      %s293 = sphi 0, %s293
      %s295 = sphi 0, %s293
      %s296 = sphi 0, %s295
      %s310 = sphi 0, %s296
      %s314 = sphi 0, %s314
      %s316 = sphi 0, %s314
      %s317 = sphi 0, %s316
      %s331 = sphi 0, %s317
      %s335 = sphi 0, %s335
      %s337 = sphi 0, %s335
      %s338 = sphi 0, %s337
      %s352 = sphi 0, %s338
      %s358 = sphi 0, %s360
      %s361 = sphi 0, %s358
      %s362 = sphi 0, %s361
      %s378 = sphi 0, %s362
    $region4: #{tpu_custom_call.1} parent=1 // loop_header_branch
      %31 = sbr.rel (%p29) target = $region8
    $region5: #{tpu_custom_call.1} parent=1 // loop_body
      %s33 = ssub.s32 %s28, 1
      %s34 = ssub.s32 %s28, 2
      %s35 = sadd.s32 %s28, 1
      %s36 = ssub.s32 %s28, %s35
      %p37 = scmp.eq.s32.totalorder %s36, 0
      %s39 = sadd.s32 %s38, 1
      %s40 = scalar_select %p37, %s38, %s39
      %p43 = pneg %p37
      %p44 = scmp.eq.s32.totalorder %s28, 1
      %p45 = por %p43, %p44
      %p46 = scmp.ne.s32.totalorder %s38, %s41
      %p47 = scmp.eq.s32.totalorder %s28, 0
      %p48 = por %p46, %p47
      %p49 = scmp.ne.s32.totalorder %s38, %s41
      %p50 = scmp.eq.s32.totalorder %s33, 1
      %p51 = por %p49, %p50
      %p52 = scmp.ne.s32.totalorder %s41, %s42
      %p53 = scmp.eq.s32.totalorder %s33, 0
      %p54 = por %p52, %p53
      %p55 = scmp.ne.s32.totalorder %s41, %s42
      %p56 = scmp.eq.s32.totalorder %s34, 1
      %p57 = por %p55, %p56
      %p59 = scmp.ne.s32.totalorder %s42, %s58
      %p60 = scmp.eq.s32.totalorder %s34, 0
      %p61 = por %p59, %p60
      %s63 = sadd.s32 %s62, 1
      %p66 = scmp.eq.s32.totalorder %s28, 1
      %p67 = scmp.ne.s32.totalorder %s62, %s64
      %p68 = scmp.eq.s32.totalorder %s28, 0
      %p69 = por %p67, %p68
      %p70 = scmp.ne.s32.totalorder %s62, %s64
      %p71 = scmp.eq.s32.totalorder %s33, 1
      %p72 = por %p70, %p71
      %p73 = scmp.ne.s32.totalorder %s64, %s65
      %p74 = scmp.eq.s32.totalorder %s33, 0
      %p75 = por %p73, %p74
      %p76 = scmp.ne.s32.totalorder %s64, %s65
      %p77 = scmp.eq.s32.totalorder %s34, 1
      %p78 = por %p76, %p77
      %p80 = scmp.ne.s32.totalorder %s65, %s79
      %p81 = scmp.eq.s32.totalorder %s34, 0
      %p82 = por %p80, %p81
      %s84 = sadd.s32 %s83, 1
      %p87 = scmp.eq.s32.totalorder %s28, 1
      %p88 = scmp.ne.s32.totalorder %s83, %s85
      %p89 = scmp.eq.s32.totalorder %s28, 0
      %p90 = por %p88, %p89
      %p91 = scmp.ne.s32.totalorder %s83, %s85
      %p92 = scmp.eq.s32.totalorder %s33, 1
      %p93 = por %p91, %p92
      %p94 = scmp.ne.s32.totalorder %s85, %s86
      %p95 = scmp.eq.s32.totalorder %s33, 0
      %p96 = por %p94, %p95
      %p97 = scmp.ne.s32.totalorder %s85, %s86
      %p98 = scmp.eq.s32.totalorder %s34, 1
      %p99 = por %p97, %p98
      %p101 = scmp.ne.s32.totalorder %s86, %s100
      %p102 = scmp.eq.s32.totalorder %s34, 0
      %p103 = por %p101, %p102
      %s105 = sadd.s32 %s104, 1
      %p108 = scmp.eq.s32.totalorder %s28, 1
      %p109 = scmp.ne.s32.totalorder %s104, %s106
      %p110 = scmp.eq.s32.totalorder %s28, 0
      %p111 = por %p109, %p110
      %p112 = scmp.ne.s32.totalorder %s104, %s106
      %p113 = scmp.eq.s32.totalorder %s33, 1
      %p114 = por %p112, %p113
      %p115 = scmp.ne.s32.totalorder %s106, %s107
      %p116 = scmp.eq.s32.totalorder %s33, 0
      %p117 = por %p115, %p116
      %p118 = scmp.ne.s32.totalorder %s106, %s107
      %p119 = scmp.eq.s32.totalorder %s34, 1
      %p120 = por %p118, %p119
      %p122 = scmp.ne.s32.totalorder %s107, %s121
      %p123 = scmp.eq.s32.totalorder %s34, 0
      %p124 = por %p122, %p123
      %s126 = sadd.s32 %s125, 1
      %p129 = scmp.eq.s32.totalorder %s28, 1
      %p130 = scmp.ne.s32.totalorder %s125, %s127
      %p131 = scmp.eq.s32.totalorder %s28, 0
      %p132 = por %p130, %p131
      %p133 = scmp.ne.s32.totalorder %s125, %s127
      %p134 = scmp.eq.s32.totalorder %s33, 1
      %p135 = por %p133, %p134
      %p136 = scmp.ne.s32.totalorder %s127, %s128
      %p137 = scmp.eq.s32.totalorder %s33, 0
      %p138 = por %p136, %p137
      %p139 = scmp.ne.s32.totalorder %s127, %s128
      %p140 = scmp.eq.s32.totalorder %s34, 1
      %p141 = por %p139, %p140
      %p143 = scmp.ne.s32.totalorder %s128, %s142
      %p144 = scmp.eq.s32.totalorder %s34, 0
      %p145 = por %p143, %p144
      %s147 = sadd.s32 %s146, 1
      %p150 = scmp.eq.s32.totalorder %s28, 1
      %p151 = scmp.ne.s32.totalorder %s146, %s148
      %p152 = scmp.eq.s32.totalorder %s28, 0
      %p153 = por %p151, %p152
      %p154 = scmp.ne.s32.totalorder %s146, %s148
      %p155 = scmp.eq.s32.totalorder %s33, 1
      %p156 = por %p154, %p155
      %p157 = scmp.ne.s32.totalorder %s148, %s149
      %p158 = scmp.eq.s32.totalorder %s33, 0
      %p159 = por %p157, %p158
      %p160 = scmp.ne.s32.totalorder %s148, %s149
      %p161 = scmp.eq.s32.totalorder %s34, 1
      %p162 = por %p160, %p161
      %p164 = scmp.ne.s32.totalorder %s149, %s163
      %p165 = scmp.eq.s32.totalorder %s34, 0
      %p166 = por %p164, %p165
      %s168 = sadd.s32 %s167, 1
      %p171 = scmp.eq.s32.totalorder %s28, 1
      %p172 = scmp.ne.s32.totalorder %s167, %s169
      %p173 = scmp.eq.s32.totalorder %s28, 0
      %p174 = por %p172, %p173
      %p175 = scmp.ne.s32.totalorder %s167, %s169
      %p176 = scmp.eq.s32.totalorder %s33, 1
      %p177 = por %p175, %p176
      %p178 = scmp.ne.s32.totalorder %s169, %s170
      %p179 = scmp.eq.s32.totalorder %s33, 0
      %p180 = por %p178, %p179
      %p181 = scmp.ne.s32.totalorder %s169, %s170
      %p182 = scmp.eq.s32.totalorder %s34, 1
      %p183 = por %p181, %p182
      %p185 = scmp.ne.s32.totalorder %s170, %s184
      %p186 = scmp.eq.s32.totalorder %s34, 0
      %p187 = por %p185, %p186
      %s189 = sadd.s32 %s188, 1
      %p192 = scmp.eq.s32.totalorder %s28, 1
      %p193 = scmp.ne.s32.totalorder %s188, %s190
      %p194 = scmp.eq.s32.totalorder %s28, 0
      %p195 = por %p193, %p194
      %p196 = scmp.ne.s32.totalorder %s188, %s190
      %p197 = scmp.eq.s32.totalorder %s33, 1
      %p198 = por %p196, %p197
      %p199 = scmp.ne.s32.totalorder %s190, %s191
      %p200 = scmp.eq.s32.totalorder %s33, 0
      %p201 = por %p199, %p200
      %p202 = scmp.ne.s32.totalorder %s190, %s191
      %p203 = scmp.eq.s32.totalorder %s34, 1
      %p204 = por %p202, %p203
      %p206 = scmp.ne.s32.totalorder %s191, %s205
      %p207 = scmp.eq.s32.totalorder %s34, 0
      %p208 = por %p206, %p207
      %s210 = sadd.s32 %s209, 1
      %p213 = scmp.eq.s32.totalorder %s28, 1
      %p214 = scmp.ne.s32.totalorder %s209, %s211
      %p215 = scmp.eq.s32.totalorder %s28, 0
      %p216 = por %p214, %p215
      %p217 = scmp.ne.s32.totalorder %s209, %s211
      %p218 = scmp.eq.s32.totalorder %s33, 1
      %p219 = por %p217, %p218
      %p220 = scmp.ne.s32.totalorder %s211, %s212
      %p221 = scmp.eq.s32.totalorder %s33, 0
      %p222 = por %p220, %p221
      %p223 = scmp.ne.s32.totalorder %s211, %s212
      %p224 = scmp.eq.s32.totalorder %s34, 1
      %p225 = por %p223, %p224
      %p227 = scmp.ne.s32.totalorder %s212, %s226
      %p228 = scmp.eq.s32.totalorder %s34, 0
      %p229 = por %p227, %p228
      %s231 = sadd.s32 %s230, 1
      %p234 = scmp.eq.s32.totalorder %s28, 1
      %p235 = scmp.ne.s32.totalorder %s230, %s232
      %p236 = scmp.eq.s32.totalorder %s28, 0
      %p237 = por %p235, %p236
      %p238 = scmp.ne.s32.totalorder %s230, %s232
      %p239 = scmp.eq.s32.totalorder %s33, 1
      %p240 = por %p238, %p239
      %p241 = scmp.ne.s32.totalorder %s232, %s233
      %p242 = scmp.eq.s32.totalorder %s33, 0
      %p243 = por %p241, %p242
      %p244 = scmp.ne.s32.totalorder %s232, %s233
      %p245 = scmp.eq.s32.totalorder %s34, 1
      %p246 = por %p244, %p245
      %p248 = scmp.ne.s32.totalorder %s233, %s247
      %p249 = scmp.eq.s32.totalorder %s34, 0
      %p250 = por %p248, %p249
      %s252 = sadd.s32 %s251, 1
      %p255 = scmp.eq.s32.totalorder %s28, 1
      %p256 = scmp.ne.s32.totalorder %s251, %s253
      %p257 = scmp.eq.s32.totalorder %s28, 0
      %p258 = por %p256, %p257
      %p259 = scmp.ne.s32.totalorder %s251, %s253
      %p260 = scmp.eq.s32.totalorder %s33, 1
      %p261 = por %p259, %p260
      %p262 = scmp.ne.s32.totalorder %s253, %s254
      %p263 = scmp.eq.s32.totalorder %s33, 0
      %p264 = por %p262, %p263
      %p265 = scmp.ne.s32.totalorder %s253, %s254
      %p266 = scmp.eq.s32.totalorder %s34, 1
      %p267 = por %p265, %p266
      %p269 = scmp.ne.s32.totalorder %s254, %s268
      %p270 = scmp.eq.s32.totalorder %s34, 0
      %p271 = por %p269, %p270
      %s273 = sadd.s32 %s272, 1
      %p276 = scmp.eq.s32.totalorder %s28, 1
      %p277 = scmp.ne.s32.totalorder %s272, %s274
      %p278 = scmp.eq.s32.totalorder %s28, 0
      %p279 = por %p277, %p278
      %p280 = scmp.ne.s32.totalorder %s272, %s274
      %p281 = scmp.eq.s32.totalorder %s33, 1
      %p282 = por %p280, %p281
      %p283 = scmp.ne.s32.totalorder %s274, %s275
      %p284 = scmp.eq.s32.totalorder %s33, 0
      %p285 = por %p283, %p284
      %p286 = scmp.ne.s32.totalorder %s274, %s275
      %p287 = scmp.eq.s32.totalorder %s34, 1
      %p288 = por %p286, %p287
      %p290 = scmp.ne.s32.totalorder %s275, %s289
      %p291 = scmp.eq.s32.totalorder %s34, 0
      %p292 = por %p290, %p291
      %s294 = sadd.s32 %s293, 1
      %p297 = scmp.eq.s32.totalorder %s28, 1
      %p298 = scmp.ne.s32.totalorder %s293, %s295
      %p299 = scmp.eq.s32.totalorder %s28, 0
      %p300 = por %p298, %p299
      %p301 = scmp.ne.s32.totalorder %s293, %s295
      %p302 = scmp.eq.s32.totalorder %s33, 1
      %p303 = por %p301, %p302
      %p304 = scmp.ne.s32.totalorder %s295, %s296
      %p305 = scmp.eq.s32.totalorder %s33, 0
      %p306 = por %p304, %p305
      %p307 = scmp.ne.s32.totalorder %s295, %s296
      %p308 = scmp.eq.s32.totalorder %s34, 1
      %p309 = por %p307, %p308
      %p311 = scmp.ne.s32.totalorder %s296, %s310
      %p312 = scmp.eq.s32.totalorder %s34, 0
      %p313 = por %p311, %p312
      %s315 = sadd.s32 %s314, 1
      %p318 = scmp.eq.s32.totalorder %s28, 1
      %p319 = scmp.ne.s32.totalorder %s314, %s316
      %p320 = scmp.eq.s32.totalorder %s28, 0
      %p321 = por %p319, %p320
      %p322 = scmp.ne.s32.totalorder %s314, %s316
      %p323 = scmp.eq.s32.totalorder %s33, 1
      %p324 = por %p322, %p323
      %p325 = scmp.ne.s32.totalorder %s316, %s317
      %p326 = scmp.eq.s32.totalorder %s33, 0
      %p327 = por %p325, %p326
      %p328 = scmp.ne.s32.totalorder %s316, %s317
      %p329 = scmp.eq.s32.totalorder %s34, 1
      %p330 = por %p328, %p329
      %p332 = scmp.ne.s32.totalorder %s317, %s331
      %p333 = scmp.eq.s32.totalorder %s34, 0
      %p334 = por %p332, %p333
      %s336 = sadd.s32 %s335, 1
      %p339 = scmp.eq.s32.totalorder %s28, 1
      %p340 = scmp.ne.s32.totalorder %s335, %s337
      %p341 = scmp.eq.s32.totalorder %s28, 0
      %p342 = por %p340, %p341
      %p343 = scmp.ne.s32.totalorder %s335, %s337
      %p344 = scmp.eq.s32.totalorder %s33, 1
      %p345 = por %p343, %p344
      %p346 = scmp.ne.s32.totalorder %s337, %s338
      %p347 = scmp.eq.s32.totalorder %s33, 0
      %p348 = por %p346, %p347
      %p349 = scmp.ne.s32.totalorder %s337, %s338
      %p350 = scmp.eq.s32.totalorder %s34, 1
      %p351 = por %p349, %p350
      %p353 = scmp.ne.s32.totalorder %s338, %s352
      %p354 = scmp.eq.s32.totalorder %s34, 0
      %p355 = por %p353, %p354
      %s356 = ssub.s32 %s28, %s35
      %p357 = scmp.eq.s32.totalorder %s356, 0
      %s359 = sadd.s32 %s358, 1
      %s360 = scalar_select %p357, %s358, %s359
      %p363 = pneg %p357
      %p364 = scmp.eq.s32.totalorder %s28, 1
      %p365 = por %p363, %p364
      %p366 = scmp.ne.s32.totalorder %s358, %s361
      %p367 = scmp.eq.s32.totalorder %s28, 0
      %p368 = por %p366, %p367
      %p369 = scmp.ne.s32.totalorder %s358, %s361
      %p370 = scmp.eq.s32.totalorder %s33, 1
      %p371 = por %p369, %p370
      %p372 = scmp.ne.s32.totalorder %s361, %s362
      %p373 = scmp.eq.s32.totalorder %s33, 0
      %p374 = por %p372, %p373
      %p375 = scmp.ne.s32.totalorder %s361, %s362
      %p376 = scmp.eq.s32.totalorder %s34, 1
      %p377 = por %p375, %p376
      %p379 = scmp.ne.s32.totalorder %s362, %s378
      %p380 = scmp.eq.s32.totalorder %s34, 0
      %p381 = por %p379, %p380
      %p382 = scmp.le.s32.totalorder 1, %s28
      %p383 = scmp.lt.s32.totalorder %s28, 3
      %p384 = pnand %p382, %p383
      %p385 = pneg %p384
      // Predicated region
      $region9: #{tpu_custom_call.1} parent=5 // pred_check
        _
      $region10: #{tpu_custom_call.1} parent=5 // pred_check_branch
        %387 = sbr.rel (%p384) target = $region12
      $region11: #{tpu_custom_call.1} parent=5 // pred_region
        %s388 = ssub.s32 %s28, 1
        // Predicated region
        $region13: #{tpu_custom_call.1} parent=11 // pred_check
          %p389 = pneg %p75
        $region14: #{tpu_custom_call.1} parent=11 // pred_check_branch
          %391 = sbr.rel (%p389) target = $region16
        $region15: #{tpu_custom_call.1} parent=11 // pred_region
          %s393 = ssub.s32 800, 800
          %394 = vsyncadd [#allocation3], %s393
          %s395 = sshll.u32 [#allocation2], 4
          %s396 = int_to_ptr.vmem [resolvable:$true] %s395
          %401 = dma.hbm_to_vmem [thread:$0]  %s1, 800, %s396, [#allocation3], 32, 32, 2
        $region16: #{tpu_custom_call.1} parent=11 // pred_fallthru
          _
        // Predicated region
        $region17: #{tpu_custom_call.1} parent=11 // pred_check
          %p402 = pneg %p96
        $region18: #{tpu_custom_call.1} parent=11 // pred_check_branch
          %404 = sbr.rel (%p402) target = $region20
        $region19: #{tpu_custom_call.1} parent=11 // pred_region
          %s406 = ssub.s32 288, 288
          %407 = vsyncadd [#allocation6], %s406
          %s408 = sshll.u32 [#allocation5], 4
          %s409 = int_to_ptr.vmem [resolvable:$true] %s408
          %414 = dma.hbm_to_vmem [thread:$0]  %s2, 288, %s409, [#allocation6], 32, 32, 2
        $region20: #{tpu_custom_call.1} parent=11 // pred_fallthru
          _
        // Predicated region
        $region21: #{tpu_custom_call.1} parent=11 // pred_check
          %p415 = pneg %p117
        $region22: #{tpu_custom_call.1} parent=11 // pred_check_branch
          %417 = sbr.rel (%p415) target = $region24
        $region23: #{tpu_custom_call.1} parent=11 // pred_region
          _
        $region24: #{tpu_custom_call.1} parent=11 // pred_fallthru
          _
        // Predicated region
        $region25: #{tpu_custom_call.1} parent=11 // pred_check
          %p418 = pneg %p138
        $region26: #{tpu_custom_call.1} parent=11 // pred_check_branch
          %420 = sbr.rel (%p418) target = $region28
        $region27: #{tpu_custom_call.1} parent=11 // pred_region
          _
        $region28: #{tpu_custom_call.1} parent=11 // pred_fallthru
          _
        // Predicated region
        $region29: #{tpu_custom_call.1} parent=11 // pred_check
          %p421 = pneg %p159
        $region30: #{tpu_custom_call.1} parent=11 // pred_check_branch
          %423 = sbr.rel (%p421) target = $region32
        $region31: #{tpu_custom_call.1} parent=11 // pred_region
          %s425 = ssub.s32 1024, 1024
          %426 = vsyncadd [#allocation6], %s425
          %s427 = sshll.u32 [#allocation7], 4
          %s428 = int_to_ptr.vmem [resolvable:$true] %s427
          %433 = dma.hbm_to_vmem [thread:$0]  %s5, 1024, %s428, [#allocation6], 512, 512, 32
        $region32: #{tpu_custom_call.1} parent=11 // pred_fallthru
          _
        // Predicated region
        $region33: #{tpu_custom_call.1} parent=11 // pred_check
          %p434 = pneg %p180
        $region34: #{tpu_custom_call.1} parent=11 // pred_check_branch
          %436 = sbr.rel (%p434) target = $region36
        $region35: #{tpu_custom_call.1} parent=11 // pred_region
          _
        $region36: #{tpu_custom_call.1} parent=11 // pred_fallthru
          _
        // Predicated region
        $region37: #{tpu_custom_call.1} parent=11 // pred_check
          %p437 = pneg %p201
        $region38: #{tpu_custom_call.1} parent=11 // pred_check_branch
          %439 = sbr.rel (%p437) target = $region40
        $region39: #{tpu_custom_call.1} parent=11 // pred_region
          %s441 = ssub.s32 1024, 1024
          %442 = vsyncadd [#allocation9], %s441
          %s443 = sshll.u32 [#allocation8], 4
          %s444 = int_to_ptr.vmem [resolvable:$true] %s443
          %449 = dma.hbm_to_vmem [thread:$0]  %s7, 1024, %s444, [#allocation9], 512, 512, 32
        $region40: #{tpu_custom_call.1} parent=11 // pred_fallthru
          _
        // Predicated region
        $region41: #{tpu_custom_call.1} parent=11 // pred_check
          %p450 = pneg %p222
        $region42: #{tpu_custom_call.1} parent=11 // pred_check_branch
          %452 = sbr.rel (%p450) target = $region44
        $region43: #{tpu_custom_call.1} parent=11 // pred_region
          _
        $region44: #{tpu_custom_call.1} parent=11 // pred_fallthru
          _
        // Predicated region
        $region45: #{tpu_custom_call.1} parent=11 // pred_check
          %p453 = pneg %p243
        $region46: #{tpu_custom_call.1} parent=11 // pred_check_branch
          %455 = sbr.rel (%p453) target = $region48
        $region47: #{tpu_custom_call.1} parent=11 // pred_region
          %s457 = ssub.s32 1536, 1536
          %458 = vsyncadd [#allocation9], %s457
          %s459 = sshll.u32 [#allocation10], 4
          %s460 = int_to_ptr.vmem [resolvable:$true] %s459
          %465 = dma.hbm_to_vmem [thread:$0]  %s9, 1536, %s460, [#allocation9], 384, 384, 24
        $region48: #{tpu_custom_call.1} parent=11 // pred_fallthru
          _
        // Predicated region
        $region49: #{tpu_custom_call.1} parent=11 // pred_check
          %p466 = pneg %p264
        $region50: #{tpu_custom_call.1} parent=11 // pred_check_branch
          %468 = sbr.rel (%p466) target = $region52
        $region51: #{tpu_custom_call.1} parent=11 // pred_region
          _
        $region52: #{tpu_custom_call.1} parent=11 // pred_fallthru
          _
        // Predicated region
        $region53: #{tpu_custom_call.1} parent=11 // pred_check
          %p469 = pneg %p285
        $region54: #{tpu_custom_call.1} parent=11 // pred_check_branch
          %471 = sbr.rel (%p469) target = $region56
        $region55: #{tpu_custom_call.1} parent=11 // pred_region
          %s473 = ssub.s32 512, 512
          %474 = vsyncadd [#allocation12], %s473
          %s475 = sshll.u32 [#allocation11], 4
          %s476 = int_to_ptr.vmem [resolvable:$true] %s475
          %481 = dma.hbm_to_vmem [thread:$0]  %s11, 512, %s476, [#allocation12], 256, 256, 16
        $region56: #{tpu_custom_call.1} parent=11 // pred_fallthru
          _
        // Predicated region
        $region57: #{tpu_custom_call.1} parent=11 // pred_check
          %p482 = pneg %p306
        $region58: #{tpu_custom_call.1} parent=11 // pred_check_branch
          %484 = sbr.rel (%p482) target = $region60
        $region59: #{tpu_custom_call.1} parent=11 // pred_region
          _
        $region60: #{tpu_custom_call.1} parent=11 // pred_fallthru
          _
        // Predicated region
        $region61: #{tpu_custom_call.1} parent=11 // pred_check
          %p485 = pneg %p327
        $region62: #{tpu_custom_call.1} parent=11 // pred_check_branch
          %487 = sbr.rel (%p485) target = $region64
        $region63: #{tpu_custom_call.1} parent=11 // pred_region
          _
        $region64: #{tpu_custom_call.1} parent=11 // pred_fallthru
          _
        // Predicated region
        $region65: #{tpu_custom_call.1} parent=11 // pred_check
          %p488 = pneg %p348
        $region66: #{tpu_custom_call.1} parent=11 // pred_check_branch
          %490 = sbr.rel (%p488) target = $region68
        $region67: #{tpu_custom_call.1} parent=11 // pred_region
          _
        $region68: #{tpu_custom_call.1} parent=11 // pred_fallthru
          _
      $region12: #{tpu_custom_call.1} parent=5 // pred_fallthru
        _
      %p491 = scmp.lt.s32.totalorder %s28, 2
      // Predicated region
      $region69: #{tpu_custom_call.1} parent=5 // pred_check
        %p492 = pneg %p491
      $region70: #{tpu_custom_call.1} parent=5 // pred_check_branch
        %494 = sbr.rel (%p492) target = $region72
      $region71: #{tpu_custom_call.1} parent=5 // pred_region
        // Predicated region
        $region73: #{tpu_custom_call.1} parent=71 // pred_check
          %p495 = pneg %p48
        $region74: #{tpu_custom_call.1} parent=71 // pred_check_branch
          %497 = sbr.rel (%p495) target = $region76
        $region75: #{tpu_custom_call.1} parent=71 // pred_region
          %p498 = scmp.lt.s32.totalorder %s28, 1
          %s499 = scalar_select %p498, %s28, 1
          %s500 = smul.addr %s499, 8
          %s501 = smul.addr %s500, 8
          %s502 = scalar_lea.vmem %s0, %s501
        $region76: #{tpu_custom_call.1} parent=71 // pred_fallthru
          _
      $region72: #{tpu_custom_call.1} parent=5 // pred_fallthru
        _
      %p503 = scmp.le.s32.totalorder 1, %s28
      %p504 = scmp.lt.s32.totalorder %s28, 3
      %p505 = pnand %p503, %p504
      %p506 = pneg %p505
      // Predicated region
      $region77: #{tpu_custom_call.1} parent=5 // pred_check
        _
      $region78: #{tpu_custom_call.1} parent=5 // pred_check_branch
        %508 = sbr.rel (%p505) target = $region80
      $region79: #{tpu_custom_call.1} parent=5 // pred_region
        %s509 = ssub.s32 %s28, 1
        // Predicated region
        $region81: #{tpu_custom_call.1} parent=79 // pred_check
          %p510 = pneg %p75
        $region82: #{tpu_custom_call.1} parent=79 // pred_check_branch
          %512 = sbr.rel (%p510) target = $region84
        $region83: #{tpu_custom_call.1} parent=79 // pred_region
          %513 = dma.done [#allocation3], 800
        $region84: #{tpu_custom_call.1} parent=79 // pred_fallthru
          _
        // Predicated region
        $region85: #{tpu_custom_call.1} parent=79 // pred_check
          %p514 = pneg %p96
        $region86: #{tpu_custom_call.1} parent=79 // pred_check_branch
          %516 = sbr.rel (%p514) target = $region88
        $region87: #{tpu_custom_call.1} parent=79 // pred_region
          %517 = dma.done [#allocation6], 288
        $region88: #{tpu_custom_call.1} parent=79 // pred_fallthru
          _
        // Predicated region
        $region89: #{tpu_custom_call.1} parent=79 // pred_check
          %p518 = pneg %p159
        $region90: #{tpu_custom_call.1} parent=79 // pred_check_branch
          %520 = sbr.rel (%p518) target = $region92
        $region91: #{tpu_custom_call.1} parent=79 // pred_region
          %521 = dma.done [#allocation6], 1024
        $region92: #{tpu_custom_call.1} parent=79 // pred_fallthru
          _
        // Predicated region
        $region93: #{tpu_custom_call.1} parent=79 // pred_check
          %p522 = pneg %p201
        $region94: #{tpu_custom_call.1} parent=79 // pred_check_branch
          %524 = sbr.rel (%p522) target = $region96
        $region95: #{tpu_custom_call.1} parent=79 // pred_region
          %525 = dma.done [#allocation9], 1024
        $region96: #{tpu_custom_call.1} parent=79 // pred_fallthru
          _
        // Predicated region
        $region97: #{tpu_custom_call.1} parent=79 // pred_check
          %p526 = pneg %p243
        $region98: #{tpu_custom_call.1} parent=79 // pred_check_branch
          %528 = sbr.rel (%p526) target = $region100
        $region99: #{tpu_custom_call.1} parent=79 // pred_region
          %529 = dma.done [#allocation9], 1536
        $region100: #{tpu_custom_call.1} parent=79 // pred_fallthru
          _
        // Predicated region
        $region101: #{tpu_custom_call.1} parent=79 // pred_check
          %p530 = pneg %p285
        $region102: #{tpu_custom_call.1} parent=79 // pred_check_branch
          %532 = sbr.rel (%p530) target = $region104
        $region103: #{tpu_custom_call.1} parent=79 // pred_region
          %533 = dma.done [#allocation12], 512
        $region104: #{tpu_custom_call.1} parent=79 // pred_fallthru
          _
        %p534 = scmp.lt.s32.totalorder %s33, 1
        %s535 = scalar_select %p534, %s33, 1
        %s536 = smul.addr %s535, 8
        %s537 = smul.addr %s536, 8
        %s538 = scalar_lea.vmem %s0, %s537
        %p539 = pneg %p54
        %p540 = pneg %p51
        %p541 = pneg %p75
        %p542 = pneg %p72
        %p543 = pneg %p96
        %p544 = pneg %p93
        %p545 = pneg %p117
        %p546 = pneg %p114
        %p547 = pneg %p138
        %p548 = pneg %p135
        %p549 = pneg %p159
        %p550 = pneg %p156
        %p551 = pneg %p180
        %p552 = pneg %p177
        %p553 = pneg %p201
        %p554 = pneg %p198
        %p555 = pneg %p222
        %p556 = pneg %p219
        %p557 = pneg %p243
        %p558 = pneg %p240
        %p559 = pneg %p264
        %p560 = pneg %p261
        %p561 = pneg %p285
        %p562 = pneg %p282
        %p563 = pneg %p306
        %p564 = pneg %p303
        %p565 = pneg %p327
        %p566 = pneg %p324
        %p567 = pneg %p348
        %p568 = pneg %p345
        %p569 = pneg %p374
        %p570 = pneg %p371
        %s571 = sand.u32 %s361, 1
        %s572 = scalar_lea.sflag [#allocation4], %s571
        %s573 = sand.u32 %s361, 1
        %s574 = smul.addr %s573, 64
        %s575 = scalar_lea.vmem [#allocation13], %s574
        %p576 = scmp.lt.s32.totalorder %s33, 1
        %s577 = scalar_select %p576, %s33, 1
        %s578 = smul.addr %s577, 8
        %s579 = smul.addr %s578, 8
        %s580 = scalar_lea.vmem %s0, %s579
        %v581 = vld [vmem:[%s580] sm:$0xff]
        %v582 = vld [vmem:[%s580 + $0x8] sm:$0xff]
        %v583 = vld [vmem:[%s580 + $0x10] sm:$0xff]
        %v584 = vld [vmem:[%s580 + $0x18] sm:$0xff]
        %v585 = vld [vmem:[%s580 + $0x20] sm:$0xff]
        %v586 = vld [vmem:[%s580 + $0x28] sm:$0xff]
        %v587 = vld [vmem:[%s580 + $0x30] sm:$0xff]
        %v588 = vld [vmem:[%s580 + $0x38] sm:$0xff]
        %v589 = vld [vmem:[%s3] sm:$0xff]
        %v590 = vld [vmem:[%s3 + $0x8] sm:$0xff]
        %v591 = vld [vmem:[%s3 + $0x10] sm:$0xff]
        %v592 = vld [vmem:[%s3 + $0x18] sm:$0xff]
        %v593 = vld [vmem:[%s4] sm:$0xff]
        %v594 = vld [vmem:[%s4 + $0x8] sm:$0xff]
        %v595 = vld [vmem:[%s4 + $0x10] sm:$0xff]
        %v596 = vld [vmem:[%s4 + $0x18] sm:$0xff]
        %598 = vset.pattern.permute.xlu0 0
        %599 = vperm.xlu0 %598, %v593
        %v600 = vpop.permute.xlu0 %599
        %603 = vset.pattern.permute.xlu0 0
        %604 = vperm.xlu0 %603, %v594
        %v605 = vpop.permute.xlu0 %604
        %608 = vset.pattern.permute.xlu0 0
        %609 = vperm.xlu0 %608, %v595
        %v610 = vpop.permute.xlu0 %609
        %613 = vset.pattern.permute.xlu0 0
        %614 = vperm.xlu0 %613, %v596
        %v615 = vpop.permute.xlu0 %614
        %vm617 = vcmask 261120
        %v619 = vsel %vm617, %v589, 0
        %v622 = vsel %vm617, %v590, 0
        %v625 = vsel %vm617, %v591, 0
        %v628 = vsel %vm617, %v592, 0
        %630 = vmatprep.subr.mxu0 %v582
        %631 = vmatpush1.msra.mxu0 %v581
        %632 = vmatprep.subr.mxu0 %v584
        %633 = vmatpush1.msra.mxu0 %v583
        %634 = vmatprep.subr.mxu0 %v586
        %635 = vmatpush1.msra.mxu0 %v585
        %636 = vmatprep.subr.mxu0 %v588
        %637 = vmatpush1.msra.mxu0 %v587
        %638 = vmatprep.subr.mxu0 0.0
        %639 = vmatpush1.msra.mxu0 0.0
        %640 = vmatprep.subr.mxu0 0.0
        %641 = vmatpush1.msra.mxu0 0.0
        %642 = vmatprep.subr.mxu0 0.0
        %643 = vmatpush1.msra.mxu0 0.0
        %644 = vmatprep.subr.mxu0 0.0
        %645 = vmatpush1.msra.mxu0 0.0
        %646 = vmatprep.subr.mxu0 0.0
        %647 = vmatpush1.msra.mxu0 0.0
        %648 = vmatprep.subr.mxu0 0.0
        %649 = vmatpush1.msra.mxu0 0.0
        %650 = vmatprep.subr.mxu0 0.0
        %651 = vmatpush1.msra.mxu0 0.0
        %652 = vmatprep.subr.mxu0 0.0
        %653 = vmatpush1.msra.mxu0 0.0
        %654 = vmatprep.subr.mxu0 0.0
        %655 = vmatpush1.msra.mxu0 0.0
        %656 = vmatprep.subr.mxu0 0.0
        %657 = vmatpush1.msra.mxu0 0.0
        %658 = vmatprep.subr.mxu0 0.0
        %659 = vmatpush1.msra.mxu0 0.0
        %660 = vmatprep.subr.mxu0 0.0
        %661 = vmatpush1.msra.mxu0 0.0
        %662 = vmatprep.subr.mxu0 0.0
        %663 = vmatpush1.msra.mxu0 0.0
        %664 = vmatprep.subr.mxu0 0.0
        %665 = vmatpush1.msra.mxu0 0.0
        %666 = vmatprep.subr.mxu0 0.0
        %667 = vmatpush1.msra.mxu0 0.0
        %668 = vmatprep.subr.mxu0 0.0
        %669 = vmatpush1.msra.mxu0 0.0
        %670 = vmatprep.subr.mxu0 0.0
        %671 = vmatpush1.msra.mxu0 0.0
        %672 = vmatprep.subr.mxu0 0.0
        %673 = vmatpush1.msra.mxu0 0.0
        %674 = vmatprep.subr.mxu0 0.0
        %675 = vmatpush1.msra.mxu0 0.0
        %676 = vmatprep.subr.mxu0 0.0
        %677 = vmatpush1.msra.mxu0 0.0
        %678 = vmatprep.subr.mxu0 0.0
        %679 = vmatpush1.msra.mxu0 0.0
        %680 = vmatprep.subr.mxu0 0.0
        %681 = vmatpush1.msra.mxu0 0.0
        %682 = vmatprep.subr.mxu0 0.0
        %683 = vmatpush1.msra.mxu0 0.0
        %684 = vmatprep.subr.mxu0 0.0
        %685 = vmatpush1.msra.mxu0 0.0
        %686 = vmatprep.subr.mxu0 0.0
        %687 = vmatpush1.msra.mxu0 0.0
        %688 = vmatprep.subr.mxu0 0.0
        %689 = vmatpush1.msra.mxu0 0.0
        %690 = vmatprep.subr.mxu0 0.0
        %691 = vmatpush1.msra.mxu0 0.0
        %692 = vmatprep.subr.mxu0 0.0
        %693 = vmatpush1.msra.mxu0 0.0
        %694 = vmatprep.mubr.f32.mxu0 0.0
        %695 = vmatmul.mubr.f32.gmra.mrb[0].mxu0 %v619
        %v696 = vpop.f32.mrb[0].mxu0
        %v697 = vadd.f32 %v600, %v696
        %v698 = vpop.f32.mrb[0].mxu0
        %v699 = vadd.f32 %v600, %v698
        %700 = vmatprep.mubr.f32.mxu0 0.0
        %701 = vmatmul.mubr.f32.gmra.mrb[0].mxu0 %v622
        %v702 = vpop.f32.mrb[0].mxu0
        %v703 = vadd.f32 %v605, %v702
        %v704 = vpop.f32.mrb[0].mxu0
        %v705 = vadd.f32 %v605, %v704
        %706 = vmatprep.mubr.f32.mxu0 0.0
        %707 = vmatmul.mubr.f32.gmra.mrb[0].mxu0 %v625
        %v708 = vpop.f32.mrb[0].mxu0
        %v709 = vadd.f32 %v610, %v708
        %v710 = vpop.f32.mrb[0].mxu0
        %v711 = vadd.f32 %v610, %v710
        %712 = vmatprep.mubr.f32.mxu0 0.0
        %713 = vmatmul.mubr.f32.gmra.mrb[0].mxu0 %v628
        %v714 = vpop.f32.mrb[0].mxu0
        %v715 = vadd.f32 %v615, %v714
        %v716 = vpop.f32.mrb[0].mxu0
        %v717 = vadd.f32 %v615, %v716
        %718 = vdwg.mxu0
        %v719 = vmax.f32 %v697, 0.0
        %v720 = vmax.f32 %v699, 0.0
        %v721 = vmax.f32 %v703, 0.0
        %v722 = vmax.f32 %v705, 0.0
        %v723 = vmax.f32 %v709, 0.0
        %v724 = vmax.f32 %v711, 0.0
        %v725 = vmax.f32 %v715, 0.0
        %v726 = vmax.f32 %v717, 0.0
        %727 = vrot.lane.b32.xlu0 %v719, 34
        %v728 = vpop.permute.xlu0 %727
        %729 = vrot.lane.b32.xlu0 %v721, 34
        %v730 = vpop.permute.xlu0 %729
        %731 = vrot.lane.b32.xlu0 %v720, 34
        %v732 = vpop.permute.xlu0 %731
        %733 = vrot.lane.b32.xlu0 %v722, 34
        %v734 = vpop.permute.xlu0 %733
        %v735 = vlaneseq
        %v736 = vand.u32 %v735, 127
        %vm737 = vcmp.lt.s32.totalorder %v736, 34
        %v738 = vsel %vm737, %v728, %v732
        %v739 = vsel %vm737, %v730, %v734
        %v740 = vsel %vm737, %v732, %v728
        %v741 = vsel %vm737, %v734, %v730
        %v742 = vld [vmem:[#allocation2] sm:$0x3]
        %v744 = vlaneseq
        %v745 = vshrl.u32 %v744, 7
        %v746 = vsub.s32 0, %v745
        %v747 = vrot.slane %v742, %v746
        %v748 = vlaneseq
        %v749 = vshrl.u32 %v748, 7
        %v750 = vsub.s32 1, %v749
        %v751 = vrot.slane %v742, %v750
        %v754 = vmul.f32 %v740, %v747
        %v755 = vmul.f32 %v738, %v751
        %v756 = vmul.f32 %v741, %v747
        %v757 = vmul.f32 %v739, %v751
        %758 = vrot.lane.b32.xlu0 %v719, 33
        %v759 = vpop.permute.xlu0 %758
        %760 = vrot.lane.b32.xlu0 %v721, 33
        %v761 = vpop.permute.xlu0 %760
        %762 = vrot.lane.b32.xlu0 %v720, 33
        %v763 = vpop.permute.xlu0 %762
        %764 = vrot.lane.b32.xlu0 %v722, 33
        %v765 = vpop.permute.xlu0 %764
        %vm766 = vcmp.lt.s32.totalorder %v736, 33
        %v767 = vsel %vm766, %v759, %v763
        %v768 = vsel %vm766, %v761, %v765
        %v769 = vsel %vm766, %v763, %v759
        %v770 = vsel %vm766, %v765, %v761
        %s771 = scalar_lea.vmem [#allocation2], 2
        %v772 = vld [vmem:[%s771] sm:$0x3]
        %v774 = vlaneseq
        %v775 = vshrl.u32 %v774, 7
        %v776 = vsub.s32 0, %v775
        %v777 = vrot.slane %v772, %v776
        %v778 = vlaneseq
        %v779 = vshrl.u32 %v778, 7
        %v780 = vsub.s32 1, %v779
        %v781 = vrot.slane %v772, %v780
        %v784 = vmul.f32 %v769, %v777
        %v785 = vmul.f32 %v767, %v781
        %v786 = vmul.f32 %v770, %v777
        %v787 = vmul.f32 %v768, %v781
        %788 = vrot.lane.b32.xlu0 %v719, 32
        %v789 = vpop.permute.xlu0 %788
        %790 = vrot.lane.b32.xlu0 %v721, 32
        %v791 = vpop.permute.xlu0 %790
        %792 = vrot.lane.b32.xlu0 %v720, 32
        %v793 = vpop.permute.xlu0 %792
        %794 = vrot.lane.b32.xlu0 %v722, 32
        %v795 = vpop.permute.xlu0 %794
        %vm796 = vcmp.lt.s32.totalorder %v736, 32
        %v797 = vsel %vm796, %v789, %v793
        %v798 = vsel %vm796, %v791, %v795
        %v799 = vsel %vm796, %v793, %v789
        %v800 = vsel %vm796, %v795, %v791
        %s801 = scalar_lea.vmem [#allocation2], 4
        %v802 = vld [vmem:[%s801] sm:$0x3]
        %v804 = vlaneseq
        %v805 = vshrl.u32 %v804, 7
        %v806 = vsub.s32 0, %v805
        %v807 = vrot.slane %v802, %v806
        %v808 = vlaneseq
        %v809 = vshrl.u32 %v808, 7
        %v810 = vsub.s32 1, %v809
        %v811 = vrot.slane %v802, %v810
        %v814 = vmul.f32 %v799, %v807
        %v815 = vmul.f32 %v797, %v811
        %v816 = vmul.f32 %v800, %v807
        %v817 = vmul.f32 %v798, %v811
        %818 = vrot.lane.b32.xlu0 %v719, 31
        %v819 = vpop.permute.xlu0 %818
        %820 = vrot.lane.b32.xlu0 %v721, 31
        %v821 = vpop.permute.xlu0 %820
        %822 = vrot.lane.b32.xlu0 %v720, 31
        %v823 = vpop.permute.xlu0 %822
        %824 = vrot.lane.b32.xlu0 %v722, 31
        %v825 = vpop.permute.xlu0 %824
        %vm826 = vcmp.lt.s32.totalorder %v736, 31
        %v827 = vsel %vm826, %v819, %v823
        %v828 = vsel %vm826, %v821, %v825
        %v829 = vsel %vm826, %v823, %v819
        %v830 = vsel %vm826, %v825, %v821
        %s831 = scalar_lea.vmem [#allocation2], 6
        %v832 = vld [vmem:[%s831] sm:$0x3]
        %v834 = vlaneseq
        %v835 = vshrl.u32 %v834, 7
        %v836 = vsub.s32 0, %v835
        %v837 = vrot.slane %v832, %v836
        %v838 = vlaneseq
        %v839 = vshrl.u32 %v838, 7
        %v840 = vsub.s32 1, %v839
        %v841 = vrot.slane %v832, %v840
        %v844 = vmul.f32 %v829, %v837
        %v845 = vmul.f32 %v827, %v841
        %v846 = vmul.f32 %v830, %v837
        %v847 = vmul.f32 %v828, %v841
        %848 = vrot.lane.b32.xlu0 %v719, 30
        %v849 = vpop.permute.xlu0 %848
        %850 = vrot.lane.b32.xlu0 %v721, 30
        %v851 = vpop.permute.xlu0 %850
        %852 = vrot.lane.b32.xlu0 %v720, 30
        %v853 = vpop.permute.xlu0 %852
        %854 = vrot.lane.b32.xlu0 %v722, 30
        %v855 = vpop.permute.xlu0 %854
        %vm856 = vcmp.lt.s32.totalorder %v736, 30
        %v857 = vsel %vm856, %v849, %v853
        %v858 = vsel %vm856, %v851, %v855
        %v859 = vsel %vm856, %v853, %v849
        %v860 = vsel %vm856, %v855, %v851
        %s861 = scalar_lea.vmem [#allocation2], 8
        %v862 = vld [vmem:[%s861] sm:$0x3]
        %v864 = vlaneseq
        %v865 = vshrl.u32 %v864, 7
        %v866 = vsub.s32 0, %v865
        %v867 = vrot.slane %v862, %v866
        %v868 = vlaneseq
        %v869 = vshrl.u32 %v868, 7
        %v870 = vsub.s32 1, %v869
        %v871 = vrot.slane %v862, %v870
        %v874 = vmul.f32 %v859, %v867
        %v875 = vmul.f32 %v857, %v871
        %v876 = vmul.f32 %v860, %v867
        %v877 = vmul.f32 %v858, %v871
        %878 = vrot.lane.b32.xlu0 %v719, 18
        %v879 = vpop.permute.xlu0 %878
        %880 = vrot.lane.b32.xlu0 %v721, 18
        %v881 = vpop.permute.xlu0 %880
        %882 = vrot.lane.b32.xlu0 %v720, 18
        %v883 = vpop.permute.xlu0 %882
        %884 = vrot.lane.b32.xlu0 %v722, 18
        %v885 = vpop.permute.xlu0 %884
        %vm886 = vcmp.lt.s32.totalorder %v736, 18
        %v887 = vsel %vm886, %v879, %v883
        %v888 = vsel %vm886, %v881, %v885
        %v889 = vsel %vm886, %v883, %v879
        %v890 = vsel %vm886, %v885, %v881
        %s891 = scalar_lea.vmem [#allocation2], 10
        %v892 = vld [vmem:[%s891] sm:$0x3]
        %v894 = vlaneseq
        %v895 = vshrl.u32 %v894, 7
        %v896 = vsub.s32 0, %v895
        %v897 = vrot.slane %v892, %v896
        %v898 = vlaneseq
        %v899 = vshrl.u32 %v898, 7
        %v900 = vsub.s32 1, %v899
        %v901 = vrot.slane %v892, %v900
        %v904 = vmul.f32 %v889, %v897
        %v905 = vmul.f32 %v887, %v901
        %v906 = vmul.f32 %v890, %v897
        %v907 = vmul.f32 %v888, %v901
        %908 = vrot.lane.b32.xlu0 %v719, 17
        %v909 = vpop.permute.xlu0 %908
        %910 = vrot.lane.b32.xlu0 %v721, 17
        %v911 = vpop.permute.xlu0 %910
        %912 = vrot.lane.b32.xlu0 %v720, 17
        %v913 = vpop.permute.xlu0 %912
        %914 = vrot.lane.b32.xlu0 %v722, 17
        %v915 = vpop.permute.xlu0 %914
        %vm916 = vcmp.lt.s32.totalorder %v736, 17
        %v917 = vsel %vm916, %v909, %v913
        %v918 = vsel %vm916, %v911, %v915
        %v919 = vsel %vm916, %v913, %v909
        %v920 = vsel %vm916, %v915, %v911
        %s921 = scalar_lea.vmem [#allocation2], 12
        %v922 = vld [vmem:[%s921] sm:$0x3]
        %v924 = vlaneseq
        %v925 = vshrl.u32 %v924, 7
        %v926 = vsub.s32 0, %v925
        %v927 = vrot.slane %v922, %v926
        %v928 = vlaneseq
        %v929 = vshrl.u32 %v928, 7
        %v930 = vsub.s32 1, %v929
        %v931 = vrot.slane %v922, %v930
        %v934 = vmul.f32 %v919, %v927
        %v935 = vmul.f32 %v917, %v931
        %v936 = vmul.f32 %v920, %v927
        %v937 = vmul.f32 %v918, %v931
        %938 = vrot.lane.b32.xlu0 %v719, 16
        %v939 = vpop.permute.xlu0 %938
        %940 = vrot.lane.b32.xlu0 %v721, 16
        %v941 = vpop.permute.xlu0 %940
        %942 = vrot.lane.b32.xlu0 %v720, 16
        %v943 = vpop.permute.xlu0 %942
        %944 = vrot.lane.b32.xlu0 %v722, 16
        %v945 = vpop.permute.xlu0 %944
        %vm946 = vcmp.lt.s32.totalorder %v736, 16
        %v947 = vsel %vm946, %v939, %v943
        %v948 = vsel %vm946, %v941, %v945
        %v949 = vsel %vm946, %v943, %v939
        %v950 = vsel %vm946, %v945, %v941
        %s951 = scalar_lea.vmem [#allocation2], 14
        %v952 = vld [vmem:[%s951] sm:$0x3]
        %v954 = vlaneseq
        %v955 = vshrl.u32 %v954, 7
        %v956 = vsub.s32 0, %v955
        %v957 = vrot.slane %v952, %v956
        %v958 = vlaneseq
        %v959 = vshrl.u32 %v958, 7
        %v960 = vsub.s32 1, %v959
        %v961 = vrot.slane %v952, %v960
        %v964 = vmul.f32 %v949, %v957
        %v965 = vmul.f32 %v947, %v961
        %v966 = vmul.f32 %v950, %v957
        %v967 = vmul.f32 %v948, %v961
        %968 = vrot.lane.b32.xlu0 %v719, 15
        %v969 = vpop.permute.xlu0 %968
        %970 = vrot.lane.b32.xlu0 %v721, 15
        %v971 = vpop.permute.xlu0 %970
        %972 = vrot.lane.b32.xlu0 %v720, 15
        %v973 = vpop.permute.xlu0 %972
        %974 = vrot.lane.b32.xlu0 %v722, 15
        %v975 = vpop.permute.xlu0 %974
        %vm976 = vcmp.lt.s32.totalorder %v736, 15
        %v977 = vsel %vm976, %v969, %v973
        %v978 = vsel %vm976, %v971, %v975
        %v979 = vsel %vm976, %v973, %v969
        %v980 = vsel %vm976, %v975, %v971
        %s981 = scalar_lea.vmem [#allocation2], 16
        %v982 = vld [vmem:[%s981] sm:$0x3]
        %v984 = vlaneseq
        %v985 = vshrl.u32 %v984, 7
        %v986 = vsub.s32 0, %v985
        %v987 = vrot.slane %v982, %v986
        %v988 = vlaneseq
        %v989 = vshrl.u32 %v988, 7
        %v990 = vsub.s32 1, %v989
        %v991 = vrot.slane %v982, %v990
        %v994 = vmul.f32 %v979, %v987
        %v995 = vmul.f32 %v977, %v991
        %v996 = vmul.f32 %v980, %v987
        %v997 = vmul.f32 %v978, %v991
        %998 = vrot.lane.b32.xlu0 %v719, 14
        %v999 = vpop.permute.xlu0 %998
        %1000 = vrot.lane.b32.xlu0 %v721, 14
        %v1001 = vpop.permute.xlu0 %1000
        %1002 = vrot.lane.b32.xlu0 %v720, 14
        %v1003 = vpop.permute.xlu0 %1002
        %1004 = vrot.lane.b32.xlu0 %v722, 14
        %v1005 = vpop.permute.xlu0 %1004
        %vm1006 = vcmp.lt.s32.totalorder %v736, 14
        %v1007 = vsel %vm1006, %v999, %v1003
        %v1008 = vsel %vm1006, %v1001, %v1005
        %v1009 = vsel %vm1006, %v1003, %v999
        %v1010 = vsel %vm1006, %v1005, %v1001
        %s1011 = scalar_lea.vmem [#allocation2], 18
        %v1012 = vld [vmem:[%s1011] sm:$0x3]
        %v1014 = vlaneseq
        %v1015 = vshrl.u32 %v1014, 7
        %v1016 = vsub.s32 0, %v1015
        %v1017 = vrot.slane %v1012, %v1016
        %v1018 = vlaneseq
        %v1019 = vshrl.u32 %v1018, 7
        %v1020 = vsub.s32 1, %v1019
        %v1021 = vrot.slane %v1012, %v1020
        %v1024 = vmul.f32 %v1009, %v1017
        %v1025 = vmul.f32 %v1007, %v1021
        %v1026 = vmul.f32 %v1010, %v1017
        %v1027 = vmul.f32 %v1008, %v1021
        %1028 = vrot.lane.b32.xlu0 %v719, 2
        %v1029 = vpop.permute.xlu0 %1028
        %1030 = vrot.lane.b32.xlu0 %v721, 2
        %v1031 = vpop.permute.xlu0 %1030
        %1032 = vrot.lane.b32.xlu0 %v720, 2
        %v1033 = vpop.permute.xlu0 %1032
        %1034 = vrot.lane.b32.xlu0 %v722, 2
        %v1035 = vpop.permute.xlu0 %1034
        %vm1036 = vcmp.lt.s32.totalorder %v736, 2
        %v1037 = vsel %vm1036, %v1029, %v1033
        %v1038 = vsel %vm1036, %v1031, %v1035
        %v1039 = vsel %vm1036, %v1033, %v1029
        %v1040 = vsel %vm1036, %v1035, %v1031
        %s1041 = scalar_lea.vmem [#allocation2], 20
        %v1042 = vld [vmem:[%s1041] sm:$0x3]
        %v1044 = vlaneseq
        %v1045 = vshrl.u32 %v1044, 7
        %v1046 = vsub.s32 0, %v1045
        %v1047 = vrot.slane %v1042, %v1046
        %v1048 = vlaneseq
        %v1049 = vshrl.u32 %v1048, 7
        %v1050 = vsub.s32 1, %v1049
        %v1051 = vrot.slane %v1042, %v1050
        %v1054 = vmul.f32 %v1039, %v1047
        %v1055 = vmul.f32 %v1037, %v1051
        %v1056 = vmul.f32 %v1040, %v1047
        %v1057 = vmul.f32 %v1038, %v1051
        %1058 = vrot.lane.b32.xlu0 %v719, 1
        %v1059 = vpop.permute.xlu0 %1058
        %1060 = vrot.lane.b32.xlu0 %v721, 1
        %v1061 = vpop.permute.xlu0 %1060
        %1062 = vrot.lane.b32.xlu0 %v720, 1
        %v1063 = vpop.permute.xlu0 %1062
        %1064 = vrot.lane.b32.xlu0 %v722, 1
        %v1065 = vpop.permute.xlu0 %1064
        %vm1066 = vcmp.lt.s32.totalorder %v736, 1
        %v1067 = vsel %vm1066, %v1059, %v1063
        %v1068 = vsel %vm1066, %v1061, %v1065
        %v1069 = vsel %vm1066, %v1063, %v1059
        %v1070 = vsel %vm1066, %v1065, %v1061
        %s1071 = scalar_lea.vmem [#allocation2], 22
        %v1072 = vld [vmem:[%s1071] sm:$0x3]
        %v1074 = vlaneseq
        %v1075 = vshrl.u32 %v1074, 7
        %v1076 = vsub.s32 0, %v1075
        %v1077 = vrot.slane %v1072, %v1076
        %v1078 = vlaneseq
        %v1079 = vshrl.u32 %v1078, 7
        %v1080 = vsub.s32 1, %v1079
        %v1081 = vrot.slane %v1072, %v1080
        %v1084 = vmul.f32 %v1069, %v1077
        %v1085 = vmul.f32 %v1067, %v1081
        %v1086 = vmul.f32 %v1070, %v1077
        %v1087 = vmul.f32 %v1068, %v1081
        %s1088 = scalar_lea.vmem [#allocation2], 24
        %v1089 = vld [vmem:[%s1088] sm:$0x3]
        %v1091 = vlaneseq
        %v1092 = vshrl.u32 %v1091, 7
        %v1093 = vsub.s32 0, %v1092
        %v1094 = vrot.slane %v1089, %v1093
        %v1095 = vlaneseq
        %v1096 = vshrl.u32 %v1095, 7
        %v1097 = vsub.s32 1, %v1096
        %v1098 = vrot.slane %v1089, %v1097
        %v1101 = vmul.f32 %v719, %v1094
        %v1102 = vmul.f32 %v720, %v1098
        %v1103 = vmul.f32 %v721, %v1094
        %v1104 = vmul.f32 %v722, %v1098
        %1105 = vrot.lane.b32.xlu0 %v719, 127
        %v1106 = vpop.permute.xlu0 %1105
        %1107 = vrot.lane.b32.xlu0 %v721, 127
        %v1108 = vpop.permute.xlu0 %1107
        %1109 = vrot.lane.b32.xlu0 %v720, 127
        %v1110 = vpop.permute.xlu0 %1109
        %1111 = vrot.lane.b32.xlu0 %v722, 127
        %v1112 = vpop.permute.xlu0 %1111
        %vm1113 = vcmp.lt.s32.totalorder %v736, 127
        %v1114 = vsel %vm1113, %v1106, %v1110
        %v1115 = vsel %vm1113, %v1108, %v1112
        %v1116 = vsel %vm1113, %v1110, %v1106
        %v1117 = vsel %vm1113, %v1112, %v1108
        %s1118 = scalar_lea.vmem [#allocation2], 26
        %v1119 = vld [vmem:[%s1118] sm:$0x3]
        %v1121 = vlaneseq
        %v1122 = vshrl.u32 %v1121, 7
        %v1123 = vsub.s32 0, %v1122
        %v1124 = vrot.slane %v1119, %v1123
        %v1125 = vlaneseq
        %v1126 = vshrl.u32 %v1125, 7
        %v1127 = vsub.s32 1, %v1126
        %v1128 = vrot.slane %v1119, %v1127
        %v1131 = vmul.f32 %v1114, %v1124
        %v1132 = vmul.f32 %v1116, %v1128
        %v1133 = vmul.f32 %v1115, %v1124
        %v1134 = vmul.f32 %v1117, %v1128
        %1135 = vrot.lane.b32.xlu0 %v719, 126
        %v1136 = vpop.permute.xlu0 %1135
        %1137 = vrot.lane.b32.xlu0 %v721, 126
        %v1138 = vpop.permute.xlu0 %1137
        %1139 = vrot.lane.b32.xlu0 %v720, 126
        %v1140 = vpop.permute.xlu0 %1139
        %1141 = vrot.lane.b32.xlu0 %v722, 126
        %v1142 = vpop.permute.xlu0 %1141
        %vm1143 = vcmp.lt.s32.totalorder %v736, 126
        %v1144 = vsel %vm1143, %v1136, %v1140
        %v1145 = vsel %vm1143, %v1138, %v1142
        %v1146 = vsel %vm1143, %v1140, %v1136
        %v1147 = vsel %vm1143, %v1142, %v1138
        %s1148 = scalar_lea.vmem [#allocation2], 28
        %v1149 = vld [vmem:[%s1148] sm:$0x3]
        %v1151 = vlaneseq
        %v1152 = vshrl.u32 %v1151, 7
        %v1153 = vsub.s32 0, %v1152
        %v1154 = vrot.slane %v1149, %v1153
        %v1155 = vlaneseq
        %v1156 = vshrl.u32 %v1155, 7
        %v1157 = vsub.s32 1, %v1156
        %v1158 = vrot.slane %v1149, %v1157
        %v1161 = vmul.f32 %v1144, %v1154
        %v1162 = vmul.f32 %v1146, %v1158
        %v1163 = vmul.f32 %v1145, %v1154
        %v1164 = vmul.f32 %v1147, %v1158
        %1165 = vrot.lane.b32.xlu0 %v719, 114
        %v1166 = vpop.permute.xlu0 %1165
        %1167 = vrot.lane.b32.xlu0 %v721, 114
        %v1168 = vpop.permute.xlu0 %1167
        %1169 = vrot.lane.b32.xlu0 %v720, 114
        %v1170 = vpop.permute.xlu0 %1169
        %1171 = vrot.lane.b32.xlu0 %v722, 114
        %v1172 = vpop.permute.xlu0 %1171
        %vm1173 = vcmp.lt.s32.totalorder %v736, 114
        %v1174 = vsel %vm1173, %v1166, %v1170
        %v1175 = vsel %vm1173, %v1168, %v1172
        %v1176 = vsel %vm1173, %v1170, %v1166
        %v1177 = vsel %vm1173, %v1172, %v1168
        %s1178 = scalar_lea.vmem [#allocation2], 30
        %v1179 = vld [vmem:[%s1178] sm:$0x3]
        %v1181 = vlaneseq
        %v1182 = vshrl.u32 %v1181, 7
        %v1183 = vsub.s32 0, %v1182
        %v1184 = vrot.slane %v1179, %v1183
        %v1185 = vlaneseq
        %v1186 = vshrl.u32 %v1185, 7
        %v1187 = vsub.s32 1, %v1186
        %v1188 = vrot.slane %v1179, %v1187
        %v1191 = vmul.f32 %v1174, %v1184
        %v1192 = vmul.f32 %v1176, %v1188
        %v1193 = vmul.f32 %v1175, %v1184
        %v1194 = vmul.f32 %v1177, %v1188
        %1195 = vrot.lane.b32.xlu0 %v719, 113
        %v1196 = vpop.permute.xlu0 %1195
        %1197 = vrot.lane.b32.xlu0 %v721, 113
        %v1198 = vpop.permute.xlu0 %1197
        %1199 = vrot.lane.b32.xlu0 %v720, 113
        %v1200 = vpop.permute.xlu0 %1199
        %1201 = vrot.lane.b32.xlu0 %v722, 113
        %v1202 = vpop.permute.xlu0 %1201
        %vm1203 = vcmp.lt.s32.totalorder %v736, 113
        %v1204 = vsel %vm1203, %v1196, %v1200
        %v1205 = vsel %vm1203, %v1198, %v1202
        %v1206 = vsel %vm1203, %v1200, %v1196
        %v1207 = vsel %vm1203, %v1202, %v1198
        %s1208 = scalar_lea.vmem [#allocation2], 32
        %v1209 = vld [vmem:[%s1208] sm:$0x3]
        %v1211 = vlaneseq
        %v1212 = vshrl.u32 %v1211, 7
        %v1213 = vsub.s32 0, %v1212
        %v1214 = vrot.slane %v1209, %v1213
        %v1215 = vlaneseq
        %v1216 = vshrl.u32 %v1215, 7
        %v1217 = vsub.s32 1, %v1216
        %v1218 = vrot.slane %v1209, %v1217
        %v1221 = vmul.f32 %v1204, %v1214
        %v1222 = vmul.f32 %v1206, %v1218
        %v1223 = vmul.f32 %v1205, %v1214
        %v1224 = vmul.f32 %v1207, %v1218
        %1225 = vrot.lane.b32.xlu0 %v719, 112
        %v1226 = vpop.permute.xlu0 %1225
        %1227 = vrot.lane.b32.xlu0 %v721, 112
        %v1228 = vpop.permute.xlu0 %1227
        %1229 = vrot.lane.b32.xlu0 %v720, 112
        %v1230 = vpop.permute.xlu0 %1229
        %1231 = vrot.lane.b32.xlu0 %v722, 112
        %v1232 = vpop.permute.xlu0 %1231
        %vm1233 = vcmp.lt.s32.totalorder %v736, 112
        %v1234 = vsel %vm1233, %v1226, %v1230
        %v1235 = vsel %vm1233, %v1228, %v1232
        %v1236 = vsel %vm1233, %v1230, %v1226
        %v1237 = vsel %vm1233, %v1232, %v1228
        %s1238 = scalar_lea.vmem [#allocation2], 34
        %v1239 = vld [vmem:[%s1238] sm:$0x3]
        %v1241 = vlaneseq
        %v1242 = vshrl.u32 %v1241, 7
        %v1243 = vsub.s32 0, %v1242
        %v1244 = vrot.slane %v1239, %v1243
        %v1245 = vlaneseq
        %v1246 = vshrl.u32 %v1245, 7
        %v1247 = vsub.s32 1, %v1246
        %v1248 = vrot.slane %v1239, %v1247
        %v1251 = vmul.f32 %v1234, %v1244
        %v1252 = vmul.f32 %v1236, %v1248
        %v1253 = vmul.f32 %v1235, %v1244
        %v1254 = vmul.f32 %v1237, %v1248
        %1255 = vrot.lane.b32.xlu0 %v719, 111
        %v1256 = vpop.permute.xlu0 %1255
        %1257 = vrot.lane.b32.xlu0 %v721, 111
        %v1258 = vpop.permute.xlu0 %1257
        %1259 = vrot.lane.b32.xlu0 %v720, 111
        %v1260 = vpop.permute.xlu0 %1259
        %1261 = vrot.lane.b32.xlu0 %v722, 111
        %v1262 = vpop.permute.xlu0 %1261
        %vm1263 = vcmp.lt.s32.totalorder %v736, 111
        %v1264 = vsel %vm1263, %v1256, %v1260
        %v1265 = vsel %vm1263, %v1258, %v1262
        %v1266 = vsel %vm1263, %v1260, %v1256
        %v1267 = vsel %vm1263, %v1262, %v1258
        %s1268 = scalar_lea.vmem [#allocation2], 36
        %v1269 = vld [vmem:[%s1268] sm:$0x3]
        %v1271 = vlaneseq
        %v1272 = vshrl.u32 %v1271, 7
        %v1273 = vsub.s32 0, %v1272
        %v1274 = vrot.slane %v1269, %v1273
        %v1275 = vlaneseq
        %v1276 = vshrl.u32 %v1275, 7
        %v1277 = vsub.s32 1, %v1276
        %v1278 = vrot.slane %v1269, %v1277
        %v1281 = vmul.f32 %v1264, %v1274
        %v1282 = vmul.f32 %v1266, %v1278
        %v1283 = vmul.f32 %v1265, %v1274
        %v1284 = vmul.f32 %v1267, %v1278
        %1285 = vrot.lane.b32.xlu0 %v719, 110
        %v1286 = vpop.permute.xlu0 %1285
        %1287 = vrot.lane.b32.xlu0 %v721, 110
        %v1288 = vpop.permute.xlu0 %1287
        %1289 = vrot.lane.b32.xlu0 %v720, 110
        %v1290 = vpop.permute.xlu0 %1289
        %1291 = vrot.lane.b32.xlu0 %v722, 110
        %v1292 = vpop.permute.xlu0 %1291
        %vm1293 = vcmp.lt.s32.totalorder %v736, 110
        %v1294 = vsel %vm1293, %v1286, %v1290
        %v1295 = vsel %vm1293, %v1288, %v1292
        %v1296 = vsel %vm1293, %v1290, %v1286
        %v1297 = vsel %vm1293, %v1292, %v1288
        %s1298 = scalar_lea.vmem [#allocation2], 38
        %v1299 = vld [vmem:[%s1298] sm:$0x3]
        %v1301 = vlaneseq
        %v1302 = vshrl.u32 %v1301, 7
        %v1303 = vsub.s32 0, %v1302
        %v1304 = vrot.slane %v1299, %v1303
        %v1305 = vlaneseq
        %v1306 = vshrl.u32 %v1305, 7
        %v1307 = vsub.s32 1, %v1306
        %v1308 = vrot.slane %v1299, %v1307
        %v1311 = vmul.f32 %v1294, %v1304
        %v1312 = vmul.f32 %v1296, %v1308
        %v1313 = vmul.f32 %v1295, %v1304
        %v1314 = vmul.f32 %v1297, %v1308
        %1315 = vrot.lane.b32.xlu0 %v719, 98
        %v1316 = vpop.permute.xlu0 %1315
        %1317 = vrot.lane.b32.xlu0 %v721, 98
        %v1318 = vpop.permute.xlu0 %1317
        %1319 = vrot.lane.b32.xlu0 %v720, 98
        %v1320 = vpop.permute.xlu0 %1319
        %1321 = vrot.lane.b32.xlu0 %v722, 98
        %v1322 = vpop.permute.xlu0 %1321
        %vm1323 = vcmp.lt.s32.totalorder %v736, 98
        %v1324 = vsel %vm1323, %v1316, %v1320
        %v1325 = vsel %vm1323, %v1318, %v1322
        %v1326 = vsel %vm1323, %v1320, %v1316
        %v1327 = vsel %vm1323, %v1322, %v1318
        %s1328 = scalar_lea.vmem [#allocation2], 40
        %v1329 = vld [vmem:[%s1328] sm:$0x3]
        %v1331 = vlaneseq
        %v1332 = vshrl.u32 %v1331, 7
        %v1333 = vsub.s32 0, %v1332
        %v1334 = vrot.slane %v1329, %v1333
        %v1335 = vlaneseq
        %v1336 = vshrl.u32 %v1335, 7
        %v1337 = vsub.s32 1, %v1336
        %v1338 = vrot.slane %v1329, %v1337
        %v1341 = vmul.f32 %v1324, %v1334
        %v1342 = vmul.f32 %v1326, %v1338
        %v1343 = vmul.f32 %v1325, %v1334
        %v1344 = vmul.f32 %v1327, %v1338
        %1345 = vrot.lane.b32.xlu0 %v719, 97
        %v1346 = vpop.permute.xlu0 %1345
        %1347 = vrot.lane.b32.xlu0 %v721, 97
        %v1348 = vpop.permute.xlu0 %1347
        %1349 = vrot.lane.b32.xlu0 %v720, 97
        %v1350 = vpop.permute.xlu0 %1349
        %1351 = vrot.lane.b32.xlu0 %v722, 97
        %v1352 = vpop.permute.xlu0 %1351
        %vm1353 = vcmp.lt.s32.totalorder %v736, 97
        %v1354 = vsel %vm1353, %v1346, %v1350
        %v1355 = vsel %vm1353, %v1348, %v1352
        %v1356 = vsel %vm1353, %v1350, %v1346
        %v1357 = vsel %vm1353, %v1352, %v1348
        %s1358 = scalar_lea.vmem [#allocation2], 42
        %v1359 = vld [vmem:[%s1358] sm:$0x3]
        %v1361 = vlaneseq
        %v1362 = vshrl.u32 %v1361, 7
        %v1363 = vsub.s32 0, %v1362
        %v1364 = vrot.slane %v1359, %v1363
        %v1365 = vlaneseq
        %v1366 = vshrl.u32 %v1365, 7
        %v1367 = vsub.s32 1, %v1366
        %v1368 = vrot.slane %v1359, %v1367
        %v1371 = vmul.f32 %v1354, %v1364
        %v1372 = vmul.f32 %v1356, %v1368
        %v1373 = vmul.f32 %v1355, %v1364
        %v1374 = vmul.f32 %v1357, %v1368
        %1375 = vrot.lane.b32.xlu0 %v719, 96
        %v1376 = vpop.permute.xlu0 %1375
        %1377 = vrot.lane.b32.xlu0 %v721, 96
        %v1378 = vpop.permute.xlu0 %1377
        %1379 = vrot.lane.b32.xlu0 %v720, 96
        %v1380 = vpop.permute.xlu0 %1379
        %1381 = vrot.lane.b32.xlu0 %v722, 96
        %v1382 = vpop.permute.xlu0 %1381
        %vm1383 = vcmp.lt.s32.totalorder %v736, 96
        %v1384 = vsel %vm1383, %v1376, %v1380
        %v1385 = vsel %vm1383, %v1378, %v1382
        %v1386 = vsel %vm1383, %v1380, %v1376
        %v1387 = vsel %vm1383, %v1382, %v1378
        %s1388 = scalar_lea.vmem [#allocation2], 44
        %v1389 = vld [vmem:[%s1388] sm:$0x3]
        %v1391 = vlaneseq
        %v1392 = vshrl.u32 %v1391, 7
        %v1393 = vsub.s32 0, %v1392
        %v1394 = vrot.slane %v1389, %v1393
        %v1395 = vlaneseq
        %v1396 = vshrl.u32 %v1395, 7
        %v1397 = vsub.s32 1, %v1396
        %v1398 = vrot.slane %v1389, %v1397
        %v1401 = vmul.f32 %v1384, %v1394
        %v1402 = vmul.f32 %v1386, %v1398
        %v1403 = vmul.f32 %v1385, %v1394
        %v1404 = vmul.f32 %v1387, %v1398
        %1405 = vrot.lane.b32.xlu0 %v719, 95
        %v1406 = vpop.permute.xlu0 %1405
        %1407 = vrot.lane.b32.xlu0 %v721, 95
        %v1408 = vpop.permute.xlu0 %1407
        %1409 = vrot.lane.b32.xlu0 %v720, 95
        %v1410 = vpop.permute.xlu0 %1409
        %1411 = vrot.lane.b32.xlu0 %v722, 95
        %v1412 = vpop.permute.xlu0 %1411
        %vm1413 = vcmp.lt.s32.totalorder %v736, 95
        %v1414 = vsel %vm1413, %v1406, %v1410
        %v1415 = vsel %vm1413, %v1408, %v1412
        %v1416 = vsel %vm1413, %v1410, %v1406
        %v1417 = vsel %vm1413, %v1412, %v1408
        %s1418 = scalar_lea.vmem [#allocation2], 46
        %v1419 = vld [vmem:[%s1418] sm:$0x3]
        %v1421 = vlaneseq
        %v1422 = vshrl.u32 %v1421, 7
        %v1423 = vsub.s32 0, %v1422
        %v1424 = vrot.slane %v1419, %v1423
        %v1425 = vlaneseq
        %v1426 = vshrl.u32 %v1425, 7
        %v1427 = vsub.s32 1, %v1426
        %v1428 = vrot.slane %v1419, %v1427
        %v1431 = vmul.f32 %v1414, %v1424
        %v1432 = vmul.f32 %v1416, %v1428
        %v1433 = vmul.f32 %v1415, %v1424
        %v1434 = vmul.f32 %v1417, %v1428
        %1435 = vrot.lane.b32.xlu0 %v719, 94
        %v1436 = vpop.permute.xlu0 %1435
        %1437 = vrot.lane.b32.xlu0 %v721, 94
        %v1438 = vpop.permute.xlu0 %1437
        %1439 = vrot.lane.b32.xlu0 %v720, 94
        %v1440 = vpop.permute.xlu0 %1439
        %1441 = vrot.lane.b32.xlu0 %v722, 94
        %v1442 = vpop.permute.xlu0 %1441
        %vm1443 = vcmp.lt.s32.totalorder %v736, 94
        %v1444 = vsel %vm1443, %v1436, %v1440
        %v1445 = vsel %vm1443, %v1438, %v1442
        %v1446 = vsel %vm1443, %v1440, %v1436
        %v1447 = vsel %vm1443, %v1442, %v1438
        %s1448 = scalar_lea.vmem [#allocation2], 48
        %v1449 = vld [vmem:[%s1448] sm:$0x3]
        %v1451 = vlaneseq
        %v1452 = vshrl.u32 %v1451, 7
        %v1453 = vsub.s32 0, %v1452
        %v1454 = vrot.slane %v1449, %v1453
        %v1455 = vlaneseq
        %v1456 = vshrl.u32 %v1455, 7
        %v1457 = vsub.s32 1, %v1456
        %v1458 = vrot.slane %v1449, %v1457
        %v1461 = vmul.f32 %v1444, %v1454
        %v1462 = vmul.f32 %v1446, %v1458
        %v1463 = vmul.f32 %v1445, %v1454
        %v1464 = vmul.f32 %v1447, %v1458
        %v1465 = vld [vmem:[#allocation7] sm:$0xff]
        %v1466 = vld [vmem:[#allocation7 + $0x8] sm:$0xff]
        %v1467 = vld [vmem:[#allocation7 + $0x10] sm:$0xff]
        %v1468 = vld [vmem:[#allocation7 + $0x18] sm:$0xff]
        %v1469 = vld [vmem:[#allocation7 + $0x20] sm:$0xff]
        %v1470 = vld [vmem:[#allocation7 + $0x28] sm:$0xff]
        %v1471 = vld [vmem:[#allocation7 + $0x30] sm:$0xff]
        %v1472 = vld [vmem:[#allocation7 + $0x38] sm:$0xff]
        %v1473 = vld [vmem:[%s6] sm:$0xff]
        %v1474 = vld [vmem:[%s6 + $0x8] sm:$0xff]
        %1476 = vset.pattern.permute.xlu0 0
        %1477 = vperm.xlu0 %1476, %v1473
        %v1478 = vpop.permute.xlu0 %1477
        %1481 = vset.pattern.permute.xlu0 0
        %1482 = vperm.xlu0 %1481, %v1474
        %v1483 = vpop.permute.xlu0 %1482
        %vm1485 = vcmask 130048
        %v1487 = vsel %vm1485, %v1468, 0
        %v1490 = vsel %vm1485, %v1472, 0
        %1492 = vmatprep.subr.mxu0 %v755
        %1493 = vmatpush1.msra.mxu0 %v754
        %1494 = vmatprep.subr.mxu0 %v757
        %1495 = vmatpush1.msra.mxu0 %v756
        %1496 = vmatprep.subr.mxu0 %v785
        %1497 = vmatpush1.msra.mxu0 %v784
        %1498 = vmatprep.subr.mxu0 %v787
        %1499 = vmatpush1.msra.mxu0 %v786
        %1500 = vmatprep.subr.mxu0 %v815
        %1501 = vmatpush1.msra.mxu0 %v814
        %1502 = vmatprep.subr.mxu0 %v817
        %1503 = vmatpush1.msra.mxu0 %v816
        %1504 = vmatprep.subr.mxu0 %v845
        %1505 = vmatpush1.msra.mxu0 %v844
        %1506 = vmatprep.subr.mxu0 %v847
        %1507 = vmatpush1.msra.mxu0 %v846
        %1508 = vmatprep.subr.mxu0 %v875
        %1509 = vmatpush1.msra.mxu0 %v874
        %1510 = vmatprep.subr.mxu0 %v877
        %1511 = vmatpush1.msra.mxu0 %v876
        %1512 = vmatprep.subr.mxu0 %v905
        %1513 = vmatpush1.msra.mxu0 %v904
        %1514 = vmatprep.subr.mxu0 %v907
        %1515 = vmatpush1.msra.mxu0 %v906
        %1516 = vmatprep.subr.mxu0 %v935
        %1517 = vmatpush1.msra.mxu0 %v934
        %1518 = vmatprep.subr.mxu0 %v937
        %1519 = vmatpush1.msra.mxu0 %v936
        %1520 = vmatprep.subr.mxu0 %v965
        %1521 = vmatpush1.msra.mxu0 %v964
        %1522 = vmatprep.subr.mxu0 %v967
        %1523 = vmatpush1.msra.mxu0 %v966
        %1524 = vmatprep.subr.mxu0 %v995
        %1525 = vmatpush1.msra.mxu0 %v994
        %1526 = vmatprep.subr.mxu0 %v997
        %1527 = vmatpush1.msra.mxu0 %v996
        %1528 = vmatprep.subr.mxu0 %v1025
        %1529 = vmatpush1.msra.mxu0 %v1024
        %1530 = vmatprep.subr.mxu0 %v1027
        %1531 = vmatpush1.msra.mxu0 %v1026
        %1532 = vmatprep.subr.mxu0 %v1055
        %1533 = vmatpush1.msra.mxu0 %v1054
        %1534 = vmatprep.subr.mxu0 %v1057
        %1535 = vmatpush1.msra.mxu0 %v1056
        %1536 = vmatprep.subr.mxu0 %v1085
        %1537 = vmatpush1.msra.mxu0 %v1084
        %1538 = vmatprep.subr.mxu0 %v1087
        %1539 = vmatpush1.msra.mxu0 %v1086
        %1540 = vmatprep.subr.mxu0 %v1102
        %1541 = vmatpush1.msra.mxu0 %v1101
        %1542 = vmatprep.subr.mxu0 %v1104
        %1543 = vmatpush1.msra.mxu0 %v1103
        %1544 = vmatprep.subr.mxu0 %v1132
        %1545 = vmatpush1.msra.mxu0 %v1131
        %1546 = vmatprep.subr.mxu0 %v1134
        %1547 = vmatpush1.msra.mxu0 %v1133
        %1548 = vmatprep.subr.mxu0 %v1162
        %1549 = vmatpush1.msra.mxu0 %v1161
        %1550 = vmatprep.subr.mxu0 %v1164
        %1551 = vmatpush1.msra.mxu0 %v1163
        %1552 = vmatprep.subr.mxu0 %v1192
        %1553 = vmatpush1.msra.mxu0 %v1191
        %1554 = vmatprep.subr.mxu0 %v1194
        %1555 = vmatpush1.msra.mxu0 %v1193
        %1556 = vmatprep.mubr.f32.mxu0 %v1466
        %1557 = vmatmul.mubr.f32.gmra.mrb[0].mxu0 %v1465
        %v1558 = vpop.f32.mrb[0].mxu0
        %v1559 = vadd.f32 %v1478, %v1558
        %v1560 = vpop.f32.mrb[0].mxu0
        %v1561 = vadd.f32 %v1478, %v1560
        %1562 = vmatprep.mubr.f32.mxu0 %v1470
        %1563 = vmatmul.mubr.f32.gmra.mrb[0].mxu0 %v1469
        %v1564 = vpop.f32.mrb[0].mxu0
        %v1565 = vadd.f32 %v1483, %v1564
        %v1566 = vpop.f32.mrb[0].mxu0
        %v1567 = vadd.f32 %v1483, %v1566
        %1568 = vdwg.mxu0
        %1569 = vmatprep.subr.mxu0 %v1222
        %1570 = vmatpush1.msra.mxu0 %v1221
        %1571 = vmatprep.subr.mxu0 %v1224
        %1572 = vmatpush1.msra.mxu0 %v1223
        %1573 = vmatprep.subr.mxu0 %v1252
        %1574 = vmatpush1.msra.mxu0 %v1251
        %1575 = vmatprep.subr.mxu0 %v1254
        %1576 = vmatpush1.msra.mxu0 %v1253
        %1577 = vmatprep.subr.mxu0 %v1282
        %1578 = vmatpush1.msra.mxu0 %v1281
        %1579 = vmatprep.subr.mxu0 %v1284
        %1580 = vmatpush1.msra.mxu0 %v1283
        %1581 = vmatprep.subr.mxu0 %v1312
        %1582 = vmatpush1.msra.mxu0 %v1311
        %1583 = vmatprep.subr.mxu0 %v1314
        %1584 = vmatpush1.msra.mxu0 %v1313
        %1585 = vmatprep.subr.mxu0 %v1342
        %1586 = vmatpush1.msra.mxu0 %v1341
        %1587 = vmatprep.subr.mxu0 %v1344
        %1588 = vmatpush1.msra.mxu0 %v1343
        %1589 = vmatprep.subr.mxu0 %v1372
        %1590 = vmatpush1.msra.mxu0 %v1371
        %1591 = vmatprep.subr.mxu0 %v1374
        %1592 = vmatpush1.msra.mxu0 %v1373
        %1593 = vmatprep.subr.mxu0 %v1402
        %1594 = vmatpush1.msra.mxu0 %v1401
        %1595 = vmatprep.subr.mxu0 %v1404
        %1596 = vmatpush1.msra.mxu0 %v1403
        %1597 = vmatprep.subr.mxu0 %v1432
        %1598 = vmatpush1.msra.mxu0 %v1431
        %1599 = vmatprep.subr.mxu0 %v1434
        %1600 = vmatpush1.msra.mxu0 %v1433
        %1601 = vmatprep.subr.mxu0 %v1462
        %1602 = vmatpush1.msra.mxu0 %v1461
        %1603 = vmatprep.subr.mxu0 %v1464
        %1604 = vmatpush1.msra.mxu0 %v1463
        %1605 = vmatprep.subr.mxu0 0.0
        %1606 = vmatpush1.msra.mxu0 0.0
        %1607 = vmatprep.subr.mxu0 0.0
        %1608 = vmatpush1.msra.mxu0 0.0
        %1609 = vmatprep.subr.mxu0 0.0
        %1610 = vmatpush1.msra.mxu0 0.0
        %1611 = vmatprep.subr.mxu0 0.0
        %1612 = vmatpush1.msra.mxu0 0.0
        %1613 = vmatprep.subr.mxu0 0.0
        %1614 = vmatpush1.msra.mxu0 0.0
        %1615 = vmatprep.subr.mxu0 0.0
        %1616 = vmatpush1.msra.mxu0 0.0
        %1617 = vmatprep.subr.mxu0 0.0
        %1618 = vmatpush1.msra.mxu0 0.0
        %1619 = vmatprep.subr.mxu0 0.0
        %1620 = vmatpush1.msra.mxu0 0.0
        %1621 = vmatprep.subr.mxu0 0.0
        %1622 = vmatpush1.msra.mxu0 0.0
        %1623 = vmatprep.subr.mxu0 0.0
        %1624 = vmatpush1.msra.mxu0 0.0
        %1625 = vmatprep.subr.mxu0 0.0
        %1626 = vmatpush1.msra.mxu0 0.0
        %1627 = vmatprep.subr.mxu0 0.0
        %1628 = vmatpush1.msra.mxu0 0.0
        %1629 = vmatprep.subr.mxu0 0.0
        %1630 = vmatpush1.msra.mxu0 0.0
        %1631 = vmatprep.subr.mxu0 0.0
        %1632 = vmatpush1.msra.mxu0 0.0
        %1633 = vmatprep.mubr.f32.mxu0 %v1487
        %1634 = vmatmul.mubr.f32.gmra.mrb[0].mxu0 %v1467
        %v1635 = vpop.f32.mrb[0].mxu0
        %v1636 = vadd.f32 %v1559, %v1635
        %v1637 = vpop.f32.mrb[0].mxu0
        %v1638 = vadd.f32 %v1561, %v1637
        %1639 = vmatprep.mubr.f32.mxu0 %v1490
        %1640 = vmatmul.mubr.f32.gmra.mrb[0].mxu0 %v1471
        %v1641 = vpop.f32.mrb[0].mxu0
        %v1642 = vadd.f32 %v1565, %v1641
        %v1643 = vpop.f32.mrb[0].mxu0
        %v1644 = vadd.f32 %v1567, %v1643
        %1645 = vdwg.mxu0
        %v1646 = vmax.f32 %v1636, 0.0
        %v1647 = vmax.f32 %v1638, 0.0
        %v1648 = vmax.f32 %v1642, 0.0
        %v1649 = vmax.f32 %v1644, 0.0
        %1650 = vrot.lane.b32.xlu0 %v723, 34
        %v1651 = vpop.permute.xlu0 %1650
        %1652 = vrot.lane.b32.xlu0 %v725, 34
        %v1653 = vpop.permute.xlu0 %1652
        %1654 = vrot.lane.b32.xlu0 %v724, 34
        %v1655 = vpop.permute.xlu0 %1654
        %1656 = vrot.lane.b32.xlu0 %v726, 34
        %v1657 = vpop.permute.xlu0 %1656
        %v1658 = vsel %vm737, %v1651, %v1655
        %v1659 = vsel %vm737, %v1653, %v1657
        %v1660 = vsel %vm737, %v1655, %v1651
        %v1661 = vsel %vm737, %v1657, %v1653
        %v1662 = vmul.f32 %v1660, %v747
        %v1663 = vmul.f32 %v1658, %v751
        %v1664 = vmul.f32 %v1661, %v747
        %v1665 = vmul.f32 %v1659, %v751
        %1666 = vrot.lane.b32.xlu0 %v723, 33
        %v1667 = vpop.permute.xlu0 %1666
        %1668 = vrot.lane.b32.xlu0 %v725, 33
        %v1669 = vpop.permute.xlu0 %1668
        %1670 = vrot.lane.b32.xlu0 %v724, 33
        %v1671 = vpop.permute.xlu0 %1670
        %1672 = vrot.lane.b32.xlu0 %v726, 33
        %v1673 = vpop.permute.xlu0 %1672
        %v1674 = vsel %vm766, %v1667, %v1671
        %v1675 = vsel %vm766, %v1669, %v1673
        %v1676 = vsel %vm766, %v1671, %v1667
        %v1677 = vsel %vm766, %v1673, %v1669
        %v1678 = vmul.f32 %v1676, %v777
        %v1679 = vmul.f32 %v1674, %v781
        %v1680 = vmul.f32 %v1677, %v777
        %v1681 = vmul.f32 %v1675, %v781
        %1682 = vrot.lane.b32.xlu0 %v723, 32
        %v1683 = vpop.permute.xlu0 %1682
        %1684 = vrot.lane.b32.xlu0 %v725, 32
        %v1685 = vpop.permute.xlu0 %1684
        %1686 = vrot.lane.b32.xlu0 %v724, 32
        %v1687 = vpop.permute.xlu0 %1686
        %1688 = vrot.lane.b32.xlu0 %v726, 32
        %v1689 = vpop.permute.xlu0 %1688
        %v1690 = vsel %vm796, %v1683, %v1687
        %v1691 = vsel %vm796, %v1685, %v1689
        %v1692 = vsel %vm796, %v1687, %v1683
        %v1693 = vsel %vm796, %v1689, %v1685
        %v1694 = vmul.f32 %v1692, %v807
        %v1695 = vmul.f32 %v1690, %v811
        %v1696 = vmul.f32 %v1693, %v807
        %v1697 = vmul.f32 %v1691, %v811
        %1698 = vrot.lane.b32.xlu0 %v723, 31
        %v1699 = vpop.permute.xlu0 %1698
        %1700 = vrot.lane.b32.xlu0 %v725, 31
        %v1701 = vpop.permute.xlu0 %1700
        %1702 = vrot.lane.b32.xlu0 %v724, 31
        %v1703 = vpop.permute.xlu0 %1702
        %1704 = vrot.lane.b32.xlu0 %v726, 31
        %v1705 = vpop.permute.xlu0 %1704
        %v1706 = vsel %vm826, %v1699, %v1703
        %v1707 = vsel %vm826, %v1701, %v1705
        %v1708 = vsel %vm826, %v1703, %v1699
        %v1709 = vsel %vm826, %v1705, %v1701
        %v1710 = vmul.f32 %v1708, %v837
        %v1711 = vmul.f32 %v1706, %v841
        %v1712 = vmul.f32 %v1709, %v837
        %v1713 = vmul.f32 %v1707, %v841
        %1714 = vrot.lane.b32.xlu0 %v723, 30
        %v1715 = vpop.permute.xlu0 %1714
        %1716 = vrot.lane.b32.xlu0 %v725, 30
        %v1717 = vpop.permute.xlu0 %1716
        %1718 = vrot.lane.b32.xlu0 %v724, 30
        %v1719 = vpop.permute.xlu0 %1718
        %1720 = vrot.lane.b32.xlu0 %v726, 30
        %v1721 = vpop.permute.xlu0 %1720
        %v1722 = vsel %vm856, %v1715, %v1719
        %v1723 = vsel %vm856, %v1717, %v1721
        %v1724 = vsel %vm856, %v1719, %v1715
        %v1725 = vsel %vm856, %v1721, %v1717
        %v1726 = vmul.f32 %v1724, %v867
        %v1727 = vmul.f32 %v1722, %v871
        %v1728 = vmul.f32 %v1725, %v867
        %v1729 = vmul.f32 %v1723, %v871
        %1730 = vrot.lane.b32.xlu0 %v723, 18
        %v1731 = vpop.permute.xlu0 %1730
        %1732 = vrot.lane.b32.xlu0 %v725, 18
        %v1733 = vpop.permute.xlu0 %1732
        %1734 = vrot.lane.b32.xlu0 %v724, 18
        %v1735 = vpop.permute.xlu0 %1734
        %1736 = vrot.lane.b32.xlu0 %v726, 18
        %v1737 = vpop.permute.xlu0 %1736
        %v1738 = vsel %vm886, %v1731, %v1735
        %v1739 = vsel %vm886, %v1733, %v1737
        %v1740 = vsel %vm886, %v1735, %v1731
        %v1741 = vsel %vm886, %v1737, %v1733
        %v1742 = vmul.f32 %v1740, %v897
        %v1743 = vmul.f32 %v1738, %v901
        %v1744 = vmul.f32 %v1741, %v897
        %v1745 = vmul.f32 %v1739, %v901
        %1746 = vrot.lane.b32.xlu0 %v723, 17
        %v1747 = vpop.permute.xlu0 %1746
        %1748 = vrot.lane.b32.xlu0 %v725, 17
        %v1749 = vpop.permute.xlu0 %1748
        %1750 = vrot.lane.b32.xlu0 %v724, 17
        %v1751 = vpop.permute.xlu0 %1750
        %1752 = vrot.lane.b32.xlu0 %v726, 17
        %v1753 = vpop.permute.xlu0 %1752
        %v1754 = vsel %vm916, %v1747, %v1751
        %v1755 = vsel %vm916, %v1749, %v1753
        %v1756 = vsel %vm916, %v1751, %v1747
        %v1757 = vsel %vm916, %v1753, %v1749
        %v1758 = vmul.f32 %v1756, %v927
        %v1759 = vmul.f32 %v1754, %v931
        %v1760 = vmul.f32 %v1757, %v927
        %v1761 = vmul.f32 %v1755, %v931
        %1762 = vrot.lane.b32.xlu0 %v723, 16
        %v1763 = vpop.permute.xlu0 %1762
        %1764 = vrot.lane.b32.xlu0 %v725, 16
        %v1765 = vpop.permute.xlu0 %1764
        %1766 = vrot.lane.b32.xlu0 %v724, 16
        %v1767 = vpop.permute.xlu0 %1766
        %1768 = vrot.lane.b32.xlu0 %v726, 16
        %v1769 = vpop.permute.xlu0 %1768
        %v1770 = vsel %vm946, %v1763, %v1767
        %v1771 = vsel %vm946, %v1765, %v1769
        %v1772 = vsel %vm946, %v1767, %v1763
        %v1773 = vsel %vm946, %v1769, %v1765
        %v1774 = vmul.f32 %v1772, %v957
        %v1775 = vmul.f32 %v1770, %v961
        %v1776 = vmul.f32 %v1773, %v957
        %v1777 = vmul.f32 %v1771, %v961
        %1778 = vrot.lane.b32.xlu0 %v723, 15
        %v1779 = vpop.permute.xlu0 %1778
        %1780 = vrot.lane.b32.xlu0 %v725, 15
        %v1781 = vpop.permute.xlu0 %1780
        %1782 = vrot.lane.b32.xlu0 %v724, 15
        %v1783 = vpop.permute.xlu0 %1782
        %1784 = vrot.lane.b32.xlu0 %v726, 15
        %v1785 = vpop.permute.xlu0 %1784
        %v1786 = vsel %vm976, %v1779, %v1783
        %v1787 = vsel %vm976, %v1781, %v1785
        %v1788 = vsel %vm976, %v1783, %v1779
        %v1789 = vsel %vm976, %v1785, %v1781
        %v1790 = vmul.f32 %v1788, %v987
        %v1791 = vmul.f32 %v1786, %v991
        %v1792 = vmul.f32 %v1789, %v987
        %v1793 = vmul.f32 %v1787, %v991
        %1794 = vrot.lane.b32.xlu0 %v723, 14
        %v1795 = vpop.permute.xlu0 %1794
        %1796 = vrot.lane.b32.xlu0 %v725, 14
        %v1797 = vpop.permute.xlu0 %1796
        %1798 = vrot.lane.b32.xlu0 %v724, 14
        %v1799 = vpop.permute.xlu0 %1798
        %1800 = vrot.lane.b32.xlu0 %v726, 14
        %v1801 = vpop.permute.xlu0 %1800
        %v1802 = vsel %vm1006, %v1795, %v1799
        %v1803 = vsel %vm1006, %v1797, %v1801
        %v1804 = vsel %vm1006, %v1799, %v1795
        %v1805 = vsel %vm1006, %v1801, %v1797
        %v1806 = vmul.f32 %v1804, %v1017
        %v1807 = vmul.f32 %v1802, %v1021
        %v1808 = vmul.f32 %v1805, %v1017
        %v1809 = vmul.f32 %v1803, %v1021
        %1810 = vrot.lane.b32.xlu0 %v723, 2
        %v1811 = vpop.permute.xlu0 %1810
        %1812 = vrot.lane.b32.xlu0 %v725, 2
        %v1813 = vpop.permute.xlu0 %1812
        %1814 = vrot.lane.b32.xlu0 %v724, 2
        %v1815 = vpop.permute.xlu0 %1814
        %1816 = vrot.lane.b32.xlu0 %v726, 2
        %v1817 = vpop.permute.xlu0 %1816
        %v1818 = vsel %vm1036, %v1811, %v1815
        %v1819 = vsel %vm1036, %v1813, %v1817
        %v1820 = vsel %vm1036, %v1815, %v1811
        %v1821 = vsel %vm1036, %v1817, %v1813
        %v1822 = vmul.f32 %v1820, %v1047
        %v1823 = vmul.f32 %v1818, %v1051
        %v1824 = vmul.f32 %v1821, %v1047
        %v1825 = vmul.f32 %v1819, %v1051
        %1826 = vrot.lane.b32.xlu0 %v723, 1
        %v1827 = vpop.permute.xlu0 %1826
        %1828 = vrot.lane.b32.xlu0 %v725, 1
        %v1829 = vpop.permute.xlu0 %1828
        %1830 = vrot.lane.b32.xlu0 %v724, 1
        %v1831 = vpop.permute.xlu0 %1830
        %1832 = vrot.lane.b32.xlu0 %v726, 1
        %v1833 = vpop.permute.xlu0 %1832
        %v1834 = vsel %vm1066, %v1827, %v1831
        %v1835 = vsel %vm1066, %v1829, %v1833
        %v1836 = vsel %vm1066, %v1831, %v1827
        %v1837 = vsel %vm1066, %v1833, %v1829
        %v1838 = vmul.f32 %v1836, %v1077
        %v1839 = vmul.f32 %v1834, %v1081
        %v1840 = vmul.f32 %v1837, %v1077
        %v1841 = vmul.f32 %v1835, %v1081
        %v1842 = vmul.f32 %v723, %v1094
        %v1843 = vmul.f32 %v724, %v1098
        %v1844 = vmul.f32 %v725, %v1094
        %v1845 = vmul.f32 %v726, %v1098
        %1846 = vrot.lane.b32.xlu0 %v723, 127
        %v1847 = vpop.permute.xlu0 %1846
        %1848 = vrot.lane.b32.xlu0 %v725, 127
        %v1849 = vpop.permute.xlu0 %1848
        %1850 = vrot.lane.b32.xlu0 %v724, 127
        %v1851 = vpop.permute.xlu0 %1850
        %1852 = vrot.lane.b32.xlu0 %v726, 127
        %v1853 = vpop.permute.xlu0 %1852
        %v1854 = vsel %vm1113, %v1847, %v1851
        %v1855 = vsel %vm1113, %v1849, %v1853
        %v1856 = vsel %vm1113, %v1851, %v1847
        %v1857 = vsel %vm1113, %v1853, %v1849
        %v1858 = vmul.f32 %v1854, %v1124
        %v1859 = vmul.f32 %v1856, %v1128
        %v1860 = vmul.f32 %v1855, %v1124
        %v1861 = vmul.f32 %v1857, %v1128
        %1862 = vrot.lane.b32.xlu0 %v723, 126
        %v1863 = vpop.permute.xlu0 %1862
        %1864 = vrot.lane.b32.xlu0 %v725, 126
        %v1865 = vpop.permute.xlu0 %1864
        %1866 = vrot.lane.b32.xlu0 %v724, 126
        %v1867 = vpop.permute.xlu0 %1866
        %1868 = vrot.lane.b32.xlu0 %v726, 126
        %v1869 = vpop.permute.xlu0 %1868
        %v1870 = vsel %vm1143, %v1863, %v1867
        %v1871 = vsel %vm1143, %v1865, %v1869
        %v1872 = vsel %vm1143, %v1867, %v1863
        %v1873 = vsel %vm1143, %v1869, %v1865
        %v1874 = vmul.f32 %v1870, %v1154
        %v1875 = vmul.f32 %v1872, %v1158
        %v1876 = vmul.f32 %v1871, %v1154
        %v1877 = vmul.f32 %v1873, %v1158
        %1878 = vrot.lane.b32.xlu0 %v723, 114
        %v1879 = vpop.permute.xlu0 %1878
        %1880 = vrot.lane.b32.xlu0 %v725, 114
        %v1881 = vpop.permute.xlu0 %1880
        %1882 = vrot.lane.b32.xlu0 %v724, 114
        %v1883 = vpop.permute.xlu0 %1882
        %1884 = vrot.lane.b32.xlu0 %v726, 114
        %v1885 = vpop.permute.xlu0 %1884
        %v1886 = vsel %vm1173, %v1879, %v1883
        %v1887 = vsel %vm1173, %v1881, %v1885
        %v1888 = vsel %vm1173, %v1883, %v1879
        %v1889 = vsel %vm1173, %v1885, %v1881
        %v1890 = vmul.f32 %v1886, %v1184
        %v1891 = vmul.f32 %v1888, %v1188
        %v1892 = vmul.f32 %v1887, %v1184
        %v1893 = vmul.f32 %v1889, %v1188
        %1894 = vrot.lane.b32.xlu0 %v723, 113
        %v1895 = vpop.permute.xlu0 %1894
        %1896 = vrot.lane.b32.xlu0 %v725, 113
        %v1897 = vpop.permute.xlu0 %1896
        %1898 = vrot.lane.b32.xlu0 %v724, 113
        %v1899 = vpop.permute.xlu0 %1898
        %1900 = vrot.lane.b32.xlu0 %v726, 113
        %v1901 = vpop.permute.xlu0 %1900
        %v1902 = vsel %vm1203, %v1895, %v1899
        %v1903 = vsel %vm1203, %v1897, %v1901
        %v1904 = vsel %vm1203, %v1899, %v1895
        %v1905 = vsel %vm1203, %v1901, %v1897
        %v1906 = vmul.f32 %v1902, %v1214
        %v1907 = vmul.f32 %v1904, %v1218
        %v1908 = vmul.f32 %v1903, %v1214
        %v1909 = vmul.f32 %v1905, %v1218
        %1910 = vrot.lane.b32.xlu0 %v723, 112
        %v1911 = vpop.permute.xlu0 %1910
        %1912 = vrot.lane.b32.xlu0 %v725, 112
        %v1913 = vpop.permute.xlu0 %1912
        %1914 = vrot.lane.b32.xlu0 %v724, 112
        %v1915 = vpop.permute.xlu0 %1914
        %1916 = vrot.lane.b32.xlu0 %v726, 112
        %v1917 = vpop.permute.xlu0 %1916
        %v1918 = vsel %vm1233, %v1911, %v1915
        %v1919 = vsel %vm1233, %v1913, %v1917
        %v1920 = vsel %vm1233, %v1915, %v1911
        %v1921 = vsel %vm1233, %v1917, %v1913
        %v1922 = vmul.f32 %v1918, %v1244
        %v1923 = vmul.f32 %v1920, %v1248
        %v1924 = vmul.f32 %v1919, %v1244
        %v1925 = vmul.f32 %v1921, %v1248
        %1926 = vrot.lane.b32.xlu0 %v723, 111
        %v1927 = vpop.permute.xlu0 %1926
        %1928 = vrot.lane.b32.xlu0 %v725, 111
        %v1929 = vpop.permute.xlu0 %1928
        %1930 = vrot.lane.b32.xlu0 %v724, 111
        %v1931 = vpop.permute.xlu0 %1930
        %1932 = vrot.lane.b32.xlu0 %v726, 111
        %v1933 = vpop.permute.xlu0 %1932
        %v1934 = vsel %vm1263, %v1927, %v1931
        %v1935 = vsel %vm1263, %v1929, %v1933
        %v1936 = vsel %vm1263, %v1931, %v1927
        %v1937 = vsel %vm1263, %v1933, %v1929
        %v1938 = vmul.f32 %v1934, %v1274
        %v1939 = vmul.f32 %v1936, %v1278
        %v1940 = vmul.f32 %v1935, %v1274
        %v1941 = vmul.f32 %v1937, %v1278
        %1942 = vrot.lane.b32.xlu0 %v723, 110
        %v1943 = vpop.permute.xlu0 %1942
        %1944 = vrot.lane.b32.xlu0 %v725, 110
        %v1945 = vpop.permute.xlu0 %1944
        %1946 = vrot.lane.b32.xlu0 %v724, 110
        %v1947 = vpop.permute.xlu0 %1946
        %1948 = vrot.lane.b32.xlu0 %v726, 110
        %v1949 = vpop.permute.xlu0 %1948
        %v1950 = vsel %vm1293, %v1943, %v1947
        %v1951 = vsel %vm1293, %v1945, %v1949
        %v1952 = vsel %vm1293, %v1947, %v1943
        %v1953 = vsel %vm1293, %v1949, %v1945
        %v1954 = vmul.f32 %v1950, %v1304
        %v1955 = vmul.f32 %v1952, %v1308
        %v1956 = vmul.f32 %v1951, %v1304
        %v1957 = vmul.f32 %v1953, %v1308
        %1958 = vrot.lane.b32.xlu0 %v723, 98
        %v1959 = vpop.permute.xlu0 %1958
        %1960 = vrot.lane.b32.xlu0 %v725, 98
        %v1961 = vpop.permute.xlu0 %1960
        %1962 = vrot.lane.b32.xlu0 %v724, 98
        %v1963 = vpop.permute.xlu0 %1962
        %1964 = vrot.lane.b32.xlu0 %v726, 98
        %v1965 = vpop.permute.xlu0 %1964
        %v1966 = vsel %vm1323, %v1959, %v1963
        %v1967 = vsel %vm1323, %v1961, %v1965
        %v1968 = vsel %vm1323, %v1963, %v1959
        %v1969 = vsel %vm1323, %v1965, %v1961
        %v1970 = vmul.f32 %v1966, %v1334
        %v1971 = vmul.f32 %v1968, %v1338
        %v1972 = vmul.f32 %v1967, %v1334
        %v1973 = vmul.f32 %v1969, %v1338
        %1974 = vrot.lane.b32.xlu0 %v723, 97
        %v1975 = vpop.permute.xlu0 %1974
        %1976 = vrot.lane.b32.xlu0 %v725, 97
        %v1977 = vpop.permute.xlu0 %1976
        %1978 = vrot.lane.b32.xlu0 %v724, 97
        %v1979 = vpop.permute.xlu0 %1978
        %1980 = vrot.lane.b32.xlu0 %v726, 97
        %v1981 = vpop.permute.xlu0 %1980
        %v1982 = vsel %vm1353, %v1975, %v1979
        %v1983 = vsel %vm1353, %v1977, %v1981
        %v1984 = vsel %vm1353, %v1979, %v1975
        %v1985 = vsel %vm1353, %v1981, %v1977
        %v1986 = vmul.f32 %v1982, %v1364
        %v1987 = vmul.f32 %v1984, %v1368
        %v1988 = vmul.f32 %v1983, %v1364
        %v1989 = vmul.f32 %v1985, %v1368
        %1990 = vrot.lane.b32.xlu0 %v723, 96
        %v1991 = vpop.permute.xlu0 %1990
        %1992 = vrot.lane.b32.xlu0 %v725, 96
        %v1993 = vpop.permute.xlu0 %1992
        %1994 = vrot.lane.b32.xlu0 %v724, 96
        %v1995 = vpop.permute.xlu0 %1994
        %1996 = vrot.lane.b32.xlu0 %v726, 96
        %v1997 = vpop.permute.xlu0 %1996
        %v1998 = vsel %vm1383, %v1991, %v1995
        %v1999 = vsel %vm1383, %v1993, %v1997
        %v2000 = vsel %vm1383, %v1995, %v1991
        %v2001 = vsel %vm1383, %v1997, %v1993
        %v2002 = vmul.f32 %v1998, %v1394
        %v2003 = vmul.f32 %v2000, %v1398
        %v2004 = vmul.f32 %v1999, %v1394
        %v2005 = vmul.f32 %v2001, %v1398
        %2006 = vrot.lane.b32.xlu0 %v723, 95
        %v2007 = vpop.permute.xlu0 %2006
        %2008 = vrot.lane.b32.xlu0 %v725, 95
        %v2009 = vpop.permute.xlu0 %2008
        %2010 = vrot.lane.b32.xlu0 %v724, 95
        %v2011 = vpop.permute.xlu0 %2010
        %2012 = vrot.lane.b32.xlu0 %v726, 95
        %v2013 = vpop.permute.xlu0 %2012
        %v2014 = vsel %vm1413, %v2007, %v2011
        %v2015 = vsel %vm1413, %v2009, %v2013
        %v2016 = vsel %vm1413, %v2011, %v2007
        %v2017 = vsel %vm1413, %v2013, %v2009
        %v2018 = vmul.f32 %v2014, %v1424
        %v2019 = vmul.f32 %v2016, %v1428
        %v2020 = vmul.f32 %v2015, %v1424
        %v2021 = vmul.f32 %v2017, %v1428
        %2022 = vrot.lane.b32.xlu0 %v723, 94
        %v2023 = vpop.permute.xlu0 %2022
        %2024 = vrot.lane.b32.xlu0 %v725, 94
        %v2025 = vpop.permute.xlu0 %2024
        %2026 = vrot.lane.b32.xlu0 %v724, 94
        %v2027 = vpop.permute.xlu0 %2026
        %2028 = vrot.lane.b32.xlu0 %v726, 94
        %v2029 = vpop.permute.xlu0 %2028
        %v2030 = vsel %vm1443, %v2023, %v2027
        %v2031 = vsel %vm1443, %v2025, %v2029
        %v2032 = vsel %vm1443, %v2027, %v2023
        %v2033 = vsel %vm1443, %v2029, %v2025
        %v2034 = vmul.f32 %v2030, %v1454
        %v2035 = vmul.f32 %v2032, %v1458
        %v2036 = vmul.f32 %v2031, %v1454
        %v2037 = vmul.f32 %v2033, %v1458
        %v2038 = vld [vmem:[#allocation8] sm:$0xff]
        %v2039 = vld [vmem:[#allocation8 + $0x8] sm:$0xff]
        %v2040 = vld [vmem:[#allocation8 + $0x10] sm:$0xff]
        %v2041 = vld [vmem:[#allocation8 + $0x18] sm:$0xff]
        %v2042 = vld [vmem:[#allocation8 + $0x20] sm:$0xff]
        %v2043 = vld [vmem:[#allocation8 + $0x28] sm:$0xff]
        %v2044 = vld [vmem:[#allocation8 + $0x30] sm:$0xff]
        %v2045 = vld [vmem:[#allocation8 + $0x38] sm:$0xff]
        %v2046 = vld [vmem:[%s8] sm:$0xff]
        %v2047 = vld [vmem:[%s8 + $0x8] sm:$0xff]
        %2049 = vset.pattern.permute.xlu0 0
        %2050 = vperm.xlu0 %2049, %v2046
        %v2051 = vpop.permute.xlu0 %2050
        %2054 = vset.pattern.permute.xlu0 0
        %2055 = vperm.xlu0 %2054, %v2047
        %v2056 = vpop.permute.xlu0 %2055
        %v2059 = vsel %vm1485, %v2041, 0
        %v2062 = vsel %vm1485, %v2045, 0
        %2064 = vmatprep.subr.mxu0 %v1663
        %2065 = vmatpush1.msra.mxu0 %v1662
        %2066 = vmatprep.subr.mxu0 %v1665
        %2067 = vmatpush1.msra.mxu0 %v1664
        %2068 = vmatprep.subr.mxu0 %v1679
        %2069 = vmatpush1.msra.mxu0 %v1678
        %2070 = vmatprep.subr.mxu0 %v1681
        %2071 = vmatpush1.msra.mxu0 %v1680
        %2072 = vmatprep.subr.mxu0 %v1695
        %2073 = vmatpush1.msra.mxu0 %v1694
        %2074 = vmatprep.subr.mxu0 %v1697
        %2075 = vmatpush1.msra.mxu0 %v1696
        %2076 = vmatprep.subr.mxu0 %v1711
        %2077 = vmatpush1.msra.mxu0 %v1710
        %2078 = vmatprep.subr.mxu0 %v1713
        %2079 = vmatpush1.msra.mxu0 %v1712
        %2080 = vmatprep.subr.mxu0 %v1727
        %2081 = vmatpush1.msra.mxu0 %v1726
        %2082 = vmatprep.subr.mxu0 %v1729
        %2083 = vmatpush1.msra.mxu0 %v1728
        %2084 = vmatprep.subr.mxu0 %v1743
        %2085 = vmatpush1.msra.mxu0 %v1742
        %2086 = vmatprep.subr.mxu0 %v1745
        %2087 = vmatpush1.msra.mxu0 %v1744
        %2088 = vmatprep.subr.mxu0 %v1759
        %2089 = vmatpush1.msra.mxu0 %v1758
        %2090 = vmatprep.subr.mxu0 %v1761
        %2091 = vmatpush1.msra.mxu0 %v1760
        %2092 = vmatprep.subr.mxu0 %v1775
        %2093 = vmatpush1.msra.mxu0 %v1774
        %2094 = vmatprep.subr.mxu0 %v1777
        %2095 = vmatpush1.msra.mxu0 %v1776
        %2096 = vmatprep.subr.mxu0 %v1791
        %2097 = vmatpush1.msra.mxu0 %v1790
        %2098 = vmatprep.subr.mxu0 %v1793
        %2099 = vmatpush1.msra.mxu0 %v1792
        %2100 = vmatprep.subr.mxu0 %v1807
        %2101 = vmatpush1.msra.mxu0 %v1806
        %2102 = vmatprep.subr.mxu0 %v1809
        %2103 = vmatpush1.msra.mxu0 %v1808
        %2104 = vmatprep.subr.mxu0 %v1823
        %2105 = vmatpush1.msra.mxu0 %v1822
        %2106 = vmatprep.subr.mxu0 %v1825
        %2107 = vmatpush1.msra.mxu0 %v1824
        %2108 = vmatprep.subr.mxu0 %v1839
        %2109 = vmatpush1.msra.mxu0 %v1838
        %2110 = vmatprep.subr.mxu0 %v1841
        %2111 = vmatpush1.msra.mxu0 %v1840
        %2112 = vmatprep.subr.mxu0 %v1843
        %2113 = vmatpush1.msra.mxu0 %v1842
        %2114 = vmatprep.subr.mxu0 %v1845
        %2115 = vmatpush1.msra.mxu0 %v1844
        %2116 = vmatprep.subr.mxu0 %v1859
        %2117 = vmatpush1.msra.mxu0 %v1858
        %2118 = vmatprep.subr.mxu0 %v1861
        %2119 = vmatpush1.msra.mxu0 %v1860
        %2120 = vmatprep.subr.mxu0 %v1875
        %2121 = vmatpush1.msra.mxu0 %v1874
        %2122 = vmatprep.subr.mxu0 %v1877
        %2123 = vmatpush1.msra.mxu0 %v1876
        %2124 = vmatprep.subr.mxu0 %v1891
        %2125 = vmatpush1.msra.mxu0 %v1890
        %2126 = vmatprep.subr.mxu0 %v1893
        %2127 = vmatpush1.msra.mxu0 %v1892
        %2128 = vmatprep.mubr.f32.mxu0 %v2039
        %2129 = vmatmul.mubr.f32.gmra.mrb[0].mxu0 %v2038
        %v2130 = vpop.f32.mrb[0].mxu0
        %v2131 = vadd.f32 %v2051, %v2130
        %v2132 = vpop.f32.mrb[0].mxu0
        %v2133 = vadd.f32 %v2051, %v2132
        %2134 = vmatprep.mubr.f32.mxu0 %v2043
        %2135 = vmatmul.mubr.f32.gmra.mrb[0].mxu0 %v2042
        %v2136 = vpop.f32.mrb[0].mxu0
        %v2137 = vadd.f32 %v2056, %v2136
        %v2138 = vpop.f32.mrb[0].mxu0
        %v2139 = vadd.f32 %v2056, %v2138
        %2140 = vdwg.mxu0
        %2141 = vmatprep.subr.mxu0 %v1907
        %2142 = vmatpush1.msra.mxu0 %v1906
        %2143 = vmatprep.subr.mxu0 %v1909
        %2144 = vmatpush1.msra.mxu0 %v1908
        %2145 = vmatprep.subr.mxu0 %v1923
        %2146 = vmatpush1.msra.mxu0 %v1922
        %2147 = vmatprep.subr.mxu0 %v1925
        %2148 = vmatpush1.msra.mxu0 %v1924
        %2149 = vmatprep.subr.mxu0 %v1939
        %2150 = vmatpush1.msra.mxu0 %v1938
        %2151 = vmatprep.subr.mxu0 %v1941
        %2152 = vmatpush1.msra.mxu0 %v1940
        %2153 = vmatprep.subr.mxu0 %v1955
        %2154 = vmatpush1.msra.mxu0 %v1954
        %2155 = vmatprep.subr.mxu0 %v1957
        %2156 = vmatpush1.msra.mxu0 %v1956
        %2157 = vmatprep.subr.mxu0 %v1971
        %2158 = vmatpush1.msra.mxu0 %v1970
        %2159 = vmatprep.subr.mxu0 %v1973
        %2160 = vmatpush1.msra.mxu0 %v1972
        %2161 = vmatprep.subr.mxu0 %v1987
        %2162 = vmatpush1.msra.mxu0 %v1986
        %2163 = vmatprep.subr.mxu0 %v1989
        %2164 = vmatpush1.msra.mxu0 %v1988
        %2165 = vmatprep.subr.mxu0 %v2003
        %2166 = vmatpush1.msra.mxu0 %v2002
        %2167 = vmatprep.subr.mxu0 %v2005
        %2168 = vmatpush1.msra.mxu0 %v2004
        %2169 = vmatprep.subr.mxu0 %v2019
        %2170 = vmatpush1.msra.mxu0 %v2018
        %2171 = vmatprep.subr.mxu0 %v2021
        %2172 = vmatpush1.msra.mxu0 %v2020
        %2173 = vmatprep.subr.mxu0 %v2035
        %2174 = vmatpush1.msra.mxu0 %v2034
        %2175 = vmatprep.subr.mxu0 %v2037
        %2176 = vmatpush1.msra.mxu0 %v2036
        %2177 = vmatprep.subr.mxu0 0.0
        %2178 = vmatpush1.msra.mxu0 0.0
        %2179 = vmatprep.subr.mxu0 0.0
        %2180 = vmatpush1.msra.mxu0 0.0
        %2181 = vmatprep.subr.mxu0 0.0
        %2182 = vmatpush1.msra.mxu0 0.0
        %2183 = vmatprep.subr.mxu0 0.0
        %2184 = vmatpush1.msra.mxu0 0.0
        %2185 = vmatprep.subr.mxu0 0.0
        %2186 = vmatpush1.msra.mxu0 0.0
        %2187 = vmatprep.subr.mxu0 0.0
        %2188 = vmatpush1.msra.mxu0 0.0
        %2189 = vmatprep.subr.mxu0 0.0
        %2190 = vmatpush1.msra.mxu0 0.0
        %2191 = vmatprep.subr.mxu0 0.0
        %2192 = vmatpush1.msra.mxu0 0.0
        %2193 = vmatprep.subr.mxu0 0.0
        %2194 = vmatpush1.msra.mxu0 0.0
        %2195 = vmatprep.subr.mxu0 0.0
        %2196 = vmatpush1.msra.mxu0 0.0
        %2197 = vmatprep.subr.mxu0 0.0
        %2198 = vmatpush1.msra.mxu0 0.0
        %2199 = vmatprep.subr.mxu0 0.0
        %2200 = vmatpush1.msra.mxu0 0.0
        %2201 = vmatprep.subr.mxu0 0.0
        %2202 = vmatpush1.msra.mxu0 0.0
        %2203 = vmatprep.subr.mxu0 0.0
        %2204 = vmatpush1.msra.mxu0 0.0
        %2205 = vmatprep.mubr.f32.mxu0 %v2059
        %2206 = vmatmul.mubr.f32.gmra.mrb[0].mxu0 %v2040
        %v2207 = vpop.f32.mrb[0].mxu0
        %v2208 = vadd.f32 %v2131, %v2207
        %v2209 = vpop.f32.mrb[0].mxu0
        %v2210 = vadd.f32 %v2133, %v2209
        %2211 = vmatprep.mubr.f32.mxu0 %v2062
        %2212 = vmatmul.mubr.f32.gmra.mrb[0].mxu0 %v2044
        %v2213 = vpop.f32.mrb[0].mxu0
        %v2214 = vadd.f32 %v2137, %v2213
        %v2215 = vpop.f32.mrb[0].mxu0
        %v2216 = vadd.f32 %v2139, %v2215
        %2217 = vdwg.mxu0
        %v2218 = vmax.f32 %v2208, 0.0
        %v2219 = vmax.f32 %v2210, 0.0
        %v2220 = vmax.f32 %v2214, 0.0
        %v2221 = vmax.f32 %v2216, 0.0
        %v2222 = vadd.f32 %v1646, %v719
        %v2223 = vadd.f32 %v1647, %v720
        %v2224 = vadd.f32 %v1648, %v721
        %v2225 = vadd.f32 %v1649, %v722
        %v2226 = vadd.f32 %v2218, %v723
        %v2227 = vadd.f32 %v2219, %v724
        %v2228 = vadd.f32 %v2220, %v725
        %v2229 = vadd.f32 %v2221, %v726
        %2230 = vrot.lane.b32.xlu0 %v2222, 17
        %v2231 = vpop.permute.xlu0 %2230
        %2232 = vrot.lane.b32.xlu0 %v2224, 17
        %v2233 = vpop.permute.xlu0 %2232
        %2234 = vrot.lane.b32.xlu0 %v2226, 17
        %v2235 = vpop.permute.xlu0 %2234
        %2236 = vrot.lane.b32.xlu0 %v2228, 17
        %v2237 = vpop.permute.xlu0 %2236
        %2238 = vrot.lane.b32.xlu0 %v2223, 17
        %v2239 = vpop.permute.xlu0 %2238
        %2240 = vrot.lane.b32.xlu0 %v2225, 17
        %v2241 = vpop.permute.xlu0 %2240
        %2242 = vrot.lane.b32.xlu0 %v2227, 17
        %v2243 = vpop.permute.xlu0 %2242
        %2244 = vrot.lane.b32.xlu0 %v2229, 17
        %v2245 = vpop.permute.xlu0 %2244
        %v2246 = vsel %vm916, %v2231, %v2239
        %v2247 = vsel %vm916, %v2233, %v2241
        %v2248 = vsel %vm916, %v2235, %v2243
        %v2249 = vsel %vm916, %v2237, %v2245
        %v2250 = vsel %vm916, %v2239, %v2231
        %v2251 = vsel %vm916, %v2241, %v2233
        %v2252 = vsel %vm916, %v2243, %v2235
        %v2253 = vsel %vm916, %v2245, %v2237
        %v2254 = vld [vmem:[#allocation5] sm:$0x3]
        %v2256 = vlaneseq
        %v2257 = vshrl.u32 %v2256, 7
        %v2258 = vsub.s32 0, %v2257
        %v2259 = vrot.slane %v2254, %v2258
        %v2260 = vlaneseq
        %v2261 = vshrl.u32 %v2260, 7
        %v2262 = vsub.s32 1, %v2261
        %v2263 = vrot.slane %v2254, %v2262
        %v2266 = vmul.f32 %v2250, %v2259
        %v2267 = vmul.f32 %v2246, %v2263
        %v2268 = vmul.f32 %v2251, %v2259
        %v2269 = vmul.f32 %v2247, %v2263
        %v2270 = vmul.f32 %v2252, %v2259
        %v2271 = vmul.f32 %v2248, %v2263
        %v2272 = vmul.f32 %v2253, %v2259
        %v2273 = vmul.f32 %v2249, %v2263
        %2274 = vrot.lane.b32.xlu0 %v2222, 16
        %v2275 = vpop.permute.xlu0 %2274
        %2276 = vrot.lane.b32.xlu0 %v2224, 16
        %v2277 = vpop.permute.xlu0 %2276
        %2278 = vrot.lane.b32.xlu0 %v2226, 16
        %v2279 = vpop.permute.xlu0 %2278
        %2280 = vrot.lane.b32.xlu0 %v2228, 16
        %v2281 = vpop.permute.xlu0 %2280
        %2282 = vrot.lane.b32.xlu0 %v2223, 16
        %v2283 = vpop.permute.xlu0 %2282
        %2284 = vrot.lane.b32.xlu0 %v2225, 16
        %v2285 = vpop.permute.xlu0 %2284
        %2286 = vrot.lane.b32.xlu0 %v2227, 16
        %v2287 = vpop.permute.xlu0 %2286
        %2288 = vrot.lane.b32.xlu0 %v2229, 16
        %v2289 = vpop.permute.xlu0 %2288
        %v2290 = vsel %vm946, %v2275, %v2283
        %v2291 = vsel %vm946, %v2277, %v2285
        %v2292 = vsel %vm946, %v2279, %v2287
        %v2293 = vsel %vm946, %v2281, %v2289
        %v2294 = vsel %vm946, %v2283, %v2275
        %v2295 = vsel %vm946, %v2285, %v2277
        %v2296 = vsel %vm946, %v2287, %v2279
        %v2297 = vsel %vm946, %v2289, %v2281
        %s2298 = scalar_lea.vmem [#allocation5], 2
        %v2299 = vld [vmem:[%s2298] sm:$0x3]
        %v2301 = vlaneseq
        %v2302 = vshrl.u32 %v2301, 7
        %v2303 = vsub.s32 0, %v2302
        %v2304 = vrot.slane %v2299, %v2303
        %v2305 = vlaneseq
        %v2306 = vshrl.u32 %v2305, 7
        %v2307 = vsub.s32 1, %v2306
        %v2308 = vrot.slane %v2299, %v2307
        %v2311 = vmul.f32 %v2294, %v2304
        %v2312 = vmul.f32 %v2290, %v2308
        %v2313 = vmul.f32 %v2295, %v2304
        %v2314 = vmul.f32 %v2291, %v2308
        %v2315 = vmul.f32 %v2296, %v2304
        %v2316 = vmul.f32 %v2292, %v2308
        %v2317 = vmul.f32 %v2297, %v2304
        %v2318 = vmul.f32 %v2293, %v2308
        %2319 = vrot.lane.b32.xlu0 %v2222, 15
        %v2320 = vpop.permute.xlu0 %2319
        %2321 = vrot.lane.b32.xlu0 %v2224, 15
        %v2322 = vpop.permute.xlu0 %2321
        %2323 = vrot.lane.b32.xlu0 %v2226, 15
        %v2324 = vpop.permute.xlu0 %2323
        %2325 = vrot.lane.b32.xlu0 %v2228, 15
        %v2326 = vpop.permute.xlu0 %2325
        %2327 = vrot.lane.b32.xlu0 %v2223, 15
        %v2328 = vpop.permute.xlu0 %2327
        %2329 = vrot.lane.b32.xlu0 %v2225, 15
        %v2330 = vpop.permute.xlu0 %2329
        %2331 = vrot.lane.b32.xlu0 %v2227, 15
        %v2332 = vpop.permute.xlu0 %2331
        %2333 = vrot.lane.b32.xlu0 %v2229, 15
        %v2334 = vpop.permute.xlu0 %2333
        %v2335 = vsel %vm976, %v2320, %v2328
        %v2336 = vsel %vm976, %v2322, %v2330
        %v2337 = vsel %vm976, %v2324, %v2332
        %v2338 = vsel %vm976, %v2326, %v2334
        %v2339 = vsel %vm976, %v2328, %v2320
        %v2340 = vsel %vm976, %v2330, %v2322
        %v2341 = vsel %vm976, %v2332, %v2324
        %v2342 = vsel %vm976, %v2334, %v2326
        %s2343 = scalar_lea.vmem [#allocation5], 4
        %v2344 = vld [vmem:[%s2343] sm:$0x3]
        %v2346 = vlaneseq
        %v2347 = vshrl.u32 %v2346, 7
        %v2348 = vsub.s32 0, %v2347
        %v2349 = vrot.slane %v2344, %v2348
        %v2350 = vlaneseq
        %v2351 = vshrl.u32 %v2350, 7
        %v2352 = vsub.s32 1, %v2351
        %v2353 = vrot.slane %v2344, %v2352
        %v2356 = vmul.f32 %v2339, %v2349
        %v2357 = vmul.f32 %v2335, %v2353
        %v2358 = vmul.f32 %v2340, %v2349
        %v2359 = vmul.f32 %v2336, %v2353
        %v2360 = vmul.f32 %v2341, %v2349
        %v2361 = vmul.f32 %v2337, %v2353
        %v2362 = vmul.f32 %v2342, %v2349
        %v2363 = vmul.f32 %v2338, %v2353
        %2364 = vrot.lane.b32.xlu0 %v2222, 1
        %v2365 = vpop.permute.xlu0 %2364
        %2366 = vrot.lane.b32.xlu0 %v2224, 1
        %v2367 = vpop.permute.xlu0 %2366
        %2368 = vrot.lane.b32.xlu0 %v2226, 1
        %v2369 = vpop.permute.xlu0 %2368
        %2370 = vrot.lane.b32.xlu0 %v2228, 1
        %v2371 = vpop.permute.xlu0 %2370
        %2372 = vrot.lane.b32.xlu0 %v2223, 1
        %v2373 = vpop.permute.xlu0 %2372
        %2374 = vrot.lane.b32.xlu0 %v2225, 1
        %v2375 = vpop.permute.xlu0 %2374
        %2376 = vrot.lane.b32.xlu0 %v2227, 1
        %v2377 = vpop.permute.xlu0 %2376
        %2378 = vrot.lane.b32.xlu0 %v2229, 1
        %v2379 = vpop.permute.xlu0 %2378
        %v2380 = vsel %vm1066, %v2365, %v2373
        %v2381 = vsel %vm1066, %v2367, %v2375
        %v2382 = vsel %vm1066, %v2369, %v2377
        %v2383 = vsel %vm1066, %v2371, %v2379
        %v2384 = vsel %vm1066, %v2373, %v2365
        %v2385 = vsel %vm1066, %v2375, %v2367
        %v2386 = vsel %vm1066, %v2377, %v2369
        %v2387 = vsel %vm1066, %v2379, %v2371
        %s2388 = scalar_lea.vmem [#allocation5], 6
        %v2389 = vld [vmem:[%s2388] sm:$0x3]
        %v2391 = vlaneseq
        %v2392 = vshrl.u32 %v2391, 7
        %v2393 = vsub.s32 0, %v2392
        %v2394 = vrot.slane %v2389, %v2393
        %v2395 = vlaneseq
        %v2396 = vshrl.u32 %v2395, 7
        %v2397 = vsub.s32 1, %v2396
        %v2398 = vrot.slane %v2389, %v2397
        %v2401 = vmul.f32 %v2384, %v2394
        %v2402 = vmul.f32 %v2380, %v2398
        %v2403 = vmul.f32 %v2385, %v2394
        %v2404 = vmul.f32 %v2381, %v2398
        %v2405 = vmul.f32 %v2386, %v2394
        %v2406 = vmul.f32 %v2382, %v2398
        %v2407 = vmul.f32 %v2387, %v2394
        %v2408 = vmul.f32 %v2383, %v2398
        %s2409 = scalar_lea.vmem [#allocation5], 8
        %v2410 = vld [vmem:[%s2409] sm:$0x3]
        %v2412 = vlaneseq
        %v2413 = vshrl.u32 %v2412, 7
        %v2414 = vsub.s32 0, %v2413
        %v2415 = vrot.slane %v2410, %v2414
        %v2416 = vlaneseq
        %v2417 = vshrl.u32 %v2416, 7
        %v2418 = vsub.s32 1, %v2417
        %v2419 = vrot.slane %v2410, %v2418
        %v2422 = vmul.f32 %v2222, %v2415
        %v2423 = vmul.f32 %v2223, %v2419
        %v2424 = vmul.f32 %v2224, %v2415
        %v2425 = vmul.f32 %v2225, %v2419
        %v2426 = vmul.f32 %v2226, %v2415
        %v2427 = vmul.f32 %v2227, %v2419
        %v2428 = vmul.f32 %v2228, %v2415
        %v2429 = vmul.f32 %v2229, %v2419
        %2430 = vrot.lane.b32.xlu0 %v2222, 127
        %v2431 = vpop.permute.xlu0 %2430
        %2432 = vrot.lane.b32.xlu0 %v2224, 127
        %v2433 = vpop.permute.xlu0 %2432
        %2434 = vrot.lane.b32.xlu0 %v2226, 127
        %v2435 = vpop.permute.xlu0 %2434
        %2436 = vrot.lane.b32.xlu0 %v2228, 127
        %v2437 = vpop.permute.xlu0 %2436
        %2438 = vrot.lane.b32.xlu0 %v2223, 127
        %v2439 = vpop.permute.xlu0 %2438
        %2440 = vrot.lane.b32.xlu0 %v2225, 127
        %v2441 = vpop.permute.xlu0 %2440
        %2442 = vrot.lane.b32.xlu0 %v2227, 127
        %v2443 = vpop.permute.xlu0 %2442
        %2444 = vrot.lane.b32.xlu0 %v2229, 127
        %v2445 = vpop.permute.xlu0 %2444
        %v2446 = vsel %vm1113, %v2431, %v2439
        %v2447 = vsel %vm1113, %v2433, %v2441
        %v2448 = vsel %vm1113, %v2435, %v2443
        %v2449 = vsel %vm1113, %v2437, %v2445
        %v2450 = vsel %vm1113, %v2439, %v2431
        %v2451 = vsel %vm1113, %v2441, %v2433
        %v2452 = vsel %vm1113, %v2443, %v2435
        %v2453 = vsel %vm1113, %v2445, %v2437
        %s2454 = scalar_lea.vmem [#allocation5], 10
        %v2455 = vld [vmem:[%s2454] sm:$0x3]
        %v2457 = vlaneseq
        %v2458 = vshrl.u32 %v2457, 7
        %v2459 = vsub.s32 0, %v2458
        %v2460 = vrot.slane %v2455, %v2459
        %v2461 = vlaneseq
        %v2462 = vshrl.u32 %v2461, 7
        %v2463 = vsub.s32 1, %v2462
        %v2464 = vrot.slane %v2455, %v2463
        %v2467 = vmul.f32 %v2446, %v2460
        %v2468 = vmul.f32 %v2450, %v2464
        %v2469 = vmul.f32 %v2447, %v2460
        %v2470 = vmul.f32 %v2451, %v2464
        %v2471 = vmul.f32 %v2448, %v2460
        %v2472 = vmul.f32 %v2452, %v2464
        %v2473 = vmul.f32 %v2449, %v2460
        %v2474 = vmul.f32 %v2453, %v2464
        %2475 = vrot.lane.b32.xlu0 %v2222, 113
        %v2476 = vpop.permute.xlu0 %2475
        %2477 = vrot.lane.b32.xlu0 %v2224, 113
        %v2478 = vpop.permute.xlu0 %2477
        %2479 = vrot.lane.b32.xlu0 %v2226, 113
        %v2480 = vpop.permute.xlu0 %2479
        %2481 = vrot.lane.b32.xlu0 %v2228, 113
        %v2482 = vpop.permute.xlu0 %2481
        %2483 = vrot.lane.b32.xlu0 %v2223, 113
        %v2484 = vpop.permute.xlu0 %2483
        %2485 = vrot.lane.b32.xlu0 %v2225, 113
        %v2486 = vpop.permute.xlu0 %2485
        %2487 = vrot.lane.b32.xlu0 %v2227, 113
        %v2488 = vpop.permute.xlu0 %2487
        %2489 = vrot.lane.b32.xlu0 %v2229, 113
        %v2490 = vpop.permute.xlu0 %2489
        %v2491 = vsel %vm1203, %v2476, %v2484
        %v2492 = vsel %vm1203, %v2478, %v2486
        %v2493 = vsel %vm1203, %v2480, %v2488
        %v2494 = vsel %vm1203, %v2482, %v2490
        %v2495 = vsel %vm1203, %v2484, %v2476
        %v2496 = vsel %vm1203, %v2486, %v2478
        %v2497 = vsel %vm1203, %v2488, %v2480
        %v2498 = vsel %vm1203, %v2490, %v2482
        %s2499 = scalar_lea.vmem [#allocation5], 12
        %v2500 = vld [vmem:[%s2499] sm:$0x3]
        %v2502 = vlaneseq
        %v2503 = vshrl.u32 %v2502, 7
        %v2504 = vsub.s32 0, %v2503
        %v2505 = vrot.slane %v2500, %v2504
        %v2506 = vlaneseq
        %v2507 = vshrl.u32 %v2506, 7
        %v2508 = vsub.s32 1, %v2507
        %v2509 = vrot.slane %v2500, %v2508
        %v2512 = vmul.f32 %v2491, %v2505
        %v2513 = vmul.f32 %v2495, %v2509
        %v2514 = vmul.f32 %v2492, %v2505
        %v2515 = vmul.f32 %v2496, %v2509
        %v2516 = vmul.f32 %v2493, %v2505
        %v2517 = vmul.f32 %v2497, %v2509
        %v2518 = vmul.f32 %v2494, %v2505
        %v2519 = vmul.f32 %v2498, %v2509
        %2520 = vrot.lane.b32.xlu0 %v2222, 112
        %v2521 = vpop.permute.xlu0 %2520
        %2522 = vrot.lane.b32.xlu0 %v2224, 112
        %v2523 = vpop.permute.xlu0 %2522
        %2524 = vrot.lane.b32.xlu0 %v2226, 112
        %v2525 = vpop.permute.xlu0 %2524
        %2526 = vrot.lane.b32.xlu0 %v2228, 112
        %v2527 = vpop.permute.xlu0 %2526
        %2528 = vrot.lane.b32.xlu0 %v2223, 112
        %v2529 = vpop.permute.xlu0 %2528
        %2530 = vrot.lane.b32.xlu0 %v2225, 112
        %v2531 = vpop.permute.xlu0 %2530
        %2532 = vrot.lane.b32.xlu0 %v2227, 112
        %v2533 = vpop.permute.xlu0 %2532
        %2534 = vrot.lane.b32.xlu0 %v2229, 112
        %v2535 = vpop.permute.xlu0 %2534
        %v2536 = vsel %vm1233, %v2521, %v2529
        %v2537 = vsel %vm1233, %v2523, %v2531
        %v2538 = vsel %vm1233, %v2525, %v2533
        %v2539 = vsel %vm1233, %v2527, %v2535
        %v2540 = vsel %vm1233, %v2529, %v2521
        %v2541 = vsel %vm1233, %v2531, %v2523
        %v2542 = vsel %vm1233, %v2533, %v2525
        %v2543 = vsel %vm1233, %v2535, %v2527
        %s2544 = scalar_lea.vmem [#allocation5], 14
        %v2545 = vld [vmem:[%s2544] sm:$0x3]
        %v2547 = vlaneseq
        %v2548 = vshrl.u32 %v2547, 7
        %v2549 = vsub.s32 0, %v2548
        %v2550 = vrot.slane %v2545, %v2549
        %v2551 = vlaneseq
        %v2552 = vshrl.u32 %v2551, 7
        %v2553 = vsub.s32 1, %v2552
        %v2554 = vrot.slane %v2545, %v2553
        %v2557 = vmul.f32 %v2536, %v2550
        %v2558 = vmul.f32 %v2540, %v2554
        %v2559 = vmul.f32 %v2537, %v2550
        %v2560 = vmul.f32 %v2541, %v2554
        %v2561 = vmul.f32 %v2538, %v2550
        %v2562 = vmul.f32 %v2542, %v2554
        %v2563 = vmul.f32 %v2539, %v2550
        %v2564 = vmul.f32 %v2543, %v2554
        %2565 = vrot.lane.b32.xlu0 %v2222, 111
        %v2566 = vpop.permute.xlu0 %2565
        %2567 = vrot.lane.b32.xlu0 %v2224, 111
        %v2568 = vpop.permute.xlu0 %2567
        %2569 = vrot.lane.b32.xlu0 %v2226, 111
        %v2570 = vpop.permute.xlu0 %2569
        %2571 = vrot.lane.b32.xlu0 %v2228, 111
        %v2572 = vpop.permute.xlu0 %2571
        %2573 = vrot.lane.b32.xlu0 %v2223, 111
        %v2574 = vpop.permute.xlu0 %2573
        %2575 = vrot.lane.b32.xlu0 %v2225, 111
        %v2576 = vpop.permute.xlu0 %2575
        %2577 = vrot.lane.b32.xlu0 %v2227, 111
        %v2578 = vpop.permute.xlu0 %2577
        %2579 = vrot.lane.b32.xlu0 %v2229, 111
        %v2580 = vpop.permute.xlu0 %2579
        %v2581 = vsel %vm1263, %v2566, %v2574
        %v2582 = vsel %vm1263, %v2568, %v2576
        %v2583 = vsel %vm1263, %v2570, %v2578
        %v2584 = vsel %vm1263, %v2572, %v2580
        %v2585 = vsel %vm1263, %v2574, %v2566
        %v2586 = vsel %vm1263, %v2576, %v2568
        %v2587 = vsel %vm1263, %v2578, %v2570
        %v2588 = vsel %vm1263, %v2580, %v2572
        %s2589 = scalar_lea.vmem [#allocation5], 16
        %v2590 = vld [vmem:[%s2589] sm:$0x3]
        %v2592 = vlaneseq
        %v2593 = vshrl.u32 %v2592, 7
        %v2594 = vsub.s32 0, %v2593
        %v2595 = vrot.slane %v2590, %v2594
        %v2596 = vlaneseq
        %v2597 = vshrl.u32 %v2596, 7
        %v2598 = vsub.s32 1, %v2597
        %v2599 = vrot.slane %v2590, %v2598
        %v2602 = vmul.f32 %v2581, %v2595
        %v2603 = vmul.f32 %v2585, %v2599
        %v2604 = vmul.f32 %v2582, %v2595
        %v2605 = vmul.f32 %v2586, %v2599
        %v2606 = vmul.f32 %v2583, %v2595
        %v2607 = vmul.f32 %v2587, %v2599
        %v2608 = vmul.f32 %v2584, %v2595
        %v2609 = vmul.f32 %v2588, %v2599
        %v2610 = vld [vmem:[#allocation10] sm:$0xff]
        %v2611 = vld [vmem:[#allocation10 + $0x8] sm:$0xff]
        %v2612 = vld [vmem:[#allocation10 + $0x10] sm:$0xff]
        %v2613 = vld [vmem:[#allocation10 + $0x18] sm:$0xff]
        %v2614 = vld [vmem:[#allocation10 + $0x20] sm:$0xff]
        %v2615 = vld [vmem:[#allocation10 + $0x28] sm:$0xff]
        %v2616 = vld [vmem:[#allocation10 + $0x30] sm:$0xff]
        %v2617 = vld [vmem:[#allocation10 + $0x38] sm:$0xff]
        %v2618 = vld [vmem:[#allocation10 + $0x40] sm:$0xff]
        %v2619 = vld [vmem:[#allocation10 + $0x48] sm:$0xff]
        %v2620 = vld [vmem:[#allocation10 + $0x50] sm:$0xff]
        %v2621 = vld [vmem:[#allocation10 + $0x58] sm:$0xff]
        %v2622 = vld [vmem:[%s10] sm:$0xff]
        %v2623 = vld [vmem:[%s10 + $0x8] sm:$0xff]
        %v2624 = vld [vmem:[%s10 + $0x10] sm:$0xff]
        %v2625 = vld [vmem:[%s10 + $0x18] sm:$0xff]
        %2627 = vset.pattern.permute.xlu0 0
        %2628 = vperm.xlu0 %2627, %v2622
        %v2629 = vpop.permute.xlu0 %2628
        %2632 = vset.pattern.permute.xlu0 0
        %2633 = vperm.xlu0 %2632, %v2623
        %v2634 = vpop.permute.xlu0 %2633
        %2637 = vset.pattern.permute.xlu0 0
        %2638 = vperm.xlu0 %2637, %v2624
        %v2639 = vpop.permute.xlu0 %2638
        %2642 = vset.pattern.permute.xlu0 0
        %2643 = vperm.xlu0 %2642, %v2625
        %v2644 = vpop.permute.xlu0 %2643
        %v2647 = vsel %vm617, %v2612, 0
        %v2650 = vsel %vm617, %v2615, 0
        %v2653 = vsel %vm617, %v2618, 0
        %v2656 = vsel %vm617, %v2621, 0
        %2658 = vmatprep.subr.mxu0 %v2267
        %2659 = vmatpush1.msra.mxu0 %v2266
        %2660 = vmatprep.subr.mxu0 %v2269
        %2661 = vmatpush1.msra.mxu0 %v2268
        %2662 = vmatprep.subr.mxu0 %v2271
        %2663 = vmatpush1.msra.mxu0 %v2270
        %2664 = vmatprep.subr.mxu0 %v2273
        %2665 = vmatpush1.msra.mxu0 %v2272
        %2666 = vmatprep.subr.mxu0 %v2312
        %2667 = vmatpush1.msra.mxu0 %v2311
        %2668 = vmatprep.subr.mxu0 %v2314
        %2669 = vmatpush1.msra.mxu0 %v2313
        %2670 = vmatprep.subr.mxu0 %v2316
        %2671 = vmatpush1.msra.mxu0 %v2315
        %2672 = vmatprep.subr.mxu0 %v2318
        %2673 = vmatpush1.msra.mxu0 %v2317
        %2674 = vmatprep.subr.mxu0 %v2357
        %2675 = vmatpush1.msra.mxu0 %v2356
        %2676 = vmatprep.subr.mxu0 %v2359
        %2677 = vmatpush1.msra.mxu0 %v2358
        %2678 = vmatprep.subr.mxu0 %v2361
        %2679 = vmatpush1.msra.mxu0 %v2360
        %2680 = vmatprep.subr.mxu0 %v2363
        %2681 = vmatpush1.msra.mxu0 %v2362
        %2682 = vmatprep.subr.mxu0 %v2402
        %2683 = vmatpush1.msra.mxu0 %v2401
        %2684 = vmatprep.subr.mxu0 %v2404
        %2685 = vmatpush1.msra.mxu0 %v2403
        %2686 = vmatprep.subr.mxu0 %v2406
        %2687 = vmatpush1.msra.mxu0 %v2405
        %2688 = vmatprep.subr.mxu0 %v2408
        %2689 = vmatpush1.msra.mxu0 %v2407
        %2690 = vmatprep.subr.mxu0 %v2423
        %2691 = vmatpush1.msra.mxu0 %v2422
        %2692 = vmatprep.subr.mxu0 %v2425
        %2693 = vmatpush1.msra.mxu0 %v2424
        %2694 = vmatprep.subr.mxu0 %v2427
        %2695 = vmatpush1.msra.mxu0 %v2426
        %2696 = vmatprep.subr.mxu0 %v2429
        %2697 = vmatpush1.msra.mxu0 %v2428
        %2698 = vmatprep.subr.mxu0 %v2468
        %2699 = vmatpush1.msra.mxu0 %v2467
        %2700 = vmatprep.subr.mxu0 %v2470
        %2701 = vmatpush1.msra.mxu0 %v2469
        %2702 = vmatprep.subr.mxu0 %v2472
        %2703 = vmatpush1.msra.mxu0 %v2471
        %2704 = vmatprep.subr.mxu0 %v2474
        %2705 = vmatpush1.msra.mxu0 %v2473
        %2706 = vmatprep.subr.mxu0 %v2513
        %2707 = vmatpush1.msra.mxu0 %v2512
        %2708 = vmatprep.subr.mxu0 %v2515
        %2709 = vmatpush1.msra.mxu0 %v2514
        %2710 = vmatprep.subr.mxu0 %v2517
        %2711 = vmatpush1.msra.mxu0 %v2516
        %2712 = vmatprep.subr.mxu0 %v2519
        %2713 = vmatpush1.msra.mxu0 %v2518
        %2714 = vmatprep.subr.mxu0 %v2558
        %2715 = vmatpush1.msra.mxu0 %v2557
        %2716 = vmatprep.subr.mxu0 %v2560
        %2717 = vmatpush1.msra.mxu0 %v2559
        %2718 = vmatprep.subr.mxu0 %v2562
        %2719 = vmatpush1.msra.mxu0 %v2561
        %2720 = vmatprep.subr.mxu0 %v2564
        %2721 = vmatpush1.msra.mxu0 %v2563
        %2722 = vmatprep.mubr.f32.mxu0 %v2611
        %2723 = vmatmul.mubr.f32.gmra.mrb[0].mxu0 %v2610
        %v2724 = vpop.f32.mrb[0].mxu0
        %v2725 = vadd.f32 %v2629, %v2724
        %v2726 = vpop.f32.mrb[0].mxu0
        %v2727 = vadd.f32 %v2629, %v2726
        %2728 = vmatprep.mubr.f32.mxu0 %v2614
        %2729 = vmatmul.mubr.f32.gmra.mrb[0].mxu0 %v2613
        %v2730 = vpop.f32.mrb[0].mxu0
        %v2731 = vadd.f32 %v2634, %v2730
        %v2732 = vpop.f32.mrb[0].mxu0
        %v2733 = vadd.f32 %v2634, %v2732
        %2734 = vmatprep.mubr.f32.mxu0 %v2617
        %2735 = vmatmul.mubr.f32.gmra.mrb[0].mxu0 %v2616
        %v2736 = vpop.f32.mrb[0].mxu0
        %v2737 = vadd.f32 %v2639, %v2736
        %v2738 = vpop.f32.mrb[0].mxu0
        %v2739 = vadd.f32 %v2639, %v2738
        %2740 = vmatprep.mubr.f32.mxu0 %v2620
        %2741 = vmatmul.mubr.f32.gmra.mrb[0].mxu0 %v2619
        %v2742 = vpop.f32.mrb[0].mxu0
        %v2743 = vadd.f32 %v2644, %v2742
        %v2744 = vpop.f32.mrb[0].mxu0
        %v2745 = vadd.f32 %v2644, %v2744
        %2746 = vdwg.mxu0
        %2747 = vmatprep.subr.mxu0 %v2603
        %2748 = vmatpush1.msra.mxu0 %v2602
        %2749 = vmatprep.subr.mxu0 %v2605
        %2750 = vmatpush1.msra.mxu0 %v2604
        %2751 = vmatprep.subr.mxu0 %v2607
        %2752 = vmatpush1.msra.mxu0 %v2606
        %2753 = vmatprep.subr.mxu0 %v2609
        %2754 = vmatpush1.msra.mxu0 %v2608
        %2755 = vmatprep.subr.mxu0 0.0
        %2756 = vmatpush1.msra.mxu0 0.0
        %2757 = vmatprep.subr.mxu0 0.0
        %2758 = vmatpush1.msra.mxu0 0.0
        %2759 = vmatprep.subr.mxu0 0.0
        %2760 = vmatpush1.msra.mxu0 0.0
        %2761 = vmatprep.subr.mxu0 0.0
        %2762 = vmatpush1.msra.mxu0 0.0
        %2763 = vmatprep.subr.mxu0 0.0
        %2764 = vmatpush1.msra.mxu0 0.0
        %2765 = vmatprep.subr.mxu0 0.0
        %2766 = vmatpush1.msra.mxu0 0.0
        %2767 = vmatprep.subr.mxu0 0.0
        %2768 = vmatpush1.msra.mxu0 0.0
        %2769 = vmatprep.subr.mxu0 0.0
        %2770 = vmatpush1.msra.mxu0 0.0
        %2771 = vmatprep.subr.mxu0 0.0
        %2772 = vmatpush1.msra.mxu0 0.0
        %2773 = vmatprep.subr.mxu0 0.0
        %2774 = vmatpush1.msra.mxu0 0.0
        %2775 = vmatprep.subr.mxu0 0.0
        %2776 = vmatpush1.msra.mxu0 0.0
        %2777 = vmatprep.subr.mxu0 0.0
        %2778 = vmatpush1.msra.mxu0 0.0
        %2779 = vmatprep.subr.mxu0 0.0
        %2780 = vmatpush1.msra.mxu0 0.0
        %2781 = vmatprep.subr.mxu0 0.0
        %2782 = vmatpush1.msra.mxu0 0.0
        %2783 = vmatprep.subr.mxu0 0.0
        %2784 = vmatpush1.msra.mxu0 0.0
        %2785 = vmatprep.subr.mxu0 0.0
        %2786 = vmatpush1.msra.mxu0 0.0
        %2787 = vmatprep.subr.mxu0 0.0
        %2788 = vmatpush1.msra.mxu0 0.0
        %2789 = vmatprep.subr.mxu0 0.0
        %2790 = vmatpush1.msra.mxu0 0.0
        %2791 = vmatprep.subr.mxu0 0.0
        %2792 = vmatpush1.msra.mxu0 0.0
        %2793 = vmatprep.subr.mxu0 0.0
        %2794 = vmatpush1.msra.mxu0 0.0
        %2795 = vmatprep.subr.mxu0 0.0
        %2796 = vmatpush1.msra.mxu0 0.0
        %2797 = vmatprep.subr.mxu0 0.0
        %2798 = vmatpush1.msra.mxu0 0.0
        %2799 = vmatprep.subr.mxu0 0.0
        %2800 = vmatpush1.msra.mxu0 0.0
        %2801 = vmatprep.subr.mxu0 0.0
        %2802 = vmatpush1.msra.mxu0 0.0
        %2803 = vmatprep.subr.mxu0 0.0
        %2804 = vmatpush1.msra.mxu0 0.0
        %2805 = vmatprep.subr.mxu0 0.0
        %2806 = vmatpush1.msra.mxu0 0.0
        %2807 = vmatprep.subr.mxu0 0.0
        %2808 = vmatpush1.msra.mxu0 0.0
        %2809 = vmatprep.subr.mxu0 0.0
        %2810 = vmatpush1.msra.mxu0 0.0
        %2811 = vmatprep.mubr.f32.mxu0 0.0
        %2812 = vmatmul.mubr.f32.gmra.mrb[0].mxu0 %v2647
        %v2813 = vpop.f32.mrb[0].mxu0
        %v2814 = vadd.f32 %v2725, %v2813
        %v2815 = vpop.f32.mrb[0].mxu0
        %v2816 = vadd.f32 %v2727, %v2815
        %2817 = vmatprep.mubr.f32.mxu0 0.0
        %2818 = vmatmul.mubr.f32.gmra.mrb[0].mxu0 %v2650
        %v2819 = vpop.f32.mrb[0].mxu0
        %v2820 = vadd.f32 %v2731, %v2819
        %v2821 = vpop.f32.mrb[0].mxu0
        %v2822 = vadd.f32 %v2733, %v2821
        %2823 = vmatprep.mubr.f32.mxu0 0.0
        %2824 = vmatmul.mubr.f32.gmra.mrb[0].mxu0 %v2653
        %v2825 = vpop.f32.mrb[0].mxu0
        %v2826 = vadd.f32 %v2737, %v2825
        %v2827 = vpop.f32.mrb[0].mxu0
        %v2828 = vadd.f32 %v2739, %v2827
        %2829 = vmatprep.mubr.f32.mxu0 0.0
        %2830 = vmatmul.mubr.f32.gmra.mrb[0].mxu0 %v2656
        %v2831 = vpop.f32.mrb[0].mxu0
        %v2832 = vadd.f32 %v2743, %v2831
        %v2833 = vpop.f32.mrb[0].mxu0
        %v2834 = vadd.f32 %v2745, %v2833
        %2835 = vdwg.mxu0
        %v2836 = vmax.f32 %v2814, 0.0
        %v2837 = vmax.f32 %v2816, 0.0
        %v2838 = vmax.f32 %v2820, 0.0
        %v2839 = vmax.f32 %v2822, 0.0
        %v2840 = vmax.f32 %v2826, 0.0
        %v2841 = vmax.f32 %v2828, 0.0
        %v2842 = vmax.f32 %v2832, 0.0
        %v2843 = vmax.f32 %v2834, 0.0
        %2844 = vrot.lane.b32.xlu0 %v2218, 17
        %v2845 = vpop.permute.xlu0 %2844
        %2846 = vrot.lane.b32.xlu0 %v2220, 17
        %v2847 = vpop.permute.xlu0 %2846
        %2848 = vrot.lane.b32.xlu0 %v2219, 17
        %v2849 = vpop.permute.xlu0 %2848
        %2850 = vrot.lane.b32.xlu0 %v2221, 17
        %v2851 = vpop.permute.xlu0 %2850
        %v2852 = vsel %vm916, %v2845, %v2849
        %v2853 = vsel %vm916, %v2847, %v2851
        %v2854 = vsel %vm916, %v2849, %v2845
        %v2855 = vsel %vm916, %v2851, %v2847
        %v2856 = vmul.f32 %v2854, %v2259
        %v2857 = vmul.f32 %v2852, %v2263
        %v2858 = vmul.f32 %v2855, %v2259
        %v2859 = vmul.f32 %v2853, %v2263
        %2860 = vrot.lane.b32.xlu0 %v2218, 16
        %v2861 = vpop.permute.xlu0 %2860
        %2862 = vrot.lane.b32.xlu0 %v2220, 16
        %v2863 = vpop.permute.xlu0 %2862
        %2864 = vrot.lane.b32.xlu0 %v2219, 16
        %v2865 = vpop.permute.xlu0 %2864
        %2866 = vrot.lane.b32.xlu0 %v2221, 16
        %v2867 = vpop.permute.xlu0 %2866
        %v2868 = vsel %vm946, %v2861, %v2865
        %v2869 = vsel %vm946, %v2863, %v2867
        %v2870 = vsel %vm946, %v2865, %v2861
        %v2871 = vsel %vm946, %v2867, %v2863
        %v2872 = vmul.f32 %v2870, %v2304
        %v2873 = vmul.f32 %v2868, %v2308
        %v2874 = vmul.f32 %v2871, %v2304
        %v2875 = vmul.f32 %v2869, %v2308
        %2876 = vrot.lane.b32.xlu0 %v2218, 15
        %v2877 = vpop.permute.xlu0 %2876
        %2878 = vrot.lane.b32.xlu0 %v2220, 15
        %v2879 = vpop.permute.xlu0 %2878
        %2880 = vrot.lane.b32.xlu0 %v2219, 15
        %v2881 = vpop.permute.xlu0 %2880
        %2882 = vrot.lane.b32.xlu0 %v2221, 15
        %v2883 = vpop.permute.xlu0 %2882
        %v2884 = vsel %vm976, %v2877, %v2881
        %v2885 = vsel %vm976, %v2879, %v2883
        %v2886 = vsel %vm976, %v2881, %v2877
        %v2887 = vsel %vm976, %v2883, %v2879
        %v2888 = vmul.f32 %v2886, %v2349
        %v2889 = vmul.f32 %v2884, %v2353
        %v2890 = vmul.f32 %v2887, %v2349
        %v2891 = vmul.f32 %v2885, %v2353
        %2892 = vrot.lane.b32.xlu0 %v2218, 1
        %v2893 = vpop.permute.xlu0 %2892
        %2894 = vrot.lane.b32.xlu0 %v2220, 1
        %v2895 = vpop.permute.xlu0 %2894
        %2896 = vrot.lane.b32.xlu0 %v2219, 1
        %v2897 = vpop.permute.xlu0 %2896
        %2898 = vrot.lane.b32.xlu0 %v2221, 1
        %v2899 = vpop.permute.xlu0 %2898
        %v2900 = vsel %vm1066, %v2893, %v2897
        %v2901 = vsel %vm1066, %v2895, %v2899
        %v2902 = vsel %vm1066, %v2897, %v2893
        %v2903 = vsel %vm1066, %v2899, %v2895
        %v2904 = vmul.f32 %v2902, %v2394
        %v2905 = vmul.f32 %v2900, %v2398
        %v2906 = vmul.f32 %v2903, %v2394
        %v2907 = vmul.f32 %v2901, %v2398
        %v2908 = vmul.f32 %v2218, %v2415
        %v2909 = vmul.f32 %v2219, %v2419
        %v2910 = vmul.f32 %v2220, %v2415
        %v2911 = vmul.f32 %v2221, %v2419
        %2912 = vrot.lane.b32.xlu0 %v2218, 127
        %v2913 = vpop.permute.xlu0 %2912
        %2914 = vrot.lane.b32.xlu0 %v2220, 127
        %v2915 = vpop.permute.xlu0 %2914
        %2916 = vrot.lane.b32.xlu0 %v2219, 127
        %v2917 = vpop.permute.xlu0 %2916
        %2918 = vrot.lane.b32.xlu0 %v2221, 127
        %v2919 = vpop.permute.xlu0 %2918
        %v2920 = vsel %vm1113, %v2913, %v2917
        %v2921 = vsel %vm1113, %v2915, %v2919
        %v2922 = vsel %vm1113, %v2917, %v2913
        %v2923 = vsel %vm1113, %v2919, %v2915
        %v2924 = vmul.f32 %v2920, %v2460
        %v2925 = vmul.f32 %v2922, %v2464
        %v2926 = vmul.f32 %v2921, %v2460
        %v2927 = vmul.f32 %v2923, %v2464
        %2928 = vrot.lane.b32.xlu0 %v2218, 113
        %v2929 = vpop.permute.xlu0 %2928
        %2930 = vrot.lane.b32.xlu0 %v2220, 113
        %v2931 = vpop.permute.xlu0 %2930
        %2932 = vrot.lane.b32.xlu0 %v2219, 113
        %v2933 = vpop.permute.xlu0 %2932
        %2934 = vrot.lane.b32.xlu0 %v2221, 113
        %v2935 = vpop.permute.xlu0 %2934
        %v2936 = vsel %vm1203, %v2929, %v2933
        %v2937 = vsel %vm1203, %v2931, %v2935
        %v2938 = vsel %vm1203, %v2933, %v2929
        %v2939 = vsel %vm1203, %v2935, %v2931
        %v2940 = vmul.f32 %v2936, %v2505
        %v2941 = vmul.f32 %v2938, %v2509
        %v2942 = vmul.f32 %v2937, %v2505
        %v2943 = vmul.f32 %v2939, %v2509
        %2944 = vrot.lane.b32.xlu0 %v2218, 112
        %v2945 = vpop.permute.xlu0 %2944
        %2946 = vrot.lane.b32.xlu0 %v2220, 112
        %v2947 = vpop.permute.xlu0 %2946
        %2948 = vrot.lane.b32.xlu0 %v2219, 112
        %v2949 = vpop.permute.xlu0 %2948
        %2950 = vrot.lane.b32.xlu0 %v2221, 112
        %v2951 = vpop.permute.xlu0 %2950
        %v2952 = vsel %vm1233, %v2945, %v2949
        %v2953 = vsel %vm1233, %v2947, %v2951
        %v2954 = vsel %vm1233, %v2949, %v2945
        %v2955 = vsel %vm1233, %v2951, %v2947
        %v2956 = vmul.f32 %v2952, %v2550
        %v2957 = vmul.f32 %v2954, %v2554
        %v2958 = vmul.f32 %v2953, %v2550
        %v2959 = vmul.f32 %v2955, %v2554
        %2960 = vrot.lane.b32.xlu0 %v2218, 111
        %v2961 = vpop.permute.xlu0 %2960
        %2962 = vrot.lane.b32.xlu0 %v2220, 111
        %v2963 = vpop.permute.xlu0 %2962
        %2964 = vrot.lane.b32.xlu0 %v2219, 111
        %v2965 = vpop.permute.xlu0 %2964
        %2966 = vrot.lane.b32.xlu0 %v2221, 111
        %v2967 = vpop.permute.xlu0 %2966
        %v2968 = vsel %vm1263, %v2961, %v2965
        %v2969 = vsel %vm1263, %v2963, %v2967
        %v2970 = vsel %vm1263, %v2965, %v2961
        %v2971 = vsel %vm1263, %v2967, %v2963
        %v2972 = vmul.f32 %v2968, %v2595
        %v2973 = vmul.f32 %v2970, %v2599
        %v2974 = vmul.f32 %v2969, %v2595
        %v2975 = vmul.f32 %v2971, %v2599
        %v2976 = vld [vmem:[#allocation11] sm:$0xff]
        %v2977 = vld [vmem:[#allocation11 + $0x8] sm:$0xff]
        %v2978 = vld [vmem:[#allocation11 + $0x10] sm:$0xff]
        %v2979 = vld [vmem:[#allocation11 + $0x18] sm:$0xff]
        %v2980 = vld [vmem:[%s12] sm:$0xff]
        %v2981 = vld [vmem:[%s12 + $0x8] sm:$0xff]
        %2983 = vset.pattern.permute.xlu0 0
        %2984 = vperm.xlu0 %2983, %v2980
        %v2985 = vpop.permute.xlu0 %2984
        %2988 = vset.pattern.permute.xlu0 0
        %2989 = vperm.xlu0 %2988, %v2981
        %v2990 = vpop.permute.xlu0 %2989
        %v2993 = vsel %vm1485, %v2977, 0
        %v2996 = vsel %vm1485, %v2979, 0
        %2998 = vmatprep.subr.mxu0 %v2857
        %2999 = vmatpush1.msra.mxu0 %v2856
        %3000 = vmatprep.subr.mxu0 %v2859
        %3001 = vmatpush1.msra.mxu0 %v2858
        %3002 = vmatprep.subr.mxu0 %v2873
        %3003 = vmatpush1.msra.mxu0 %v2872
        %3004 = vmatprep.subr.mxu0 %v2875
        %3005 = vmatpush1.msra.mxu0 %v2874
        %3006 = vmatprep.subr.mxu0 %v2889
        %3007 = vmatpush1.msra.mxu0 %v2888
        %3008 = vmatprep.subr.mxu0 %v2891
        %3009 = vmatpush1.msra.mxu0 %v2890
        %3010 = vmatprep.subr.mxu0 %v2905
        %3011 = vmatpush1.msra.mxu0 %v2904
        %3012 = vmatprep.subr.mxu0 %v2907
        %3013 = vmatpush1.msra.mxu0 %v2906
        %3014 = vmatprep.subr.mxu0 %v2909
        %3015 = vmatpush1.msra.mxu0 %v2908
        %3016 = vmatprep.subr.mxu0 %v2911
        %3017 = vmatpush1.msra.mxu0 %v2910
        %3018 = vmatprep.subr.mxu0 %v2925
        %3019 = vmatpush1.msra.mxu0 %v2924
        %3020 = vmatprep.subr.mxu0 %v2927
        %3021 = vmatpush1.msra.mxu0 %v2926
        %3022 = vmatprep.subr.mxu0 %v2941
        %3023 = vmatpush1.msra.mxu0 %v2940
        %3024 = vmatprep.subr.mxu0 %v2943
        %3025 = vmatpush1.msra.mxu0 %v2942
        %3026 = vmatprep.subr.mxu0 %v2957
        %3027 = vmatpush1.msra.mxu0 %v2956
        %3028 = vmatprep.subr.mxu0 %v2959
        %3029 = vmatpush1.msra.mxu0 %v2958
        %3030 = vmatprep.subr.mxu0 %v2973
        %3031 = vmatpush1.msra.mxu0 %v2972
        %3032 = vmatprep.subr.mxu0 %v2975
        %3033 = vmatpush1.msra.mxu0 %v2974
        %3034 = vmatprep.subr.mxu0 0.0
        %3035 = vmatpush1.msra.mxu0 0.0
        %3036 = vmatprep.subr.mxu0 0.0
        %3037 = vmatpush1.msra.mxu0 0.0
        %3038 = vmatprep.subr.mxu0 0.0
        %3039 = vmatpush1.msra.mxu0 0.0
        %3040 = vmatprep.subr.mxu0 0.0
        %3041 = vmatpush1.msra.mxu0 0.0
        %3042 = vmatprep.subr.mxu0 0.0
        %3043 = vmatpush1.msra.mxu0 0.0
        %3044 = vmatprep.subr.mxu0 0.0
        %3045 = vmatpush1.msra.mxu0 0.0
        %3046 = vmatprep.subr.mxu0 0.0
        %3047 = vmatpush1.msra.mxu0 0.0
        %3048 = vmatprep.subr.mxu0 0.0
        %3049 = vmatpush1.msra.mxu0 0.0
        %3050 = vmatprep.subr.mxu0 0.0
        %3051 = vmatpush1.msra.mxu0 0.0
        %3052 = vmatprep.subr.mxu0 0.0
        %3053 = vmatpush1.msra.mxu0 0.0
        %3054 = vmatprep.subr.mxu0 0.0
        %3055 = vmatpush1.msra.mxu0 0.0
        %3056 = vmatprep.subr.mxu0 0.0
        %3057 = vmatpush1.msra.mxu0 0.0
        %3058 = vmatprep.subr.mxu0 0.0
        %3059 = vmatpush1.msra.mxu0 0.0
        %3060 = vmatprep.subr.mxu0 0.0
        %3061 = vmatpush1.msra.mxu0 0.0
        %3062 = vmatprep.mubr.f32.mxu0 %v2993
        %3063 = vmatmul.mubr.f32.gmra.mrb[0].mxu0 %v2976
        %v3064 = vpop.f32.mrb[0].mxu0
        %v3065 = vadd.f32 %v2985, %v3064
        %v3066 = vpop.f32.mrb[0].mxu0
        %v3067 = vadd.f32 %v2985, %v3066
        %3068 = vmatprep.mubr.f32.mxu0 %v2996
        %3069 = vmatmul.mubr.f32.gmra.mrb[0].mxu0 %v2978
        %v3070 = vpop.f32.mrb[0].mxu0
        %v3071 = vadd.f32 %v2990, %v3070
        %v3072 = vpop.f32.mrb[0].mxu0
        %v3073 = vadd.f32 %v2990, %v3072
        %3074 = vdwg.mxu0
        %v3075 = vld [vmem:[%s13] sm:$0xff]
        %v3076 = vld [vmem:[%s13 + $0x8] sm:$0xff]
        %v3077 = vld [vmem:[%s13 + $0x10] sm:$0xff]
        %v3078 = vld [vmem:[%s13 + $0x18] sm:$0xff]
        %v3079 = vld [vmem:[%s14] sm:$0xff]
        %v3080 = vld [vmem:[%s14 + $0x8] sm:$0xff]
        %v3081 = vld [vmem:[%s14 + $0x10] sm:$0xff]
        %v3082 = vld [vmem:[%s14 + $0x18] sm:$0xff]
        %3084 = vset.pattern.permute.xlu0 0
        %3085 = vperm.xlu0 %3084, %v3079
        %v3086 = vpop.permute.xlu0 %3085
        %3089 = vset.pattern.permute.xlu0 0
        %3090 = vperm.xlu0 %3089, %v3080
        %v3091 = vpop.permute.xlu0 %3090
        %3094 = vset.pattern.permute.xlu0 0
        %3095 = vperm.xlu0 %3094, %v3081
        %v3096 = vpop.permute.xlu0 %3095
        %3099 = vset.pattern.permute.xlu0 0
        %3100 = vperm.xlu0 %3099, %v3082
        %v3101 = vpop.permute.xlu0 %3100
        %vm3103 = vcmask 523264
        %v3105 = vsel %vm3103, %v3075, 0
        %v3108 = vsel %vm3103, %v3076, 0
        %v3111 = vsel %vm3103, %v3077, 0
        %v3114 = vsel %vm3103, %v3078, 0
        %3116 = vmatprep.subr.mxu0 %v1647
        %3117 = vmatpush1.msra.mxu0 %v1646
        %3118 = vmatprep.subr.mxu0 %v1649
        %3119 = vmatpush1.msra.mxu0 %v1648
        %3120 = vmatprep.subr.mxu0 %v3067
        %3121 = vmatpush1.msra.mxu0 %v3065
        %3122 = vmatprep.subr.mxu0 %v3073
        %3123 = vmatpush1.msra.mxu0 %v3071
        %3124 = vmatprep.subr.mxu0 %v2837
        %3125 = vmatpush1.msra.mxu0 %v2836
        %3126 = vmatprep.subr.mxu0 %v2839
        %3127 = vmatpush1.msra.mxu0 %v2838
        %3128 = vmatprep.subr.mxu0 %v2841
        %3129 = vmatpush1.msra.mxu0 %v2840
        %3130 = vmatprep.subr.mxu0 %v2843
        %3131 = vmatpush1.msra.mxu0 %v2842
        %3132 = vmatprep.subr.mxu0 0.0
        %3133 = vmatpush1.msra.mxu0 0.0
        %3134 = vmatprep.subr.mxu0 0.0
        %3135 = vmatpush1.msra.mxu0 0.0
        %3136 = vmatprep.subr.mxu0 0.0
        %3137 = vmatpush1.msra.mxu0 0.0
        %3138 = vmatprep.subr.mxu0 0.0
        %3139 = vmatpush1.msra.mxu0 0.0
        %3140 = vmatprep.subr.mxu0 0.0
        %3141 = vmatpush1.msra.mxu0 0.0
        %3142 = vmatprep.subr.mxu0 0.0
        %3143 = vmatpush1.msra.mxu0 0.0
        %3144 = vmatprep.subr.mxu0 0.0
        %3145 = vmatpush1.msra.mxu0 0.0
        %3146 = vmatprep.subr.mxu0 0.0
        %3147 = vmatpush1.msra.mxu0 0.0
        %3148 = vmatprep.subr.mxu0 0.0
        %3149 = vmatpush1.msra.mxu0 0.0
        %3150 = vmatprep.subr.mxu0 0.0
        %3151 = vmatpush1.msra.mxu0 0.0
        %3152 = vmatprep.subr.mxu0 0.0
        %3153 = vmatpush1.msra.mxu0 0.0
        %3154 = vmatprep.subr.mxu0 0.0
        %3155 = vmatpush1.msra.mxu0 0.0
        %3156 = vmatprep.subr.mxu0 0.0
        %3157 = vmatpush1.msra.mxu0 0.0
        %3158 = vmatprep.subr.mxu0 0.0
        %3159 = vmatpush1.msra.mxu0 0.0
        %3160 = vmatprep.subr.mxu0 0.0
        %3161 = vmatpush1.msra.mxu0 0.0
        %3162 = vmatprep.subr.mxu0 0.0
        %3163 = vmatpush1.msra.mxu0 0.0
        %3164 = vmatprep.subr.mxu0 0.0
        %3165 = vmatpush1.msra.mxu0 0.0
        %3166 = vmatprep.subr.mxu0 0.0
        %3167 = vmatpush1.msra.mxu0 0.0
        %3168 = vmatprep.subr.mxu0 0.0
        %3169 = vmatpush1.msra.mxu0 0.0
        %3170 = vmatprep.subr.mxu0 0.0
        %3171 = vmatpush1.msra.mxu0 0.0
        %3172 = vmatprep.subr.mxu0 0.0
        %3173 = vmatpush1.msra.mxu0 0.0
        %3174 = vmatprep.subr.mxu0 0.0
        %3175 = vmatpush1.msra.mxu0 0.0
        %3176 = vmatprep.subr.mxu0 0.0
        %3177 = vmatpush1.msra.mxu0 0.0
        %3178 = vmatprep.subr.mxu0 0.0
        %3179 = vmatpush1.msra.mxu0 0.0
        %3180 = vmatprep.mubr.f32.mxu0 0.0
        %3181 = vmatmul.mubr.f32.gmra.mrb[0].mxu0 %v3105
        %v3182 = vpop.f32.mrb[0].mxu0
        %v3183 = vadd.f32 %v3086, %v3182
        %v3184 = vpop.f32.mrb[0].mxu0
        %v3185 = vadd.f32 %v3086, %v3184
        %3186 = vmatprep.mubr.f32.mxu0 0.0
        %3187 = vmatmul.mubr.f32.gmra.mrb[0].mxu0 %v3108
        %v3188 = vpop.f32.mrb[0].mxu0
        %v3189 = vadd.f32 %v3091, %v3188
        %v3190 = vpop.f32.mrb[0].mxu0
        %v3191 = vadd.f32 %v3091, %v3190
        %3192 = vmatprep.mubr.f32.mxu0 0.0
        %3193 = vmatmul.mubr.f32.gmra.mrb[0].mxu0 %v3111
        %v3194 = vpop.f32.mrb[0].mxu0
        %v3195 = vadd.f32 %v3096, %v3194
        %v3196 = vpop.f32.mrb[0].mxu0
        %v3197 = vadd.f32 %v3096, %v3196
        %3198 = vmatprep.mubr.f32.mxu0 0.0
        %3199 = vmatmul.mubr.f32.gmra.mrb[0].mxu0 %v3114
        %v3200 = vpop.f32.mrb[0].mxu0
        %v3201 = vadd.f32 %v3101, %v3200
        %v3202 = vpop.f32.mrb[0].mxu0
        %v3203 = vadd.f32 %v3101, %v3202
        %3204 = vdwg.mxu0
        %v3205 = vadd.f32 %v581, %v3183
        %v3206 = vadd.f32 %v582, %v3185
        %v3207 = vadd.f32 %v583, %v3189
        %v3208 = vadd.f32 %v584, %v3191
        %v3209 = vadd.f32 %v585, %v3195
        %v3210 = vadd.f32 %v586, %v3197
        %v3211 = vadd.f32 %v587, %v3201
        %v3212 = vadd.f32 %v588, %v3203
        %3213 = vst [vmem:[%s575] sm:$0xff] %v3205
        %3214 = vst [vmem:[%s575 + $0x8] sm:$0xff] %v3206
        %3215 = vst [vmem:[%s575 + $0x10] sm:$0xff] %v3207
        %3216 = vst [vmem:[%s575 + $0x18] sm:$0xff] %v3208
        %3217 = vst [vmem:[%s575 + $0x20] sm:$0xff] %v3209
        %3218 = vst [vmem:[%s575 + $0x28] sm:$0xff] %v3210
        %3219 = vst [vmem:[%s575 + $0x30] sm:$0xff] %v3211
        %3220 = vst [vmem:[%s575 + $0x38] sm:$0xff] %v3212
        %s3221 = sand.u32 %s361, 1
        %s3222 = scalar_lea.sflag [#allocation4], %s3221
        %s3223 = sand.u32 %s361, 1
        %s3224 = smul.addr %s3223, 64
        %s3225 = scalar_lea.vmem [#allocation13], %s3224
        // Predicated region
        $region105: #{tpu_custom_call.1} parent=79 // pred_check
          %p3226 = pneg %p371
        $region106: #{tpu_custom_call.1} parent=79 // pred_check_branch
          %3228 = sbr.rel (%p3226) target = $region108
        $region107: #{tpu_custom_call.1} parent=79 // pred_region
          %s3230 = ssub.s32 1024, 1024
          %3231 = vsyncadd %s3222, %s3230
          %s3232 = smul.addr %s33, 8
          %s3233 = smul.addr %s3232, 128
          %s3234 = scalar_lea.hbm %s15, %s3233
          %s3235 = sshll.u32 %s3225, 4
          %s3236 = int_to_ptr.vmem [resolvable:$true] %s3235
          %3241 = dma.vmem_to_hbm [thread:$0]  %s3236, 1024, %s3234, %s3222, 256, 256, 16
        $region108: #{tpu_custom_call.1} parent=79 // pred_fallthru
          _
      $region80: #{tpu_custom_call.1} parent=5 // pred_fallthru
        _
      %p3242 = scmp.le.s32.totalorder 2, %s28
      // Predicated region
      $region109: #{tpu_custom_call.1} parent=5 // pred_check
        %p3243 = pneg %p3242
      $region110: #{tpu_custom_call.1} parent=5 // pred_check_branch
        %3245 = sbr.rel (%p3243) target = $region112
      $region111: #{tpu_custom_call.1} parent=5 // pred_region
        %s3246 = ssub.s32 %s28, 2
        // Predicated region
        $region113: #{tpu_custom_call.1} parent=111 // pred_check
          %p3247 = pneg %p377
        $region114: #{tpu_custom_call.1} parent=111 // pred_check_branch
          %3249 = sbr.rel (%p3247) target = $region116
        $region115: #{tpu_custom_call.1} parent=111 // pred_region
          %s3250 = sand.u32 %s362, 1
          %s3251 = scalar_lea.sflag [#allocation4], %s3250
          %s3252 = sand.u32 %s362, 1
          %s3253 = smul.addr %s3252, 64
          %s3254 = scalar_lea.vmem [#allocation13], %s3253
          %3255 = dma.done %s3251, 1024
        $region116: #{tpu_custom_call.1} parent=111 // pred_fallthru
          _
      $region112: #{tpu_custom_call.1} parent=5 // pred_fallthru
        _
    $region6: #{tpu_custom_call.1} parent=1 // loop_footer
      %s32 = sadd.s32 1, %s28
    $region7: #{tpu_custom_call.1} parent=1 // loop_footer_branch
      %27 = sbr.rel target = $region3
    $region8: #{tpu_custom_call.1} parent=1 // loop_exit
      _
    %3256 = vsyncpa [#allocation3], 1
    %s3257 = scalar_lea.sflag [#allocation3], 1
    %3258 = vsyncpa %s3257, 1
    %3259 = vsyncpa [#allocation6], 1
    %3260 = vsyncpa [#allocation9], 1
    %3261 = vsyncpa [#allocation12], 1
    %3262 = vsyncpa [#allocation4], 1
    %s3263 = scalar_lea.sflag [#allocation4], 1
    %3264 = vsyncpa %s3263, 1

</llo_original>
